<compile_context>
chip_gen: v5e
topology: v5e:2x2
jax: 0.10.0
libtpu: 0.0.40
codegen_flags: <defaults>
</compile_context>

<pallas_src>
import jax
import jax.numpy as jnp
from jax import lax
from jax.experimental import pallas as pl
from jax.experimental.pallas import tpu as pltpu

_LANE = 128
_SUBLANE = 8


def _lstm_kernel(x_ref, wih_ref, whh_ref, b_ref, h_out_ref, gx_sc, h_sc, c_sc):
    """One grid step == Tt LSTM time steps for one batch chunk.

    x_ref    : (Bc, Tt, D)    batch-first input block
    wih_ref  : (D, 4Hp)       input->gates weights (transposed, gate-padded)
    whh_ref  : (Hp, 4Hp)      hidden->gates weights (transposed, gate-padded)
    b_ref    : (1, 4Hp)       combined gate bias (b_ih + b_hh), f32
    h_out_ref: (Bc, Hp)       final hidden state (written only at last block)
    gx_sc    : (Tt, Bc, 4Hp)  f32 time-major staging of gate pre-activations
    h_sc,c_sc: (Bc, Hp) f32   recurrent state (persists across the time grid)
    """
    t_blk = pl.program_id(1)

    @pl.when(t_blk == 0)
    def _():
        h_sc[...] = jnp.zeros_like(h_sc)
        c_sc[...] = jnp.zeros_like(c_sc)

    Bc, Tt, D = x_ref.shape
    Hp = h_sc.shape[-1]
    G = 4 * Hp

    # Single MXU matmul with M = Bc*Tt for the whole block's input
    # projection; transpose x first (only D lanes wide) so the result lands
    # time-major and the per-step read is a cheap leading-axis index.
    x_tm = jnp.transpose(x_ref[...], (1, 0, 2)).reshape(Tt * Bc, D)
    gx = jnp.dot(x_tm, wih_ref[...], preferred_element_type=jnp.float32)
    gx_sc[...] = (gx + b_ref[...]).reshape(Tt, Bc, G)

    whh = whh_ref[...]                 # hoisted, resident across steps
    mm_dtype = whh.dtype
    h0 = h_sc[...]
    c0 = c_sc[...]

    def step(s, carry):
        _, h_mm, c = carry
        gates = gx_sc[s] + jnp.dot(h_mm, whh,
                                   preferred_element_type=jnp.float32)
        i_g = jax.nn.sigmoid(gates[:, 0 * Hp:1 * Hp])
        f_g = jax.nn.sigmoid(gates[:, 1 * Hp:2 * Hp])
        g_g = jnp.tanh(gates[:, 2 * Hp:3 * Hp])
        o_g = jax.nn.sigmoid(gates[:, 3 * Hp:4 * Hp])
        c_new = f_g * c + i_g * g_g
        h_new = o_g * jnp.tanh(c_new)
        # Produce the matmul-ready h right here (no cast inside next dot).
        return h_new, h_new.astype(mm_dtype), c_new

    # Unrolled fori_loop: scheduler visibility across adjacent steps while
    # bounding vreg live ranges at large Tt.
    unroll = True if Tt <= 8 else 8
    h, _, c = lax.fori_loop(0, Tt, step, (h0, h0.astype(mm_dtype), c0),
                            unroll=unroll)

    h_sc[...] = h
    c_sc[...] = c

    @pl.when(t_blk == pl.num_programs(1) - 1)
    def _():
        h_out_ref[...] = h.astype(h_out_ref.dtype)


def _round_up(x, m):
    return (x + m - 1) // m * m


def _vmem_limit_bytes():
    """Per-generation scoped-VMEM limit (~85% of capacity, capped ~110 MiB)."""
    try:
        cap = int(pltpu.get_tpu_info().vmem_capacity_bytes)
        return min(int(cap * 0.85), 110 * 1024 * 1024)
    except Exception:
        return None   # fall back to compiler default


def _pick_time_block(T, Bc, D, Hp, mm_bytes, wbuf, budget, time_block):
    """Largest legal Tt (mult of 8 or == T, divides T) whose block fits budget."""
    if time_block is not None:
        assert T % time_block == 0, "time_block must divide T"
        return time_block
    G = 4 * Hp
    fixed = (wbuf * (D * G + Hp * G) * mm_bytes   # resident weights
             + wbuf * G * 4                       # bias
             + 2 * Bc * Hp * 4                    # h/c scratch
             + 2 * Bc * Hp * 4)                   # double-buffered output

    def blk_bytes(t):
        return fixed + 2 * Bc * t * D * mm_bytes + t * Bc * G * 4

    cands = [t for t in range(T, 0, -1)
             if T % t == 0 and (t % 8 == 0 or t == T)]
    for t in cands:
        if t <= 512 and blk_bytes(t) <= budget:
            return t
    return cands[-1]


def _pad_gate_cols(w, H, Hp):
    """(rows, 4H) -> (rows, 4Hp) with each gate block starting at k*Hp (128-aligned)."""
    if Hp == H:
        return w
    rows = w.shape[0]
    out = jnp.zeros((rows, 4 * Hp), w.dtype)
    for k in range(4):
        out = out.at[:, k * Hp:k * Hp + H].set(w[:, k * H:(k + 1) * H])
    return out


def _build_call(Bp, Bc, T, Tt, D, Hp, nbc, wbuf, vmem_limit):
    G = 4 * Hp

    def const_spec(shape):
        if wbuf == 1:
            # Constant index_map => never re-DMA'd; a single buffer halves
            # resident-weight VMEM (critical on v7x's 64 MiB).
            return pl.BlockSpec(shape, lambda b, t: (0, 0),
                                pipeline_mode=pl.Buffered(buffer_count=1))
        return pl.BlockSpec(shape, lambda b, t: (0, 0))

    grid_spec = pltpu.PrefetchScalarGridSpec(
        num_scalar_prefetch=0,
        grid=(nbc, T // Tt),
        in_specs=[
            pl.BlockSpec((Bc, Tt, D), lambda b, t: (b, t, 0)),  # x time block
            const_spec((D, G)),                                  # W_ih^T
            const_spec((Hp, G)),                                 # W_hh^T
            const_spec((1, G)),                                  # gate bias
        ],
        out_specs=pl.BlockSpec((Bc, Hp), lambda b, t: (b, 0)),
        scratch_shapes=[
            pltpu.VMEM((Tt, Bc, G), jnp.float32),   # time-major gate pre-acts
            pltpu.VMEM((Bc, Hp), jnp.float32),      # h state
            pltpu.VMEM((Bc, Hp), jnp.float32),      # c state
        ],
    )
    cp = dict(dimension_semantics=("parallel", "arbitrary"))
    if vmem_limit is not None:
        cp["vmem_limit_bytes"] = int(vmem_limit)
    return pl.pallas_call(
        _lstm_kernel,
        out_shape=jax.ShapeDtypeStruct((Bp, Hp), jnp.float32),
        grid_spec=grid_spec,
        compiler_params=pltpu.CompilerParams(**cp),
    )


def lstm_network_forward(x, params, *, time_block=None,
                         matmul_dtype=jnp.bfloat16):
    """x: (B, T, D) float32, batch_first (as in PyTorch). Returns (B, C) f32."""
    B, T, D = x.shape
    H = params["w_hh"].shape[1]              # w_hh: (4H, H)
    Hp = _round_up(H, _LANE)                 # 128-lane-aligned gate blocks
    mm_bytes = jnp.dtype(matmul_dtype).itemsize

    # Pad batch to a sublane multiple (padded rows are independent & dropped).
    Bp = _round_up(max(B, _SUBLANE), _SUBLANE)
    # Split the batch over two chunks -> both TensorCores on v7x via the
    # leading "parallel" grid axis (harmless serial loop on v5e/v6e).
    nbc = 2 if (Bp >= 16 and Bp % 16 == 0) else 1
    Bc = Bp // nbc

    vmem_limit = _vmem_limit_bytes()
    budget = int(0.75 * (vmem_limit if vmem_limit is not None else 32 << 20))

    # Weight prep: transposed, gate-padded to Hp, matmul dtype for MXU peak.
    # Padded gate columns are zero => padded gates get pre-activation 0
    # (i=f=o=0.5, g=0) and padded h/c lanes stay exactly 0.
    w_ih_t = _pad_gate_cols(params["w_ih"].T, H, Hp).astype(matmul_dtype)
    w_hh_c = _pad_gate_cols(params["w_hh"].T, H, Hp)              # (H, 4Hp)
    w_hh_t = jnp.zeros((Hp, 4 * Hp), w_hh_c.dtype).at[:H].set(w_hh_c)
    w_hh_t = w_hh_t.astype(matmul_dtype)
    b_gates = _pad_gate_cols(
        (params["b_ih"] + params["b_hh"]).reshape(1, 4 * H), H, Hp
    ).astype(jnp.float32)

    x_pad = jnp.zeros((Bp, T, D), matmul_dtype).at[:B].set(
        x.astype(matmul_dtype))

    h_last = None
    last_err = None
    for wbuf in (1, 2):  # prefer single-buffered weights; fall back if needed
        Tt = _pick_time_block(T, Bc, D, Hp, mm_bytes, wbuf, budget, time_block)
        try:
            h_last = _build_call(Bp, Bc, T, Tt, D, Hp, nbc, wbuf,
                                 vmem_limit)(x_pad, w_ih_t, w_hh_t, b_gates)
            break
        except Exception as e:  # e.g. Buffered(1) unsupported on this version
            last_err = e
    if h_last is None:
        raise last_err

    # Final Linear outside the time-step pipeline (used once; keeps W_lin /
    # b_lin out of VMEM residency during the recurrence).
    h = h_last[:B, :H]
    return h @ params["w_lin"].T + params["b_lin"]


def init_params(key, input_size, hidden_size, num_classes):
    """Deterministic init matching PyTorch parameter shapes (gate order i,f,g,o)."""
    ks = jax.random.split(key, 6)
    bound = 1.0 / jnp.sqrt(hidden_size)
    u = lambda k, shape: jax.random.uniform(k, shape, jnp.float32, -bound, bound)
    return {
        "w_ih": u(ks[0], (4 * hidden_size, input_size)),
        "w_hh": u(ks[1], (4 * hidden_size, hidden_size)),
        "b_ih": u(ks[2], (4 * hidden_size,)),
        "b_hh": u(ks[3], (4 * hidden_size,)),
        "w_lin": u(ks[4], (num_classes, hidden_size)),
        "b_lin": u(ks[5], (num_classes,)),
    }


def _reference_forward(x, params):
    """Pure-JAX reference mirroring torch.nn.LSTM + Linear semantics."""
    B, T, D = x.shape
    H = params["w_hh"].shape[1]
    h = jnp.zeros((B, H), jnp.float32)
    c = jnp.zeros((B, H), jnp.float32)
    for t in range(T):
        g = (x[:, t] @ params["w_ih"].T + params["b_ih"]
             + h @ params["w_hh"].T + params["b_hh"])
        i_g = jax.nn.sigmoid(g[:, 0 * H:1 * H])
        f_g = jax.nn.sigmoid(g[:, 1 * H:2 * H])
        g_g = jnp.tanh(g[:, 2 * H:3 * H])
        o_g = jax.nn.sigmoid(g[:, 3 * H:4 * H])
        c = f_g * c + i_g * g_g
        h = o_g * jnp.tanh(c)
    return h @ params["w_lin"].T + params["b_lin"]


if __name__ == "__main__":
    B, T, INPUT_SIZE, HIDDEN_SIZE, NUM_CLASSES = 2, 8, 16, 32, 8

    root = jax.random.PRNGKey(0)
    k_x, k_p = jax.random.split(root)
    x = jax.random.normal(k_x, (B, T, INPUT_SIZE), jnp.float32)
    params = init_params(k_p, INPUT_SIZE, HIDDEN_SIZE, NUM_CLASSES)

    ref = _reference_forward(x, params)

    # f32 MXU-operand path: must match the f32 reference to 1e-4.
    out_f32 = jax.block_until_ready(
        lstm_network_forward(x, params, matmul_dtype=jnp.float32))
    assert out_f32.shape == (B, NUM_CLASSES)
    assert jnp.allclose(out_f32, ref, atol=1e-4, rtol=1e-4), (
        f"f32 mismatch: max abs err {jnp.max(jnp.abs(out_f32 - ref))}")

    # Default bf16 MXU-operand path (f32 accumulation / gate math): loose check.
    out_bf16 = jax.block_until_ready(lstm_network_forward(x, params))
    assert out_bf16.shape == (B, NUM_CLASSES)
    assert bool(jnp.all(jnp.isfinite(out_bf16)))
    assert jnp.allclose(out_bf16, ref, atol=1e-1, rtol=1e-1), (
        f"bf16 mismatch: max abs err {jnp.max(jnp.abs(out_bf16 - ref))}")

    print("KERNEL_OK")
</pallas_src>

<mosaic_0001>
module attributes {stable_mosaic.version = 11 : i64} {
  func.func @_lstm_kernel(%arg0: i32, %arg1: i32, %arg2: memref<8x8x16xf32, #tpu.memory_space<vmem>>, %arg3: memref<16x512xf32, #tpu.memory_space<vmem>>, %arg4: memref<128x512xf32, #tpu.memory_space<vmem>>, %arg5: memref<1x512xf32, #tpu.memory_space<vmem>>, %arg6: memref<8x128xf32, #tpu.memory_space<vmem>>, %arg7: memref<8x8x512xf32, #tpu.memory_space<vmem>>, %arg8: memref<8x128xf32, #tpu.memory_space<vmem>>, %arg9: memref<8x128xf32, #tpu.memory_space<vmem>>) attributes {dimension_semantics = [#tpu.dimension_semantics<parallel>, #tpu.dimension_semantics<arbitrary>], iteration_bounds = array<i64: 1, 1>, scalar_prefetch = 0 : i64, scratch_operands = 3 : i64, tpu.core_type = #tpu.core_type<tc>, window_params = [{transform_indices = @transform_0, window_bounds = array<i64: 8, 8, 16>}, {pipeline_mode = #tpu.pipeline_mode<synchronous>, transform_indices = @transform_1, window_bounds = array<i64: 16, 512>}, {pipeline_mode = #tpu.pipeline_mode<synchronous>, transform_indices = @transform_2, window_bounds = array<i64: 128, 512>}, {pipeline_mode = #tpu.pipeline_mode<synchronous>, transform_indices = @transform_3, window_bounds = array<i64: 1, 512>}, {transform_indices = @transform_4, window_bounds = array<i64: 8, 128>}]} {
    %c0_i32 = arith.constant 0 : i32
    %0 = arith.cmpi eq, %arg1, %c0_i32 : i32
    %1 = arith.extui %0 : i1 to i32
    %c0_i32_0 = arith.constant 0 : i32
    %2 = arith.cmpi ne, %1, %c0_i32_0 : i32
    scf.if %2 {
      %cst_71 = arith.constant 0.000000e+00 : f32
      %261 = vector.broadcast %cst_71 : f32 to vector<8x128xf32>
      %c0_72 = arith.constant 0 : index
      %c0_73 = arith.constant 0 : index
      %262 = vector.load %arg8[%c0_72, %c0_73] : memref<8x128xf32, #tpu.memory_space<vmem>>, vector<8x128xf32>
      tpu.vector_store %arg8[%c0_72, %c0_73], %261 {strides = array<i32>} : memref<8x128xf32, #tpu.memory_space<vmem>>, vector<8x128xf32>,
      %cst_74 = arith.constant 0.000000e+00 : f32
      %263 = vector.broadcast %cst_74 : f32 to vector<8x128xf32>
      %c0_75 = arith.constant 0 : index
      %c0_76 = arith.constant 0 : index
      %264 = vector.load %arg9[%c0_75, %c0_76] : memref<8x128xf32, #tpu.memory_space<vmem>>, vector<8x128xf32>
      tpu.vector_store %arg9[%c0_75, %c0_76], %263 {strides = array<i32>} : memref<8x128xf32, #tpu.memory_space<vmem>>, vector<8x128xf32>,
    } else {
    }
    %c0 = arith.constant 0 : index
    %c0_1 = arith.constant 0 : index
    %c0_2 = arith.constant 0 : index
    %3 = vector.load %arg2[%c0, %c0_1, %c0_2] : memref<8x8x16xf32, #tpu.memory_space<vmem>>, vector<8x8x16xf32>
    %4 = tpu.transpose %3, [1, 0, 2] : vector<8x8x16xf32> -> vector<8x8x16xf32>
    %5 = vector.shape_cast %4 : vector<8x8x16xf32> to vector<64x16xf32>
    %c0_3 = arith.constant 0 : index
    %c0_4 = arith.constant 0 : index
    %6 = vector.load %arg3[%c0_3, %c0_4] : memref<16x512xf32, #tpu.memory_space<vmem>>, vector<16x512xf32>
    %cst = arith.constant dense<0.000000e+00> : vector<64x512xf32>
    %7 = tpu.matmul %5, %6, %cst {dimension_numbers = #tpu.dot_dimension_numbers<[1], [0], [0], [1], [0, 0, 1, 1], [], []>} : vector<64x16xf32>, vector<16x512xf32>, vector<64x512xf32> -> vector<64x512xf32>
    %c0_5 = arith.constant 0 : index
    %c0_6 = arith.constant 0 : index
    %8 = vector.load %arg5[%c0_5, %c0_6] : memref<1x512xf32, #tpu.memory_space<vmem>>, vector<1x512xf32>
    %9 = vector.broadcast %8 : vector<1x512xf32> to vector<64x512xf32>
    %10 = arith.addf %7, %9 : vector<64x512xf32>
    %11 = vector.shape_cast %10 : vector<64x512xf32> to vector<8x8x512xf32>
    %c0_7 = arith.constant 0 : index
    %c0_8 = arith.constant 0 : index
    %c0_9 = arith.constant 0 : index
    %12 = vector.load %arg7[%c0_7, %c0_8, %c0_9] : memref<8x8x512xf32, #tpu.memory_space<vmem>>, vector<8x8x512xf32>
    tpu.vector_store %arg7[%c0_7, %c0_8, %c0_9], %11 {strides = array<i32>} : memref<8x8x512xf32, #tpu.memory_space<vmem>>, vector<8x8x512xf32>,
    %c0_10 = arith.constant 0 : index
    %c0_11 = arith.constant 0 : index
    %13 = vector.load %arg4[%c0_10, %c0_11] : memref<128x512xf32, #tpu.memory_space<vmem>>, vector<128x512xf32>
    %c0_12 = arith.constant 0 : index
    %c0_13 = arith.constant 0 : index
    %14 = vector.load %arg8[%c0_12, %c0_13] : memref<8x128xf32, #tpu.memory_space<vmem>>, vector<8x128xf32>
    %c0_14 = arith.constant 0 : index
    %c0_15 = arith.constant 0 : index
    %15 = vector.load %arg9[%c0_14, %c0_15] : memref<8x128xf32, #tpu.memory_space<vmem>>, vector<8x128xf32>
    %c0_i32_16 = arith.constant 0 : i32
    %16 = arith.index_cast %c0_i32_16 : i32 to index
    %c0_17 = arith.constant 0 : index
    %c0_18 = arith.constant 0 : index
    %17 = vector.load %arg7[%16, %c0_17, %c0_18] : memref<8x8x512xf32, #tpu.memory_space<vmem>>, vector<1x8x512xf32>
    %18 = vector.shape_cast %17 : vector<1x8x512xf32> to vector<8x512xf32>
    %cst_19 = arith.constant dense<0.000000e+00> : vector<8x512xf32>
    %19 = tpu.matmul %14, %13, %cst_19 {dimension_numbers = #tpu.dot_dimension_numbers<[1], [0], [0], [1], [0, 0, 1, 1], [], []>} : vector<8x128xf32>, vector<128x512xf32>, vector<8x512xf32> -> vector<8x512xf32>
    %20 = arith.addf %18, %19 : vector<8x512xf32>
    %21 = vector.extract_strided_slice %20 {offsets = [0, 0], sizes = [8, 128], strides = [1, 1]} : vector<8x512xf32> to vector<8x128xf32>
    %22 = arith.negf %21 : vector<8x128xf32>
    %23 = math.exp %22 : vector<8x128xf32>
    %cst_20 = arith.constant 1.000000e+00 : f32
    %24 = vector.broadcast %cst_20 : f32 to vector<8x128xf32>
    %25 = arith.addf %24, %23 : vector<8x128xf32>
    %26 = arith.divf %24, %25 : vector<8x128xf32>
    %27 = vector.extract_strided_slice %20 {offsets = [0, 128], sizes = [8, 128], strides = [1, 1]} : vector<8x512xf32> to vector<8x128xf32>
    %28 = arith.negf %27 : vector<8x128xf32>
    %29 = math.exp %28 : vector<8x128xf32>
    %cst_21 = arith.constant 1.000000e+00 : f32
    %30 = vector.broadcast %cst_21 : f32 to vector<8x128xf32>
    %31 = arith.addf %30, %29 : vector<8x128xf32>
    %32 = arith.divf %30, %31 : vector<8x128xf32>
    %33 = vector.extract_strided_slice %20 {offsets = [0, 256], sizes = [8, 128], strides = [1, 1]} : vector<8x512xf32> to vector<8x128xf32>
    %34 = math.tanh %33 : vector<8x128xf32>
    %35 = vector.extract_strided_slice %20 {offsets = [0, 384], sizes = [8, 128], strides = [1, 1]} : vector<8x512xf32> to vector<8x128xf32>
    %36 = arith.negf %35 : vector<8x128xf32>
    %37 = math.exp %36 : vector<8x128xf32>
    %cst_22 = arith.constant 1.000000e+00 : f32
    %38 = vector.broadcast %cst_22 : f32 to vector<8x128xf32>
    %39 = arith.addf %38, %37 : vector<8x128xf32>
    %40 = arith.divf %38, %39 : vector<8x128xf32>
    %41 = arith.mulf %32, %15 : vector<8x128xf32>
    %42 = arith.mulf %26, %34 : vector<8x128xf32>
    %43 = arith.addf %41, %42 : vector<8x128xf32>
    %44 = math.tanh %43 : vector<8x128xf32>
    %45 = arith.mulf %40, %44 : vector<8x128xf32>
    %c1_i32 = arith.constant 1 : i32
    %46 = arith.index_cast %c1_i32 : i32 to index
    %c0_23 = arith.constant 0 : index
    %c0_24 = arith.constant 0 : index
    %47 = vector.load %arg7[%46, %c0_23, %c0_24] : memref<8x8x512xf32, #tpu.memory_space<vmem>>, vector<1x8x512xf32>
    %48 = vector.shape_cast %47 : vector<1x8x512xf32> to vector<8x512xf32>
    %cst_25 = arith.constant dense<0.000000e+00> : vector<8x512xf32>
    %49 = tpu.matmul %45, %13, %cst_25 {dimension_numbers = #tpu.dot_dimension_numbers<[1], [0], [0], [1], [0, 0, 1, 1], [], []>} : vector<8x128xf32>, vector<128x512xf32>, vector<8x512xf32> -> vector<8x512xf32>
    %50 = arith.addf %48, %49 : vector<8x512xf32>
    %51 = vector.extract_strided_slice %50 {offsets = [0, 0], sizes = [8, 128], strides = [1, 1]} : vector<8x512xf32> to vector<8x128xf32>
    %52 = arith.negf %51 : vector<8x128xf32>
    %53 = math.exp %52 : vector<8x128xf32>
    %cst_26 = arith.constant 1.000000e+00 : f32
    %54 = vector.broadcast %cst_26 : f32 to vector<8x128xf32>
    %55 = arith.addf %54, %53 : vector<8x128xf32>
    %56 = arith.divf %54, %55 : vector<8x128xf32>
    %57 = vector.extract_strided_slice %50 {offsets = [0, 128], sizes = [8, 128], strides = [1, 1]} : vector<8x512xf32> to vector<8x128xf32>
    %58 = arith.negf %57 : vector<8x128xf32>
    %59 = math.exp %58 : vector<8x128xf32>
    %cst_27 = arith.constant 1.000000e+00 : f32
    %60 = vector.broadcast %cst_27 : f32 to vector<8x128xf32>
    %61 = arith.addf %60, %59 : vector<8x128xf32>
    %62 = arith.divf %60, %61 : vector<8x128xf32>
    %63 = vector.extract_strided_slice %50 {offsets = [0, 256], sizes = [8, 128], strides = [1, 1]} : vector<8x512xf32> to vector<8x128xf32>
    %64 = math.tanh %63 : vector<8x128xf32>
    %65 = vector.extract_strided_slice %50 {offsets = [0, 384], sizes = [8, 128], strides = [1, 1]} : vector<8x512xf32> to vector<8x128xf32>
    %66 = arith.negf %65 : vector<8x128xf32>
    %67 = math.exp %66 : vector<8x128xf32>
    %cst_28 = arith.constant 1.000000e+00 : f32
    %68 = vector.broadcast %cst_28 : f32 to vector<8x128xf32>
    %69 = arith.addf %68, %67 : vector<8x128xf32>
    %70 = arith.divf %68, %69 : vector<8x128xf32>
    %71 = arith.mulf %62, %43 : vector<8x128xf32>
    %72 = arith.mulf %56, %64 : vector<8x128xf32>
    %73 = arith.addf %71, %72 : vector<8x128xf32>
    %74 = math.tanh %73 : vector<8x128xf32>
    %75 = arith.mulf %70, %74 : vector<8x128xf32>
    %c2_i32 = arith.constant 2 : i32
    %76 = arith.index_cast %c2_i32 : i32 to index
    %c0_29 = arith.constant 0 : index
    %c0_30 = arith.constant 0 : index
    %77 = vector.load %arg7[%76, %c0_29, %c0_30] : memref<8x8x512xf32, #tpu.memory_space<vmem>>, vector<1x8x512xf32>
    %78 = vector.shape_cast %77 : vector<1x8x512xf32> to vector<8x512xf32>
    %cst_31 = arith.constant dense<0.000000e+00> : vector<8x512xf32>
    %79 = tpu.matmul %75, %13, %cst_31 {dimension_numbers = #tpu.dot_dimension_numbers<[1], [0], [0], [1], [0, 0, 1, 1], [], []>} : vector<8x128xf32>, vector<128x512xf32>, vector<8x512xf32> -> vector<8x512xf32>
    %80 = arith.addf %78, %79 : vector<8x512xf32>
    %81 = vector.extract_strided_slice %80 {offsets = [0, 0], sizes = [8, 128], strides = [1, 1]} : vector<8x512xf32> to vector<8x128xf32>
    %82 = arith.negf %81 : vector<8x128xf32>
    %83 = math.exp %82 : vector<8x128xf32>
    %cst_32 = arith.constant 1.000000e+00 : f32
    %84 = vector.broadcast %cst_32 : f32 to vector<8x128xf32>
    %85 = arith.addf %84, %83 : vector<8x128xf32>
    %86 = arith.divf %84, %85 : vector<8x128xf32>
    %87 = vector.extract_strided_slice %80 {offsets = [0, 128], sizes = [8, 128], strides = [1, 1]} : vector<8x512xf32> to vector<8x128xf32>
    %88 = arith.negf %87 : vector<8x128xf32>
    %89 = math.exp %88 : vector<8x128xf32>
    %cst_33 = arith.constant 1.000000e+00 : f32
    %90 = vector.broadcast %cst_33 : f32 to vector<8x128xf32>
    %91 = arith.addf %90, %89 : vector<8x128xf32>
    %92 = arith.divf %90, %91 : vector<8x128xf32>
    %93 = vector.extract_strided_slice %80 {offsets = [0, 256], sizes = [8, 128], strides = [1, 1]} : vector<8x512xf32> to vector<8x128xf32>
    %94 = math.tanh %93 : vector<8x128xf32>
    %95 = vector.extract_strided_slice %80 {offsets = [0, 384], sizes = [8, 128], strides = [1, 1]} : vector<8x512xf32> to vector<8x128xf32>
    %96 = arith.negf %95 : vector<8x128xf32>
    %97 = math.exp %96 : vector<8x128xf32>
    %cst_34 = arith.constant 1.000000e+00 : f32
    %98 = vector.broadcast %cst_34 : f32 to vector<8x128xf32>
    %99 = arith.addf %98, %97 : vector<8x128xf32>
    %100 = arith.divf %98, %99 : vector<8x128xf32>
    %101 = arith.mulf %92, %73 : vector<8x128xf32>
    %102 = arith.mulf %86, %94 : vector<8x128xf32>
    %103 = arith.addf %101, %102 : vector<8x128xf32>
    %104 = math.tanh %103 : vector<8x128xf32>
    %105 = arith.mulf %100, %104 : vector<8x128xf32>
    %c3_i32 = arith.constant 3 : i32
    %106 = arith.index_cast %c3_i32 : i32 to index
    %c0_35 = arith.constant 0 : index
    %c0_36 = arith.constant 0 : index
    %107 = vector.load %arg7[%106, %c0_35, %c0_36] : memref<8x8x512xf32, #tpu.memory_space<vmem>>, vector<1x8x512xf32>
    %108 = vector.shape_cast %107 : vector<1x8x512xf32> to vector<8x512xf32>
    %cst_37 = arith.constant dense<0.000000e+00> : vector<8x512xf32>
    %109 = tpu.matmul %105, %13, %cst_37 {dimension_numbers = #tpu.dot_dimension_numbers<[1], [0], [0], [1], [0, 0, 1, 1], [], []>} : vector<8x128xf32>, vector<128x512xf32>, vector<8x512xf32> -> vector<8x512xf32>
    %110 = arith.addf %108, %109 : vector<8x512xf32>
    %111 = vector.extract_strided_slice %110 {offsets = [0, 0], sizes = [8, 128], strides = [1, 1]} : vector<8x512xf32> to vector<8x128xf32>
    %112 = arith.negf %111 : vector<8x128xf32>
    %113 = math.exp %112 : vector<8x128xf32>
    %cst_38 = arith.constant 1.000000e+00 : f32
    %114 = vector.broadcast %cst_38 : f32 to vector<8x128xf32>
    %115 = arith.addf %114, %113 : vector<8x128xf32>
    %116 = arith.divf %114, %115 : vector<8x128xf32>
    %117 = vector.extract_strided_slice %110 {offsets = [0, 128], sizes = [8, 128], strides = [1, 1]} : vector<8x512xf32> to vector<8x128xf32>
    %118 = arith.negf %117 : vector<8x128xf32>
    %119 = math.exp %118 : vector<8x128xf32>
    %cst_39 = arith.constant 1.000000e+00 : f32
    %120 = vector.broadcast %cst_39 : f32 to vector<8x128xf32>
    %121 = arith.addf %120, %119 : vector<8x128xf32>
    %122 = arith.divf %120, %121 : vector<8x128xf32>
    %123 = vector.extract_strided_slice %110 {offsets = [0, 256], sizes = [8, 128], strides = [1, 1]} : vector<8x512xf32> to vector<8x128xf32>
    %124 = math.tanh %123 : vector<8x128xf32>
    %125 = vector.extract_strided_slice %110 {offsets = [0, 384], sizes = [8, 128], strides = [1, 1]} : vector<8x512xf32> to vector<8x128xf32>
    %126 = arith.negf %125 : vector<8x128xf32>
    %127 = math.exp %126 : vector<8x128xf32>
    %cst_40 = arith.constant 1.000000e+00 : f32
    %128 = vector.broadcast %cst_40 : f32 to vector<8x128xf32>
    %129 = arith.addf %128, %127 : vector<8x128xf32>
    %130 = arith.divf %128, %129 : vector<8x128xf32>
    %131 = arith.mulf %122, %103 : vector<8x128xf32>
    %132 = arith.mulf %116, %124 : vector<8x128xf32>
    %133 = arith.addf %131, %132 : vector<8x128xf32>
    %134 = math.tanh %133 : vector<8x128xf32>
    %135 = arith.mulf %130, %134 : vector<8x128xf32>
    %c4_i32 = arith.constant 4 : i32
    %136 = arith.index_cast %c4_i32 : i32 to index
    %c0_41 = arith.constant 0 : index
    %c0_42 = arith.constant 0 : index
    %137 = vector.load %arg7[%136, %c0_41, %c0_42] : memref<8x8x512xf32, #tpu.memory_space<vmem>>, vector<1x8x512xf32>
    %138 = vector.shape_cast %137 : vector<1x8x512xf32> to vector<8x512xf32>
    %cst_43 = arith.constant dense<0.000000e+00> : vector<8x512xf32>
    %139 = tpu.matmul %135, %13, %cst_43 {dimension_numbers = #tpu.dot_dimension_numbers<[1], [0], [0], [1], [0, 0, 1, 1], [], []>} : vector<8x128xf32>, vector<128x512xf32>, vector<8x512xf32> -> vector<8x512xf32>
    %140 = arith.addf %138, %139 : vector<8x512xf32>
    %141 = vector.extract_strided_slice %140 {offsets = [0, 0], sizes = [8, 128], strides = [1, 1]} : vector<8x512xf32> to vector<8x128xf32>
    %142 = arith.negf %141 : vector<8x128xf32>
    %143 = math.exp %142 : vector<8x128xf32>
    %cst_44 = arith.constant 1.000000e+00 : f32
    %144 = vector.broadcast %cst_44 : f32 to vector<8x128xf32>
    %145 = arith.addf %144, %143 : vector<8x128xf32>
    %146 = arith.divf %144, %145 : vector<8x128xf32>
    %147 = vector.extract_strided_slice %140 {offsets = [0, 128], sizes = [8, 128], strides = [1, 1]} : vector<8x512xf32> to vector<8x128xf32>
    %148 = arith.negf %147 : vector<8x128xf32>
    %149 = math.exp %148 : vector<8x128xf32>
    %cst_45 = arith.constant 1.000000e+00 : f32
    %150 = vector.broadcast %cst_45 : f32 to vector<8x128xf32>
    %151 = arith.addf %150, %149 : vector<8x128xf32>
    %152 = arith.divf %150, %151 : vector<8x128xf32>
    %153 = vector.extract_strided_slice %140 {offsets = [0, 256], sizes = [8, 128], strides = [1, 1]} : vector<8x512xf32> to vector<8x128xf32>
    %154 = math.tanh %153 : vector<8x128xf32>
    %155 = vector.extract_strided_slice %140 {offsets = [0, 384], sizes = [8, 128], strides = [1, 1]} : vector<8x512xf32> to vector<8x128xf32>
    %156 = arith.negf %155 : vector<8x128xf32>
    %157 = math.exp %156 : vector<8x128xf32>
    %cst_46 = arith.constant 1.000000e+00 : f32
    %158 = vector.broadcast %cst_46 : f32 to vector<8x128xf32>
    %159 = arith.addf %158, %157 : vector<8x128xf32>
    %160 = arith.divf %158, %159 : vector<8x128xf32>
    %161 = arith.mulf %152, %133 : vector<8x128xf32>
    %162 = arith.mulf %146, %154 : vector<8x128xf32>
    %163 = arith.addf %161, %162 : vector<8x128xf32>
    %164 = math.tanh %163 : vector<8x128xf32>
    %165 = arith.mulf %160, %164 : vector<8x128xf32>
    %c5_i32 = arith.constant 5 : i32
    %166 = arith.index_cast %c5_i32 : i32 to index
    %c0_47 = arith.constant 0 : index
    %c0_48 = arith.constant 0 : index
    %167 = vector.load %arg7[%166, %c0_47, %c0_48] : memref<8x8x512xf32, #tpu.memory_space<vmem>>, vector<1x8x512xf32>
    %168 = vector.shape_cast %167 : vector<1x8x512xf32> to vector<8x512xf32>
    %cst_49 = arith.constant dense<0.000000e+00> : vector<8x512xf32>
    %169 = tpu.matmul %165, %13, %cst_49 {dimension_numbers = #tpu.dot_dimension_numbers<[1], [0], [0], [1], [0, 0, 1, 1], [], []>} : vector<8x128xf32>, vector<128x512xf32>, vector<8x512xf32> -> vector<8x512xf32>
    %170 = arith.addf %168, %169 : vector<8x512xf32>
    %171 = vector.extract_strided_slice %170 {offsets = [0, 0], sizes = [8, 128], strides = [1, 1]} : vector<8x512xf32> to vector<8x128xf32>
    %172 = arith.negf %171 : vector<8x128xf32>
    %173 = math.exp %172 : vector<8x128xf32>
    %cst_50 = arith.constant 1.000000e+00 : f32
    %174 = vector.broadcast %cst_50 : f32 to vector<8x128xf32>
    %175 = arith.addf %174, %173 : vector<8x128xf32>
    %176 = arith.divf %174, %175 : vector<8x128xf32>
    %177 = vector.extract_strided_slice %170 {offsets = [0, 128], sizes = [8, 128], strides = [1, 1]} : vector<8x512xf32> to vector<8x128xf32>
    %178 = arith.negf %177 : vector<8x128xf32>
    %179 = math.exp %178 : vector<8x128xf32>
    %cst_51 = arith.constant 1.000000e+00 : f32
    %180 = vector.broadcast %cst_51 : f32 to vector<8x128xf32>
    %181 = arith.addf %180, %179 : vector<8x128xf32>
    %182 = arith.divf %180, %181 : vector<8x128xf32>
    %183 = vector.extract_strided_slice %170 {offsets = [0, 256], sizes = [8, 128], strides = [1, 1]} : vector<8x512xf32> to vector<8x128xf32>
    %184 = math.tanh %183 : vector<8x128xf32>
    %185 = vector.extract_strided_slice %170 {offsets = [0, 384], sizes = [8, 128], strides = [1, 1]} : vector<8x512xf32> to vector<8x128xf32>
    %186 = arith.negf %185 : vector<8x128xf32>
    %187 = math.exp %186 : vector<8x128xf32>
    %cst_52 = arith.constant 1.000000e+00 : f32
    %188 = vector.broadcast %cst_52 : f32 to vector<8x128xf32>
    %189 = arith.addf %188, %187 : vector<8x128xf32>
    %190 = arith.divf %188, %189 : vector<8x128xf32>
    %191 = arith.mulf %182, %163 : vector<8x128xf32>
    %192 = arith.mulf %176, %184 : vector<8x128xf32>
    %193 = arith.addf %191, %192 : vector<8x128xf32>
    %194 = math.tanh %193 : vector<8x128xf32>
    %195 = arith.mulf %190, %194 : vector<8x128xf32>
    %c6_i32 = arith.constant 6 : i32
    %196 = arith.index_cast %c6_i32 : i32 to index
    %c0_53 = arith.constant 0 : index
    %c0_54 = arith.constant 0 : index
    %197 = vector.load %arg7[%196, %c0_53, %c0_54] : memref<8x8x512xf32, #tpu.memory_space<vmem>>, vector<1x8x512xf32>
    %198 = vector.shape_cast %197 : vector<1x8x512xf32> to vector<8x512xf32>
    %cst_55 = arith.constant dense<0.000000e+00> : vector<8x512xf32>
    %199 = tpu.matmul %195, %13, %cst_55 {dimension_numbers = #tpu.dot_dimension_numbers<[1], [0], [0], [1], [0, 0, 1, 1], [], []>} : vector<8x128xf32>, vector<128x512xf32>, vector<8x512xf32> -> vector<8x512xf32>
    %200 = arith.addf %198, %199 : vector<8x512xf32>
    %201 = vector.extract_strided_slice %200 {offsets = [0, 0], sizes = [8, 128], strides = [1, 1]} : vector<8x512xf32> to vector<8x128xf32>
    %202 = arith.negf %201 : vector<8x128xf32>
    %203 = math.exp %202 : vector<8x128xf32>
    %cst_56 = arith.constant 1.000000e+00 : f32
    %204 = vector.broadcast %cst_56 : f32 to vector<8x128xf32>
    %205 = arith.addf %204, %203 : vector<8x128xf32>
    %206 = arith.divf %204, %205 : vector<8x128xf32>
    %207 = vector.extract_strided_slice %200 {offsets = [0, 128], sizes = [8, 128], strides = [1, 1]} : vector<8x512xf32> to vector<8x128xf32>
    %208 = arith.negf %207 : vector<8x128xf32>
    %209 = math.exp %208 : vector<8x128xf32>
    %cst_57 = arith.constant 1.000000e+00 : f32
    %210 = vector.broadcast %cst_57 : f32 to vector<8x128xf32>
    %211 = arith.addf %210, %209 : vector<8x128xf32>
    %212 = arith.divf %210, %211 : vector<8x128xf32>
    %213 = vector.extract_strided_slice %200 {offsets = [0, 256], sizes = [8, 128], strides = [1, 1]} : vector<8x512xf32> to vector<8x128xf32>
    %214 = math.tanh %213 : vector<8x128xf32>
    %215 = vector.extract_strided_slice %200 {offsets = [0, 384], sizes = [8, 128], strides = [1, 1]} : vector<8x512xf32> to vector<8x128xf32>
    %216 = arith.negf %215 : vector<8x128xf32>
    %217 = math.exp %216 : vector<8x128xf32>
    %cst_58 = arith.constant 1.000000e+00 : f32
    %218 = vector.broadcast %cst_58 : f32 to vector<8x128xf32>
    %219 = arith.addf %218, %217 : vector<8x128xf32>
    %220 = arith.divf %218, %219 : vector<8x128xf32>
    %221 = arith.mulf %212, %193 : vector<8x128xf32>
    %222 = arith.mulf %206, %214 : vector<8x128xf32>
    %223 = arith.addf %221, %222 : vector<8x128xf32>
    %224 = math.tanh %223 : vector<8x128xf32>
    %225 = arith.mulf %220, %224 : vector<8x128xf32>
    %c7_i32 = arith.constant 7 : i32
    %226 = arith.index_cast %c7_i32 : i32 to index
    %c0_59 = arith.constant 0 : index
    %c0_60 = arith.constant 0 : index
    %227 = vector.load %arg7[%226, %c0_59, %c0_60] : memref<8x8x512xf32, #tpu.memory_space<vmem>>, vector<1x8x512xf32>
    %228 = vector.shape_cast %227 : vector<1x8x512xf32> to vector<8x512xf32>
    %cst_61 = arith.constant dense<0.000000e+00> : vector<8x512xf32>
    %229 = tpu.matmul %225, %13, %cst_61 {dimension_numbers = #tpu.dot_dimension_numbers<[1], [0], [0], [1], [0, 0, 1, 1], [], []>} : vector<8x128xf32>, vector<128x512xf32>, vector<8x512xf32> -> vector<8x512xf32>
    %230 = arith.addf %228, %229 : vector<8x512xf32>
    %231 = vector.extract_strided_slice %230 {offsets = [0, 0], sizes = [8, 128], strides = [1, 1]} : vector<8x512xf32> to vector<8x128xf32>
    %232 = arith.negf %231 : vector<8x128xf32>
    %233 = math.exp %232 : vector<8x128xf32>
    %cst_62 = arith.constant 1.000000e+00 : f32
    %234 = vector.broadcast %cst_62 : f32 to vector<8x128xf32>
    %235 = arith.addf %234, %233 : vector<8x128xf32>
    %236 = arith.divf %234, %235 : vector<8x128xf32>
    %237 = vector.extract_strided_slice %230 {offsets = [0, 128], sizes = [8, 128], strides = [1, 1]} : vector<8x512xf32> to vector<8x128xf32>
    %238 = arith.negf %237 : vector<8x128xf32>
    %239 = math.exp %238 : vector<8x128xf32>
    %cst_63 = arith.constant 1.000000e+00 : f32
    %240 = vector.broadcast %cst_63 : f32 to vector<8x128xf32>
    %241 = arith.addf %240, %239 : vector<8x128xf32>
    %242 = arith.divf %240, %241 : vector<8x128xf32>
    %243 = vector.extract_strided_slice %230 {offsets = [0, 256], sizes = [8, 128], strides = [1, 1]} : vector<8x512xf32> to vector<8x128xf32>
    %244 = math.tanh %243 : vector<8x128xf32>
    %245 = vector.extract_strided_slice %230 {offsets = [0, 384], sizes = [8, 128], strides = [1, 1]} : vector<8x512xf32> to vector<8x128xf32>
    %246 = arith.negf %245 : vector<8x128xf32>
    %247 = math.exp %246 : vector<8x128xf32>
    %cst_64 = arith.constant 1.000000e+00 : f32
    %248 = vector.broadcast %cst_64 : f32 to vector<8x128xf32>
    %249 = arith.addf %248, %247 : vector<8x128xf32>
    %250 = arith.divf %248, %249 : vector<8x128xf32>
    %251 = arith.mulf %242, %223 : vector<8x128xf32>
    %252 = arith.mulf %236, %244 : vector<8x128xf32>
    %253 = arith.addf %251, %252 : vector<8x128xf32>
    %254 = math.tanh %253 : vector<8x128xf32>
    %255 = arith.mulf %250, %254 : vector<8x128xf32>
    %c8_i32 = arith.constant 8 : i32
    %c0_65 = arith.constant 0 : index
    %c0_66 = arith.constant 0 : index
    %256 = vector.load %arg8[%c0_65, %c0_66] : memref<8x128xf32, #tpu.memory_space<vmem>>, vector<8x128xf32>
    tpu.vector_store %arg8[%c0_65, %c0_66], %255 {strides = array<i32>} : memref<8x128xf32, #tpu.memory_space<vmem>>, vector<8x128xf32>,
    %c0_67 = arith.constant 0 : index
    %c0_68 = arith.constant 0 : index
    %257 = vector.load %arg9[%c0_67, %c0_68] : memref<8x128xf32, #tpu.memory_space<vmem>>, vector<8x128xf32>
    tpu.vector_store %arg9[%c0_67, %c0_68], %253 {strides = array<i32>} : memref<8x128xf32, #tpu.memory_space<vmem>>, vector<8x128xf32>,
    %c0_i32_69 = arith.constant 0 : i32
    %258 = arith.cmpi eq, %arg1, %c0_i32_69 : i32
    %259 = arith.extui %258 : i1 to i32
    %c0_i32_70 = arith.constant 0 : i32
    %260 = arith.cmpi ne, %259, %c0_i32_70 : i32
    scf.if %260 {
      %c0_71 = arith.constant 0 : index
      %c0_72 = arith.constant 0 : index
      %261 = vector.load %arg6[%c0_71, %c0_72] : memref<8x128xf32, #tpu.memory_space<vmem>>, vector<8x128xf32>
      tpu.vector_store %arg6[%c0_71, %c0_72], %255 {strides = array<i32>} : memref<8x128xf32, #tpu.memory_space<vmem>>, vector<8x128xf32>,
    } else {
    }
    return
  }
  func.func @transform_0(%arg0: i32, %arg1: i32) -> (i32, i32, i32) {
    %c0_i32 = arith.constant 0 : i32
    %c0_i32_0 = arith.constant 0 : i32
    return %arg0, %arg1, %c0_i32 : i32, i32, i32
  }
  func.func @transform_1(%arg0: i32, %arg1: i32) -> (i32, i32) {
    %c0_i32 = arith.constant 0 : i32
    %c0_i32_0 = arith.constant 0 : i32
    %c0_i32_1 = arith.constant 0 : i32
    return %c0_i32, %c0_i32_0 : i32, i32
  }
  func.func @transform_2(%arg0: i32, %arg1: i32) -> (i32, i32) {
    %c0_i32 = arith.constant 0 : i32
    %c0_i32_0 = arith.constant 0 : i32
    %c0_i32_1 = arith.constant 0 : i32
    return %c0_i32, %c0_i32_0 : i32, i32
  }
  func.func @transform_3(%arg0: i32, %arg1: i32) -> (i32, i32) {
    %c0_i32 = arith.constant 0 : i32
    %c0_i32_0 = arith.constant 0 : i32
    %c0_i32_1 = arith.constant 0 : i32
    return %c0_i32, %c0_i32_0 : i32, i32
  }
  func.func @transform_4(%arg0: i32, %arg1: i32) -> (i32, i32) {
    %c0_i32 = arith.constant 0 : i32
    %c0_i32_0 = arith.constant 0 : i32
    return %arg0, %c0_i32 : i32, i32
  }
}

module attributes {stable_mosaic.version = 11 : i64} {
  func.func @_lstm_kernel(%arg0: i32, %arg1: i32, %arg2: memref<8x8x16xf32, #tpu.memory_space<vmem>>, %arg3: memref<16x512xf32, #tpu.memory_space<vmem>>, %arg4: memref<128x512xf32, #tpu.memory_space<vmem>>, %arg5: memref<1x512xf32, #tpu.memory_space<vmem>>, %arg6: memref<8x128xf32, #tpu.memory_space<vmem>>, %arg7: memref<8x8x512xf32, #tpu.memory_space<vmem>>, %arg8: memref<8x128xf32, #tpu.memory_space<vmem>>, %arg9: memref<8x128xf32, #tpu.memory_space<vmem>>) attributes {dimension_semantics = [#tpu.dimension_semantics<parallel>, #tpu.dimension_semantics<arbitrary>], iteration_bounds = array<i64: 1, 1>, scalar_prefetch = 0 : i64, scratch_operands = 3 : i64, tpu.core_type = #tpu.core_type<tc>, window_params = [{transform_indices = @transform_0, window_bounds = array<i64: 8, 8, 16>}, {pipeline_mode = #tpu.pipeline_mode<synchronous>, transform_indices = @transform_1, window_bounds = array<i64: 16, 512>}, {pipeline_mode = #tpu.pipeline_mode<synchronous>, transform_indices = @transform_2, window_bounds = array<i64: 128, 512>}, {pipeline_mode = #tpu.pipeline_mode<synchronous>, transform_indices = @transform_3, window_bounds = array<i64: 1, 512>}, {transform_indices = @transform_4, window_bounds = array<i64: 8, 128>}]} {
    %c0_i32 = arith.constant 0 : i32
    %0 = arith.cmpi eq, %arg1, %c0_i32 : i32
    %1 = arith.extui %0 : i1 to i32
    %c0_i32_0 = arith.constant 0 : i32
    %2 = arith.cmpi ne, %1, %c0_i32_0 : i32
    scf.if %2 {
      %cst_71 = arith.constant 0.000000e+00 : f32
      %261 = vector.broadcast %cst_71 : f32 to vector<8x128xf32>
      %c0_72 = arith.constant 0 : index
      %c0_73 = arith.constant 0 : index
      %262 = vector.load %arg8[%c0_72, %c0_73] : memref<8x128xf32, #tpu.memory_space<vmem>>, vector<8x128xf32>
      tpu.vector_store %arg8[%c0_72, %c0_73], %261 {strides = array<i32>} : memref<8x128xf32, #tpu.memory_space<vmem>>, vector<8x128xf32>,
      %cst_74 = arith.constant 0.000000e+00 : f32
      %263 = vector.broadcast %cst_74 : f32 to vector<8x128xf32>
      %c0_75 = arith.constant 0 : index
      %c0_76 = arith.constant 0 : index
      %264 = vector.load %arg9[%c0_75, %c0_76] : memref<8x128xf32, #tpu.memory_space<vmem>>, vector<8x128xf32>
      tpu.vector_store %arg9[%c0_75, %c0_76], %263 {strides = array<i32>} : memref<8x128xf32, #tpu.memory_space<vmem>>, vector<8x128xf32>,
    } else {
    }
    %c0 = arith.constant 0 : index
    %c0_1 = arith.constant 0 : index
    %c0_2 = arith.constant 0 : index
    %3 = vector.load %arg2[%c0, %c0_1, %c0_2] : memref<8x8x16xf32, #tpu.memory_space<vmem>>, vector<8x8x16xf32>
    %4 = tpu.transpose %3, [1, 0, 2] : vector<8x8x16xf32> -> vector<8x8x16xf32>
    %5 = vector.shape_cast %4 : vector<8x8x16xf32> to vector<64x16xf32>
    %c0_3 = arith.constant 0 : index
    %c0_4 = arith.constant 0 : index
    %6 = vector.load %arg3[%c0_3, %c0_4] : memref<16x512xf32, #tpu.memory_space<vmem>>, vector<16x512xf32>
    %cst = arith.constant dense<0.000000e+00> : vector<64x512xf32>
    %7 = tpu.matmul %5, %6, %cst {dimension_numbers = #tpu.dot_dimension_numbers<[1], [0], [0], [1], [0, 0, 1, 1], [], []>} : vector<64x16xf32>, vector<16x512xf32>, vector<64x512xf32> -> vector<64x512xf32>
    %c0_5 = arith.constant 0 : index
    %c0_6 = arith.constant 0 : index
    %8 = vector.load %arg5[%c0_5, %c0_6] : memref<1x512xf32, #tpu.memory_space<vmem>>, vector<1x512xf32>
    %9 = vector.broadcast %8 : vector<1x512xf32> to vector<64x512xf32>
    %10 = arith.addf %7, %9 : vector<64x512xf32>
    %11 = vector.shape_cast %10 : vector<64x512xf32> to vector<8x8x512xf32>
    %c0_7 = arith.constant 0 : index
    %c0_8 = arith.constant 0 : index
    %c0_9 = arith.constant 0 : index
    %12 = vector.load %arg7[%c0_7, %c0_8, %c0_9] : memref<8x8x512xf32, #tpu.memory_space<vmem>>, vector<8x8x512xf32>
    tpu.vector_store %arg7[%c0_7, %c0_8, %c0_9], %11 {strides = array<i32>} : memref<8x8x512xf32, #tpu.memory_space<vmem>>, vector<8x8x512xf32>,
    %c0_10 = arith.constant 0 : index
    %c0_11 = arith.constant 0 : index
    %13 = vector.load %arg4[%c0_10, %c0_11] : memref<128x512xf32, #tpu.memory_space<vmem>>, vector<128x512xf32>
    %c0_12 = arith.constant 0 : index
    %c0_13 = arith.constant 0 : index
    %14 = vector.load %arg8[%c0_12, %c0_13] : memref<8x128xf32, #tpu.memory_space<vmem>>, vector<8x128xf32>
    %c0_14 = arith.constant 0 : index
    %c0_15 = arith.constant 0 : index
    %15 = vector.load %arg9[%c0_14, %c0_15] : memref<8x128xf32, #tpu.memory_space<vmem>>, vector<8x128xf32>
    %c0_i32_16 = arith.constant 0 : i32
    %16 = arith.index_cast %c0_i32_16 : i32 to index
    %c0_17 = arith.constant 0 : index
    %c0_18 = arith.constant 0 : index
    %17 = vector.load %arg7[%16, %c0_17, %c0_18] : memref<8x8x512xf32, #tpu.memory_space<vmem>>, vector<1x8x512xf32>
    %18 = vector.shape_cast %17 : vector<1x8x512xf32> to vector<8x512xf32>
    %cst_19 = arith.constant dense<0.000000e+00> : vector<8x512xf32>
    %19 = tpu.matmul %14, %13, %cst_19 {dimension_numbers = #tpu.dot_dimension_numbers<[1], [0], [0], [1], [0, 0, 1, 1], [], []>} : vector<8x128xf32>, vector<128x512xf32>, vector<8x512xf32> -> vector<8x512xf32>
    %20 = arith.addf %18, %19 : vector<8x512xf32>
    %21 = vector.extract_strided_slice %20 {offsets = [0, 0], sizes = [8, 128], strides = [1, 1]} : vector<8x512xf32> to vector<8x128xf32>
    %22 = arith.negf %21 : vector<8x128xf32>
    %23 = math.exp %22 : vector<8x128xf32>
    %cst_20 = arith.constant 1.000000e+00 : f32
    %24 = vector.broadcast %cst_20 : f32 to vector<8x128xf32>
    %25 = arith.addf %24, %23 : vector<8x128xf32>
    %26 = arith.divf %24, %25 : vector<8x128xf32>
    %27 = vector.extract_strided_slice %20 {offsets = [0, 128], sizes = [8, 128], strides = [1, 1]} : vector<8x512xf32> to vector<8x128xf32>
    %28 = arith.negf %27 : vector<8x128xf32>
    %29 = math.exp %28 : vector<8x128xf32>
    %cst_21 = arith.constant 1.000000e+00 : f32
    %30 = vector.broadcast %cst_21 : f32 to vector<8x128xf32>
    %31 = arith.addf %30, %29 : vector<8x128xf32>
    %32 = arith.divf %30, %31 : vector<8x128xf32>
    %33 = vector.extract_strided_slice %20 {offsets = [0, 256], sizes = [8, 128], strides = [1, 1]} : vector<8x512xf32> to vector<8x128xf32>
    %34 = math.tanh %33 : vector<8x128xf32>
    %35 = vector.extract_strided_slice %20 {offsets = [0, 384], sizes = [8, 128], strides = [1, 1]} : vector<8x512xf32> to vector<8x128xf32>
    %36 = arith.negf %35 : vector<8x128xf32>
    %37 = math.exp %36 : vector<8x128xf32>
    %cst_22 = arith.constant 1.000000e+00 : f32
    %38 = vector.broadcast %cst_22 : f32 to vector<8x128xf32>
    %39 = arith.addf %38, %37 : vector<8x128xf32>
    %40 = arith.divf %38, %39 : vector<8x128xf32>
    %41 = arith.mulf %32, %15 : vector<8x128xf32>
    %42 = arith.mulf %26, %34 : vector<8x128xf32>
    %43 = arith.addf %41, %42 : vector<8x128xf32>
    %44 = math.tanh %43 : vector<8x128xf32>
    %45 = arith.mulf %40, %44 : vector<8x128xf32>
    %c1_i32 = arith.constant 1 : i32
    %46 = arith.index_cast %c1_i32 : i32 to index
    %c0_23 = arith.constant 0 : index
    %c0_24 = arith.constant 0 : index
    %47 = vector.load %arg7[%46, %c0_23, %c0_24] : memref<8x8x512xf32, #tpu.memory_space<vmem>>, vector<1x8x512xf32>
    %48 = vector.shape_cast %47 : vector<1x8x512xf32> to vector<8x512xf32>
    %cst_25 = arith.constant dense<0.000000e+00> : vector<8x512xf32>
    %49 = tpu.matmul %45, %13, %cst_25 {dimension_numbers = #tpu.dot_dimension_numbers<[1], [0], [0], [1], [0, 0, 1, 1], [], []>} : vector<8x128xf32>, vector<128x512xf32>, vector<8x512xf32> -> vector<8x512xf32>
    %50 = arith.addf %48, %49 : vector<8x512xf32>
    %51 = vector.extract_strided_slice %50 {offsets = [0, 0], sizes = [8, 128], strides = [1, 1]} : vector<8x512xf32> to vector<8x128xf32>
    %52 = arith.negf %51 : vector<8x128xf32>
    %53 = math.exp %52 : vector<8x128xf32>
    %cst_26 = arith.constant 1.000000e+00 : f32
    %54 = vector.broadcast %cst_26 : f32 to vector<8x128xf32>
    %55 = arith.addf %54, %53 : vector<8x128xf32>
    %56 = arith.divf %54, %55 : vector<8x128xf32>
    %57 = vector.extract_strided_slice %50 {offsets = [0, 128], sizes = [8, 128], strides = [1, 1]} : vector<8x512xf32> to vector<8x128xf32>
    %58 = arith.negf %57 : vector<8x128xf32>
    %59 = math.exp %58 : vector<8x128xf32>
    %cst_27 = arith.constant 1.000000e+00 : f32
    %60 = vector.broadcast %cst_27 : f32 to vector<8x128xf32>
    %61 = arith.addf %60, %59 : vector<8x128xf32>
    %62 = arith.divf %60, %61 : vector<8x128xf32>
    %63 = vector.extract_strided_slice %50 {offsets = [0, 256], sizes = [8, 128], strides = [1, 1]} : vector<8x512xf32> to vector<8x128xf32>
    %64 = math.tanh %63 : vector<8x128xf32>
    %65 = vector.extract_strided_slice %50 {offsets = [0, 384], sizes = [8, 128], strides = [1, 1]} : vector<8x512xf32> to vector<8x128xf32>
    %66 = arith.negf %65 : vector<8x128xf32>
    %67 = math.exp %66 : vector<8x128xf32>
    %cst_28 = arith.constant 1.000000e+00 : f32
    %68 = vector.broadcast %cst_28 : f32 to vector<8x128xf32>
    %69 = arith.addf %68, %67 : vector<8x128xf32>
    %70 = arith.divf %68, %69 : vector<8x128xf32>
    %71 = arith.mulf %62, %43 : vector<8x128xf32>
    %72 = arith.mulf %56, %64 : vector<8x128xf32>
    %73 = arith.addf %71, %72 : vector<8x128xf32>
    %74 = math.tanh %73 : vector<8x128xf32>
    %75 = arith.mulf %70, %74 : vector<8x128xf32>
    %c2_i32 = arith.constant 2 : i32
    %76 = arith.index_cast %c2_i32 : i32 to index
    %c0_29 = arith.constant 0 : index
    %c0_30 = arith.constant 0 : index
    %77 = vector.load %arg7[%76, %c0_29, %c0_30] : memref<8x8x512xf32, #tpu.memory_space<vmem>>, vector<1x8x512xf32>
    %78 = vector.shape_cast %77 : vector<1x8x512xf32> to vector<8x512xf32>
    %cst_31 = arith.constant dense<0.000000e+00> : vector<8x512xf32>
    %79 = tpu.matmul %75, %13, %cst_31 {dimension_numbers = #tpu.dot_dimension_numbers<[1], [0], [0], [1], [0, 0, 1, 1], [], []>} : vector<8x128xf32>, vector<128x512xf32>, vector<8x512xf32> -> vector<8x512xf32>
    %80 = arith.addf %78, %79 : vector<8x512xf32>
    %81 = vector.extract_strided_slice %80 {offsets = [0, 0], sizes = [8, 128], strides = [1, 1]} : vector<8x512xf32> to vector<8x128xf32>
    %82 = arith.negf %81 : vector<8x128xf32>
    %83 = math.exp %82 : vector<8x128xf32>
    %cst_32 = arith.constant 1.000000e+00 : f32
    %84 = vector.broadcast %cst_32 : f32 to vector<8x128xf32>
    %85 = arith.addf %84, %83 : vector<8x128xf32>
    %86 = arith.divf %84, %85 : vector<8x128xf32>
    %87 = vector.extract_strided_slice %80 {offsets = [0, 128], sizes = [8, 128], strides = [1, 1]} : vector<8x512xf32> to vector<8x128xf32>
    %88 = arith.negf %87 : vector<8x128xf32>
    %89 = math.exp %88 : vector<8x128xf32>
    %cst_33 = arith.constant 1.000000e+00 : f32
    %90 = vector.broadcast %cst_33 : f32 to vector<8x128xf32>
    %91 = arith.addf %90, %89 : vector<8x128xf32>
    %92 = arith.divf %90, %91 : vector<8x128xf32>
    %93 = vector.extract_strided_slice %80 {offsets = [0, 256], sizes = [8, 128], strides = [1, 1]} : vector<8x512xf32> to vector<8x128xf32>
    %94 = math.tanh %93 : vector<8x128xf32>
    %95 = vector.extract_strided_slice %80 {offsets = [0, 384], sizes = [8, 128], strides = [1, 1]} : vector<8x512xf32> to vector<8x128xf32>
    %96 = arith.negf %95 : vector<8x128xf32>
    %97 = math.exp %96 : vector<8x128xf32>
    %cst_34 = arith.constant 1.000000e+00 : f32
    %98 = vector.broadcast %cst_34 : f32 to vector<8x128xf32>
    %99 = arith.addf %98, %97 : vector<8x128xf32>
    %100 = arith.divf %98, %99 : vector<8x128xf32>
    %101 = arith.mulf %92, %73 : vector<8x128xf32>
    %102 = arith.mulf %86, %94 : vector<8x128xf32>
    %103 = arith.addf %101, %102 : vector<8x128xf32>
    %104 = math.tanh %103 : vector<8x128xf32>
    %105 = arith.mulf %100, %104 : vector<8x128xf32>
    %c3_i32 = arith.constant 3 : i32
    %106 = arith.index_cast %c3_i32 : i32 to index
    %c0_35 = arith.constant 0 : index
    %c0_36 = arith.constant 0 : index
    %107 = vector.load %arg7[%106, %c0_35, %c0_36] : memref<8x8x512xf32, #tpu.memory_space<vmem>>, vector<1x8x512xf32>
    %108 = vector.shape_cast %107 : vector<1x8x512xf32> to vector<8x512xf32>
    %cst_37 = arith.constant dense<0.000000e+00> : vector<8x512xf32>
    %109 = tpu.matmul %105, %13, %cst_37 {dimension_numbers = #tpu.dot_dimension_numbers<[1], [0], [0], [1], [0, 0, 1, 1], [], []>} : vector<8x128xf32>, vector<128x512xf32>, vector<8x512xf32> -> vector<8x512xf32>
    %110 = arith.addf %108, %109 : vector<8x512xf32>
    %111 = vector.extract_strided_slice %110 {offsets = [0, 0], sizes = [8, 128], strides = [1, 1]} : vector<8x512xf32> to vector<8x128xf32>
    %112 = arith.negf %111 : vector<8x128xf32>
    %113 = math.exp %112 : vector<8x128xf32>
    %cst_38 = arith.constant 1.000000e+00 : f32
    %114 = vector.broadcast %cst_38 : f32 to vector<8x128xf32>
    %115 = arith.addf %114, %113 : vector<8x128xf32>
    %116 = arith.divf %114, %115 : vector<8x128xf32>
    %117 = vector.extract_strided_slice %110 {offsets = [0, 128], sizes = [8, 128], strides = [1, 1]} : vector<8x512xf32> to vector<8x128xf32>
    %118 = arith.negf %117 : vector<8x128xf32>
    %119 = math.exp %118 : vector<8x128xf32>
    %cst_39 = arith.constant 1.000000e+00 : f32
    %120 = vector.broadcast %cst_39 : f32 to vector<8x128xf32>
    %121 = arith.addf %120, %119 : vector<8x128xf32>
    %122 = arith.divf %120, %121 : vector<8x128xf32>
    %123 = vector.extract_strided_slice %110 {offsets = [0, 256], sizes = [8, 128], strides = [1, 1]} : vector<8x512xf32> to vector<8x128xf32>
    %124 = math.tanh %123 : vector<8x128xf32>
    %125 = vector.extract_strided_slice %110 {offsets = [0, 384], sizes = [8, 128], strides = [1, 1]} : vector<8x512xf32> to vector<8x128xf32>
    %126 = arith.negf %125 : vector<8x128xf32>
    %127 = math.exp %126 : vector<8x128xf32>
    %cst_40 = arith.constant 1.000000e+00 : f32
    %128 = vector.broadcast %cst_40 : f32 to vector<8x128xf32>
    %129 = arith.addf %128, %127 : vector<8x128xf32>
    %130 = arith.divf %128, %129 : vector<8x128xf32>
    %131 = arith.mulf %122, %103 : vector<8x128xf32>
    %132 = arith.mulf %116, %124 : vector<8x128xf32>
    %133 = arith.addf %131, %132 : vector<8x128xf32>
    %134 = math.tanh %133 : vector<8x128xf32>
    %135 = arith.mulf %130, %134 : vector<8x128xf32>
    %c4_i32 = arith.constant 4 : i32
    %136 = arith.index_cast %c4_i32 : i32 to index
    %c0_41 = arith.constant 0 : index
    %c0_42 = arith.constant 0 : index
    %137 = vector.load %arg7[%136, %c0_41, %c0_42] : memref<8x8x512xf32, #tpu.memory_space<vmem>>, vector<1x8x512xf32>
    %138 = vector.shape_cast %137 : vector<1x8x512xf32> to vector<8x512xf32>
    %cst_43 = arith.constant dense<0.000000e+00> : vector<8x512xf32>
    %139 = tpu.matmul %135, %13, %cst_43 {dimension_numbers = #tpu.dot_dimension_numbers<[1], [0], [0], [1], [0, 0, 1, 1], [], []>} : vector<8x128xf32>, vector<128x512xf32>, vector<8x512xf32> -> vector<8x512xf32>
    %140 = arith.addf %138, %139 : vector<8x512xf32>
    %141 = vector.extract_strided_slice %140 {offsets = [0, 0], sizes = [8, 128], strides = [1, 1]} : vector<8x512xf32> to vector<8x128xf32>
    %142 = arith.negf %141 : vector<8x128xf32>
    %143 = math.exp %142 : vector<8x128xf32>
    %cst_44 = arith.constant 1.000000e+00 : f32
    %144 = vector.broadcast %cst_44 : f32 to vector<8x128xf32>
    %145 = arith.addf %144, %143 : vector<8x128xf32>
    %146 = arith.divf %144, %145 : vector<8x128xf32>
    %147 = vector.extract_strided_slice %140 {offsets = [0, 128], sizes = [8, 128], strides = [1, 1]} : vector<8x512xf32> to vector<8x128xf32>
    %148 = arith.negf %147 : vector<8x128xf32>
    %149 = math.exp %148 : vector<8x128xf32>
    %cst_45 = arith.constant 1.000000e+00 : f32
    %150 = vector.broadcast %cst_45 : f32 to vector<8x128xf32>
    %151 = arith.addf %150, %149 : vector<8x128xf32>
    %152 = arith.divf %150, %151 : vector<8x128xf32>
    %153 = vector.extract_strided_slice %140 {offsets = [0, 256], sizes = [8, 128], strides = [1, 1]} : vector<8x512xf32> to vector<8x128xf32>
    %154 = math.tanh %153 : vector<8x128xf32>
    %155 = vector.extract_strided_slice %140 {offsets = [0, 384], sizes = [8, 128], strides = [1, 1]} : vector<8x512xf32> to vector<8x128xf32>
    %156 = arith.negf %155 : vector<8x128xf32>
    %157 = math.exp %156 : vector<8x128xf32>
    %cst_46 = arith.constant 1.000000e+00 : f32
    %158 = vector.broadcast %cst_46 : f32 to vector<8x128xf32>
    %159 = arith.addf %158, %157 : vector<8x128xf32>
    %160 = arith.divf %158, %159 : vector<8x128xf32>
    %161 = arith.mulf %152, %133 : vector<8x128xf32>
    %162 = arith.mulf %146, %154 : vector<8x128xf32>
    %163 = arith.addf %161, %162 : vector<8x128xf32>
    %164 = math.tanh %163 : vector<8x128xf32>
    %165 = arith.mulf %160, %164 : vector<8x128xf32>
    %c5_i32 = arith.constant 5 : i32
    %166 = arith.index_cast %c5_i32 : i32 to index
    %c0_47 = arith.constant 0 : index
    %c0_48 = arith.constant 0 : index
    %167 = vector.load %arg7[%166, %c0_47, %c0_48] : memref<8x8x512xf32, #tpu.memory_space<vmem>>, vector<1x8x512xf32>
    %168 = vector.shape_cast %167 : vector<1x8x512xf32> to vector<8x512xf32>
    %cst_49 = arith.constant dense<0.000000e+00> : vector<8x512xf32>
    %169 = tpu.matmul %165, %13, %cst_49 {dimension_numbers = #tpu.dot_dimension_numbers<[1], [0], [0], [1], [0, 0, 1, 1], [], []>} : vector<8x128xf32>, vector<128x512xf32>, vector<8x512xf32> -> vector<8x512xf32>
    %170 = arith.addf %168, %169 : vector<8x512xf32>
    %171 = vector.extract_strided_slice %170 {offsets = [0, 0], sizes = [8, 128], strides = [1, 1]} : vector<8x512xf32> to vector<8x128xf32>
    %172 = arith.negf %171 : vector<8x128xf32>
    %173 = math.exp %172 : vector<8x128xf32>
    %cst_50 = arith.constant 1.000000e+00 : f32
    %174 = vector.broadcast %cst_50 : f32 to vector<8x128xf32>
    %175 = arith.addf %174, %173 : vector<8x128xf32>
    %176 = arith.divf %174, %175 : vector<8x128xf32>
    %177 = vector.extract_strided_slice %170 {offsets = [0, 128], sizes = [8, 128], strides = [1, 1]} : vector<8x512xf32> to vector<8x128xf32>
    %178 = arith.negf %177 : vector<8x128xf32>
    %179 = math.exp %178 : vector<8x128xf32>
    %cst_51 = arith.constant 1.000000e+00 : f32
    %180 = vector.broadcast %cst_51 : f32 to vector<8x128xf32>
    %181 = arith.addf %180, %179 : vector<8x128xf32>
    %182 = arith.divf %180, %181 : vector<8x128xf32>
    %183 = vector.extract_strided_slice %170 {offsets = [0, 256], sizes = [8, 128], strides = [1, 1]} : vector<8x512xf32> to vector<8x128xf32>
    %184 = math.tanh %183 : vector<8x128xf32>
    %185 = vector.extract_strided_slice %170 {offsets = [0, 384], sizes = [8, 128], strides = [1, 1]} : vector<8x512xf32> to vector<8x128xf32>
    %186 = arith.negf %185 : vector<8x128xf32>
    %187 = math.exp %186 : vector<8x128xf32>
    %cst_52 = arith.constant 1.000000e+00 : f32
    %188 = vector.broadcast %cst_52 : f32 to vector<8x128xf32>
    %189 = arith.addf %188, %187 : vector<8x128xf32>
    %190 = arith.divf %188, %189 : vector<8x128xf32>
    %191 = arith.mulf %182, %163 : vector<8x128xf32>
    %192 = arith.mulf %176, %184 : vector<8x128xf32>
    %193 = arith.addf %191, %192 : vector<8x128xf32>
    %194 = math.tanh %193 : vector<8x128xf32>
    %195 = arith.mulf %190, %194 : vector<8x128xf32>
    %c6_i32 = arith.constant 6 : i32
    %196 = arith.index_cast %c6_i32 : i32 to index
    %c0_53 = arith.constant 0 : index
    %c0_54 = arith.constant 0 : index
    %197 = vector.load %arg7[%196, %c0_53, %c0_54] : memref<8x8x512xf32, #tpu.memory_space<vmem>>, vector<1x8x512xf32>
    %198 = vector.shape_cast %197 : vector<1x8x512xf32> to vector<8x512xf32>
    %cst_55 = arith.constant dense<0.000000e+00> : vector<8x512xf32>
    %199 = tpu.matmul %195, %13, %cst_55 {dimension_numbers = #tpu.dot_dimension_numbers<[1], [0], [0], [1], [0, 0, 1, 1], [], []>} : vector<8x128xf32>, vector<128x512xf32>, vector<8x512xf32> -> vector<8x512xf32>
    %200 = arith.addf %198, %199 : vector<8x512xf32>
    %201 = vector.extract_strided_slice %200 {offsets = [0, 0], sizes = [8, 128], strides = [1, 1]} : vector<8x512xf32> to vector<8x128xf32>
    %202 = arith.negf %201 : vector<8x128xf32>
    %203 = math.exp %202 : vector<8x128xf32>
    %cst_56 = arith.constant 1.000000e+00 : f32
    %204 = vector.broadcast %cst_56 : f32 to vector<8x128xf32>
    %205 = arith.addf %204, %203 : vector<8x128xf32>
    %206 = arith.divf %204, %205 : vector<8x128xf32>
    %207 = vector.extract_strided_slice %200 {offsets = [0, 128], sizes = [8, 128], strides = [1, 1]} : vector<8x512xf32> to vector<8x128xf32>
    %208 = arith.negf %207 : vector<8x128xf32>
    %209 = math.exp %208 : vector<8x128xf32>
    %cst_57 = arith.constant 1.000000e+00 : f32
    %210 = vector.broadcast %cst_57 : f32 to vector<8x128xf32>
    %211 = arith.addf %210, %209 : vector<8x128xf32>
    %212 = arith.divf %210, %211 : vector<8x128xf32>
    %213 = vector.extract_strided_slice %200 {offsets = [0, 256], sizes = [8, 128], strides = [1, 1]} : vector<8x512xf32> to vector<8x128xf32>
    %214 = math.tanh %213 : vector<8x128xf32>
    %215 = vector.extract_strided_slice %200 {offsets = [0, 384], sizes = [8, 128], strides = [1, 1]} : vector<8x512xf32> to vector<8x128xf32>
    %216 = arith.negf %215 : vector<8x128xf32>
    %217 = math.exp %216 : vector<8x128xf32>
    %cst_58 = arith.constant 1.000000e+00 : f32
    %218 = vector.broadcast %cst_58 : f32 to vector<8x128xf32>
    %219 = arith.addf %218, %217 : vector<8x128xf32>
    %220 = arith.divf %218, %219 : vector<8x128xf32>
    %221 = arith.mulf %212, %193 : vector<8x128xf32>
    %222 = arith.mulf %206, %214 : vector<8x128xf32>
    %223 = arith.addf %221, %222 : vector<8x128xf32>
    %224 = math.tanh %223 : vector<8x128xf32>
    %225 = arith.mulf %220, %224 : vector<8x128xf32>
    %c7_i32 = arith.constant 7 : i32
    %226 = arith.index_cast %c7_i32 : i32 to index
    %c0_59 = arith.constant 0 : index
    %c0_60 = arith.constant 0 : index
    %227 = vector.load %arg7[%226, %c0_59, %c0_60] : memref<8x8x512xf32, #tpu.memory_space<vmem>>, vector<1x8x512xf32>
    %228 = vector.shape_cast %227 : vector<1x8x512xf32> to vector<8x512xf32>
    %cst_61 = arith.constant dense<0.000000e+00> : vector<8x512xf32>
    %229 = tpu.matmul %225, %13, %cst_61 {dimension_numbers = #tpu.dot_dimension_numbers<[1], [0], [0], [1], [0, 0, 1, 1], [], []>} : vector<8x128xf32>, vector<128x512xf32>, vector<8x512xf32> -> vector<8x512xf32>
    %230 = arith.addf %228, %229 : vector<8x512xf32>
    %231 = vector.extract_strided_slice %230 {offsets = [0, 0], sizes = [8, 128], strides = [1, 1]} : vector<8x512xf32> to vector<8x128xf32>
    %232 = arith.negf %231 : vector<8x128xf32>
    %233 = math.exp %232 : vector<8x128xf32>
    %cst_62 = arith.constant 1.000000e+00 : f32
    %234 = vector.broadcast %cst_62 : f32 to vector<8x128xf32>
    %235 = arith.addf %234, %233 : vector<8x128xf32>
    %236 = arith.divf %234, %235 : vector<8x128xf32>
    %237 = vector.extract_strided_slice %230 {offsets = [0, 128], sizes = [8, 128], strides = [1, 1]} : vector<8x512xf32> to vector<8x128xf32>
    %238 = arith.negf %237 : vector<8x128xf32>
    %239 = math.exp %238 : vector<8x128xf32>
    %cst_63 = arith.constant 1.000000e+00 : f32
    %240 = vector.broadcast %cst_63 : f32 to vector<8x128xf32>
    %241 = arith.addf %240, %239 : vector<8x128xf32>
    %242 = arith.divf %240, %241 : vector<8x128xf32>
    %243 = vector.extract_strided_slice %230 {offsets = [0, 256], sizes = [8, 128], strides = [1, 1]} : vector<8x512xf32> to vector<8x128xf32>
    %244 = math.tanh %243 : vector<8x128xf32>
    %245 = vector.extract_strided_slice %230 {offsets = [0, 384], sizes = [8, 128], strides = [1, 1]} : vector<8x512xf32> to vector<8x128xf32>
    %246 = arith.negf %245 : vector<8x128xf32>
    %247 = math.exp %246 : vector<8x128xf32>
    %cst_64 = arith.constant 1.000000e+00 : f32
    %248 = vector.broadcast %cst_64 : f32 to vector<8x128xf32>
    %249 = arith.addf %248, %247 : vector<8x128xf32>
    %250 = arith.divf %248, %249 : vector<8x128xf32>
    %251 = arith.mulf %242, %223 : vector<8x128xf32>
    %252 = arith.mulf %236, %244 : vector<8x128xf32>
    %253 = arith.addf %251, %252 : vector<8x128xf32>
    %254 = math.tanh %253 : vector<8x128xf32>
    %255 = arith.mulf %250, %254 : vector<8x128xf32>
    %c8_i32 = arith.constant 8 : i32
    %c0_65 = arith.constant 0 : index
    %c0_66 = arith.constant 0 : index
    %256 = vector.load %arg8[%c0_65, %c0_66] : memref<8x128xf32, #tpu.memory_space<vmem>>, vector<8x128xf32>
    tpu.vector_store %arg8[%c0_65, %c0_66], %255 {strides = array<i32>} : memref<8x128xf32, #tpu.memory_space<vmem>>, vector<8x128xf32>,
    %c0_67 = arith.constant 0 : index
    %c0_68 = arith.constant 0 : index
    %257 = vector.load %arg9[%c0_67, %c0_68] : memref<8x128xf32, #tpu.memory_space<vmem>>, vector<8x128xf32>
    tpu.vector_store %arg9[%c0_67, %c0_68], %253 {strides = array<i32>} : memref<8x128xf32, #tpu.memory_space<vmem>>, vector<8x128xf32>,
    %c0_i32_69 = arith.constant 0 : i32
    %258 = arith.cmpi eq, %arg1, %c0_i32_69 : i32
    %259 = arith.extui %258 : i1 to i32
    %c0_i32_70 = arith.constant 0 : i32
    %260 = arith.cmpi ne, %259, %c0_i32_70 : i32
    scf.if %260 {
      %c0_71 = arith.constant 0 : index
      %c0_72 = arith.constant 0 : index
      %261 = vector.load %arg6[%c0_71, %c0_72] : memref<8x128xf32, #tpu.memory_space<vmem>>, vector<8x128xf32>
      tpu.vector_store %arg6[%c0_71, %c0_72], %255 {strides = array<i32>} : memref<8x128xf32, #tpu.memory_space<vmem>>, vector<8x128xf32>,
    } else {
    }
    return
  }
  func.func @transform_0(%arg0: i32, %arg1: i32) -> (i32, i32, i32) {
    %c0_i32 = arith.constant 0 : i32
    %c0_i32_0 = arith.constant 0 : i32
    return %arg0, %arg1, %c0_i32 : i32, i32, i32
  }
  func.func @transform_1(%arg0: i32, %arg1: i32) -> (i32, i32) {
    %c0_i32 = arith.constant 0 : i32
    %c0_i32_0 = arith.constant 0 : i32
    %c0_i32_1 = arith.constant 0 : i32
    return %c0_i32, %c0_i32_0 : i32, i32
  }
  func.func @transform_2(%arg0: i32, %arg1: i32) -> (i32, i32) {
    %c0_i32 = arith.constant 0 : i32
    %c0_i32_0 = arith.constant 0 : i32
    %c0_i32_1 = arith.constant 0 : i32
    return %c0_i32, %c0_i32_0 : i32, i32
  }
  func.func @transform_3(%arg0: i32, %arg1: i32) -> (i32, i32) {
    %c0_i32 = arith.constant 0 : i32
    %c0_i32_0 = arith.constant 0 : i32
    %c0_i32_1 = arith.constant 0 : i32
    return %c0_i32, %c0_i32_0 : i32, i32
  }
  func.func @transform_4(%arg0: i32, %arg1: i32) -> (i32, i32) {
    %c0_i32 = arith.constant 0 : i32
    %c0_i32_0 = arith.constant 0 : i32
    return %arg0, %c0_i32 : i32, i32
  }
}

</mosaic_0001>

<llo_original>
// kernel: tpu_custom_call.1
$region0: #{tpu_custom_call.1}
  #allocation0 [shape = 'u32[]', space=smem, size = 0x4, offset = 0x4, fixed_abs, tag = 'smem constant byte address 0x4 - core index']
  #allocation1 [shape = 'u32[72,128]{1,0:T(1,128)}', space=vmem, size = 0x9000, scoped, tag = 'internal scratch']
  #allocation2 [shape = 'f32[8,8,512]{2,1,0:T(8,128)}', space=vmem, size = 0x20000, scoped, tag = 'scratch operand']
  #allocation3 [shape = 'f32[8,128]{1,0:T(8,128)}', space=vmem, size = 0x1000, scoped, tag = 'scratch operand']
  #allocation4 [shape = 'f32[8,128]{1,0:T(8,128)}', space=vmem, size = 0x1000, scoped, tag = 'scratch operand']
  %s0 = inlined_call_operand.hbm [shape: f32[8,8,16], index: 0, kind: input, shape index: {}]
  %s1 = inlined_call_operand.hbm [shape: f32[16,512], index: 1, kind: input, shape index: {}]
  %s2 = inlined_call_operand.hbm [shape: f32[128,512], index: 2, kind: input, shape index: {}]
  %s3 = inlined_call_operand.hbm [shape: f32[1,512], index: 3, kind: input, shape index: {}]
  %s4 = inlined_call_operand.hbm [shape: f32[8,128], index: 4, kind: output, shape index: {}]
  %s5 = sld [smem:[#allocation0]]
  $region50: #{tpu_custom_call.1} parent=0
    _
  %s7 = ssub.s32 1, %s5
  %s8 = scalar_select 0, %s7, %s5
  $region1: #{tpu_custom_call.1} parent=0
    #allocation5 [shape = 'u8[32768]{0}', space=vmem, size = 0x8000, scoped, tag = 'input window, operand 0, single buffered']
    #allocation6 [shape = 's32[1]{0}', space=sflag, size = 0x4, scoped, tag = 'scoped memory for tpu_custom_call.1']
    #allocation7 [shape = 's32[1]{0}', space=sflag, size = 0x4, scoped, tag = 'scoped memory for tpu_custom_call.1']
    #allocation8 [shape = 'u8[32768]{0}', space=vmem, size = 0x8000, scoped, tag = 'input window, operand 1, single buffered']
    #allocation9 [shape = 's32[1]{0}', space=sflag, size = 0x4, scoped, tag = 'scoped memory for tpu_custom_call.1']
    #allocation10 [shape = 'u8[262144]{0}', space=vmem, size = 0x40000, scoped, tag = 'input window, operand 2, single buffered']
    #allocation11 [shape = 'u8[2048]{0}', space=vmem, size = 0x800, scoped, tag = 'input window, operand 3, single buffered']
    #allocation12 [shape = 's32[1]{0}', space=sflag, size = 0x4, scoped, tag = 'scoped memory for tpu_custom_call.1']
    #allocation13 [shape = 'u8[4096]{0}', space=vmem, size = 0x1000, scoped, tag = 'output window, operand 0, single buffered']
    %9 = vsyncpa [#allocation6], 0
    %10 = vsyncpa [#allocation9], 0
    %11 = vsyncpa [#allocation12], 0
    %12 = vsyncpa [#allocation7], 0
    // Predicated region
    $region2: #{tpu_custom_call.1} parent=1 // pred_check
      _
    $region3: #{tpu_custom_call.1} parent=1 // pred_check_branch
      %14 = sbr.rel (0) target = $region5
    $region4: #{tpu_custom_call.1} parent=1 // pred_region
      %16 = vsyncadd [#allocation6], 0
      %s17 = sshll.u32 %s0, 4
      %s18 = int_to_ptr.hbm [resolvable:$true] %s17
      %s19 = sshll.u32 [#allocation5], 4
      %s20 = int_to_ptr.vmem [resolvable:$true] %s19
      %25 = dma.hbm_to_vmem [thread:$0]  %s18, 1024, %s20, [#allocation6], 128, 128, 8
    $region5: #{tpu_custom_call.1} parent=1 // pred_fallthru
      _
    // Predicated region
    $region6: #{tpu_custom_call.1} parent=1 // pred_check
      _
    $region7: #{tpu_custom_call.1} parent=1 // pred_check_branch
      %27 = sbr.rel (0) target = $region9
    $region8: #{tpu_custom_call.1} parent=1 // pred_region
      %29 = vsyncadd [#allocation9], 0
      %s30 = sshll.u32 %s1, 4
      %s31 = int_to_ptr.hbm [resolvable:$true] %s30
      %s32 = sshll.u32 [#allocation8], 4
      %s33 = int_to_ptr.vmem [resolvable:$true] %s32
      %38 = dma.hbm_to_vmem [thread:$0]  %s31, 1024, %s33, [#allocation9], 512, 512, 32
    $region9: #{tpu_custom_call.1} parent=1 // pred_fallthru
      _
    // Predicated region
    $region10: #{tpu_custom_call.1} parent=1 // pred_check
      _
    $region11: #{tpu_custom_call.1} parent=1 // pred_check_branch
      %40 = sbr.rel (0) target = $region13
    $region12: #{tpu_custom_call.1} parent=1 // pred_region
      %42 = vsyncadd [#allocation9], 0
      %s43 = sshll.u32 %s2, 4
      %s44 = int_to_ptr.hbm [resolvable:$true] %s43
      %s45 = sshll.u32 [#allocation10], 4
      %s46 = int_to_ptr.vmem [resolvable:$true] %s45
      %51 = dma.hbm_to_vmem [thread:$0]  %s44, 8192, %s46, [#allocation9], 512, 512, 32
    $region13: #{tpu_custom_call.1} parent=1 // pred_fallthru
      _
    // Predicated region
    $region14: #{tpu_custom_call.1} parent=1 // pred_check
      _
    $region15: #{tpu_custom_call.1} parent=1 // pred_check_branch
      %53 = sbr.rel (0) target = $region17
    $region16: #{tpu_custom_call.1} parent=1 // pred_region
      %55 = vsyncadd [#allocation12], 0
      %s57 = sshll.u32 %s3, 4
      %s58 = int_to_ptr.hbm [resolvable:$true] %s57
      %s59 = sshll.u32 [#allocation11], 4
      %s60 = int_to_ptr.vmem [resolvable:$true] %s59
      %62 = dma.hbm_to_vmem [thread:$0]  %s58, 64, %s60, [#allocation12]
    $region17: #{tpu_custom_call.1} parent=1 // pred_fallthru
      _
    // Predicated region
    $region18: #{tpu_custom_call.1} parent=1 // pred_check
      _
    $region19: #{tpu_custom_call.1} parent=1 // pred_check_branch
      %64 = sbr.rel (0) target = $region21
    $region20: #{tpu_custom_call.1} parent=1 // pred_region
      %66 = dma.done [#allocation6], 1024
    $region21: #{tpu_custom_call.1} parent=1 // pred_fallthru
      _
    // Predicated region
    $region22: #{tpu_custom_call.1} parent=1 // pred_check
      _
    $region23: #{tpu_custom_call.1} parent=1 // pred_check_branch
      %68 = sbr.rel (0) target = $region25
    $region24: #{tpu_custom_call.1} parent=1 // pred_region
      %70 = dma.done [#allocation9], 1024
    $region25: #{tpu_custom_call.1} parent=1 // pred_fallthru
      _
    // Predicated region
    $region26: #{tpu_custom_call.1} parent=1 // pred_check
      _
    $region27: #{tpu_custom_call.1} parent=1 // pred_check_branch
      %72 = sbr.rel (0) target = $region29
    $region28: #{tpu_custom_call.1} parent=1 // pred_region
      %74 = dma.done [#allocation9], 8192
    $region29: #{tpu_custom_call.1} parent=1 // pred_fallthru
      _
    // Predicated region
    $region30: #{tpu_custom_call.1} parent=1 // pred_check
      _
    $region31: #{tpu_custom_call.1} parent=1 // pred_check_branch
      %76 = sbr.rel (0) target = $region33
    $region32: #{tpu_custom_call.1} parent=1 // pred_region
      %78 = dma.done [#allocation12], 64
    $region33: #{tpu_custom_call.1} parent=1 // pred_fallthru
      _
    %p79 = scmp.eq.s32.totalorder 0, 0
    // Predicated region
    $region34: #{tpu_custom_call.1} parent=1 // pred_check
      %p80 = pneg %p79
    $region35: #{tpu_custom_call.1} parent=1 // pred_check_branch
      %82 = sbr.rel (%p80) target = $region37
    $region36: #{tpu_custom_call.1} parent=1 // pred_region
      %83 = vst [vmem:[#allocation3] sm:$0xff] 0.0
      %84 = vst [vmem:[#allocation4] sm:$0xff] 0.0
    $region37: #{tpu_custom_call.1} parent=1 // pred_fallthru
      _
    %v85 = vld [vmem:[#allocation5] sm:$0xff]
    %v86 = vld [vmem:[#allocation5 + $0x8] sm:$0xff]
    %v87 = vld [vmem:[#allocation5 + $0x10] sm:$0xff]
    %v88 = vld [vmem:[#allocation5 + $0x18] sm:$0xff]
    %v89 = vld [vmem:[#allocation5 + $0x20] sm:$0xff]
    %v90 = vld [vmem:[#allocation5 + $0x28] sm:$0xff]
    %v91 = vld [vmem:[#allocation5 + $0x30] sm:$0xff]
    %v92 = vld [vmem:[#allocation5 + $0x38] sm:$0xff]
    %v93 = vrot.slane %v87, 4
    %vm94 = vcmask 1047556
    %v95 = vsel %vm94, %v93, %v85
    %v96 = vrot.slane %v85, 4
    %v97 = vsel %vm94, %v87, %v96
    %v99 = vunpack.c.l.s4 1983009808
    %v100 = vunpack.c.0.s8 %v99
    %v101 = vperm.slane %v95, %v100
    %v103 = vunpack.c.l.s4 1983009808
    %v104 = vunpack.c.0.s8 %v103
    %v105 = vperm.slane %v97, %v104
    %v106 = vrot.slane %v88, 4
    %v107 = vsel %vm94, %v106, %v86
    %v108 = vrot.slane %v86, 4
    %v109 = vsel %vm94, %v88, %v108
    %v111 = vunpack.c.l.s4 1983009808
    %v112 = vunpack.c.0.s8 %v111
    %v113 = vperm.slane %v107, %v112
    %v115 = vunpack.c.l.s4 1983009808
    %v116 = vunpack.c.0.s8 %v115
    %v117 = vperm.slane %v109, %v116
    %v118 = vrot.slane %v91, 4
    %v119 = vsel %vm94, %v118, %v89
    %v120 = vrot.slane %v89, 4
    %v121 = vsel %vm94, %v91, %v120
    %v123 = vunpack.c.l.s4 1983009808
    %v124 = vunpack.c.0.s8 %v123
    %v125 = vperm.slane %v119, %v124
    %v127 = vunpack.c.l.s4 1983009808
    %v128 = vunpack.c.0.s8 %v127
    %v129 = vperm.slane %v121, %v128
    %v130 = vrot.slane %v92, 4
    %v131 = vsel %vm94, %v130, %v90
    %v132 = vrot.slane %v90, 4
    %v133 = vsel %vm94, %v92, %v132
    %v135 = vunpack.c.l.s4 1983009808
    %v136 = vunpack.c.0.s8 %v135
    %v137 = vperm.slane %v131, %v136
    %v139 = vunpack.c.l.s4 1983009808
    %v140 = vunpack.c.0.s8 %v139
    %v141 = vperm.slane %v133, %v140
    %v142 = vrot.slane %v113, 4
    %v143 = vsel %vm94, %v142, %v101
    %v144 = vrot.slane %v101, 4
    %v145 = vsel %vm94, %v113, %v144
    %v147 = vunpack.c.l.s4 1934713408
    %v148 = vunpack.c.0.s8 %v147
    %v149 = vperm.slane %v143, %v148
    %v151 = vunpack.c.l.s4 1934713408
    %v152 = vunpack.c.0.s8 %v151
    %v153 = vperm.slane %v145, %v152
    %v154 = vrot.slane %v117, 4
    %v155 = vsel %vm94, %v154, %v105
    %v156 = vrot.slane %v105, 4
    %v157 = vsel %vm94, %v117, %v156
    %v159 = vunpack.c.l.s4 1934713408
    %v160 = vunpack.c.0.s8 %v159
    %v161 = vperm.slane %v155, %v160
    %v163 = vunpack.c.l.s4 1934713408
    %v164 = vunpack.c.0.s8 %v163
    %v165 = vperm.slane %v157, %v164
    %v166 = vrot.slane %v137, 4
    %v167 = vsel %vm94, %v166, %v125
    %v168 = vrot.slane %v125, 4
    %v169 = vsel %vm94, %v137, %v168
    %v171 = vunpack.c.l.s4 1934713408
    %v172 = vunpack.c.0.s8 %v171
    %v173 = vperm.slane %v167, %v172
    %v175 = vunpack.c.l.s4 1934713408
    %v176 = vunpack.c.0.s8 %v175
    %v177 = vperm.slane %v169, %v176
    %v178 = vrot.slane %v141, 4
    %v179 = vsel %vm94, %v178, %v129
    %v180 = vrot.slane %v129, 4
    %v181 = vsel %vm94, %v141, %v180
    %v183 = vunpack.c.l.s4 1934713408
    %v184 = vunpack.c.0.s8 %v183
    %v185 = vperm.slane %v179, %v184
    %v187 = vunpack.c.l.s4 1934713408
    %v188 = vunpack.c.0.s8 %v187
    %v189 = vperm.slane %v181, %v188
    %v190 = vrot.slane %v173, 4
    %v191 = vsel %vm94, %v190, %v149
    %v192 = vrot.slane %v149, 4
    %v193 = vsel %vm94, %v173, %v192
    %v194 = vrot.slane %v177, 4
    %v195 = vsel %vm94, %v194, %v153
    %v196 = vrot.slane %v153, 4
    %v197 = vsel %vm94, %v177, %v196
    %v198 = vrot.slane %v185, 4
    %v199 = vsel %vm94, %v198, %v161
    %v200 = vrot.slane %v161, 4
    %v201 = vsel %vm94, %v185, %v200
    %v202 = vrot.slane %v189, 4
    %v203 = vsel %vm94, %v202, %v165
    %v204 = vrot.slane %v165, 4
    %v205 = vsel %vm94, %v189, %v204
    %v206 = vld [vmem:[#allocation8] sm:$0xff]
    %v207 = vld [vmem:[#allocation8 + $0x8] sm:$0xff]
    %v208 = vld [vmem:[#allocation8 + $0x10] sm:$0xff]
    %v209 = vld [vmem:[#allocation8 + $0x18] sm:$0xff]
    %v210 = vld [vmem:[#allocation8 + $0x20] sm:$0xff]
    %v211 = vld [vmem:[#allocation8 + $0x28] sm:$0xff]
    %v212 = vld [vmem:[#allocation8 + $0x30] sm:$0xff]
    %v213 = vld [vmem:[#allocation8 + $0x38] sm:$0xff]
    %v214 = vld [vmem:[#allocation11] sm:$0xf]
    %v216 = vperm.slane %v214, 0
    %v217 = vperm.slane %v214, 1
    %v218 = vperm.slane %v214, 2
    %v219 = vperm.slane %v214, 3
    %vm224 = vcmask 130048
    %v226 = vsel %vm224, %v191, 0
    %v229 = vsel %vm224, %v193, 0
    %v232 = vsel %vm224, %v195, 0
    %v235 = vsel %vm224, %v197, 0
    %v238 = vsel %vm224, %v199, 0
    %v241 = vsel %vm224, %v201, 0
    %v244 = vsel %vm224, %v203, 0
    %v247 = vsel %vm224, %v205, 0
    %249 = vmatpush.msra.mxu0 0.0
    %250 = vmatpush.msra.mxu0 0.0
    %251 = vmatpush.msra.mxu0 0.0
    %252 = vmatpush.msra.mxu0 0.0
    %253 = vmatpush.msra.mxu0 0.0
    %254 = vmatpush.msra.mxu0 0.0
    %255 = vmatpush.msra.mxu0 0.0
    %256 = vmatpush.msra.mxu0 0.0
    %257 = vmatpush.msra.mxu0 0.0
    %258 = vmatpush.msra.mxu0 0.0
    %259 = vmatpush.msra.mxu0 0.0
    %260 = vmatpush.msra.mxu0 0.0
    %261 = vmatpush.msra.mxu0 0.0
    %262 = vmatpush.msra.mxu0 0.0
    %263 = vmatpush.msra.mxu0 %v210
    %264 = vmatpush.msra.mxu0 %v206
    %265 = vmatmul.f32.gmra.mxu0 %v226
    %v266 = vpop.f32.mrf.mxu0
    %v267 = vadd.f32 %v216, %v266
    %268 = vmatmul.f32.gmra.mxu0 %v229
    %v269 = vpop.f32.mrf.mxu0
    %v270 = vadd.f32 %v216, %v269
    %271 = vmatmul.f32.gmra.mxu0 %v232
    %v272 = vpop.f32.mrf.mxu0
    %v273 = vadd.f32 %v216, %v272
    %274 = vmatmul.f32.gmra.mxu0 %v235
    %v275 = vpop.f32.mrf.mxu0
    %v276 = vadd.f32 %v216, %v275
    %277 = vmatmul.f32.gmra.mxu0 %v238
    %v278 = vpop.f32.mrf.mxu0
    %v279 = vadd.f32 %v216, %v278
    %280 = vmatmul.f32.gmra.mxu0 %v241
    %v281 = vpop.f32.mrf.mxu0
    %v282 = vadd.f32 %v216, %v281
    %283 = vmatmul.f32.gmra.mxu0 %v244
    %v284 = vpop.f32.mrf.mxu0
    %v285 = vadd.f32 %v216, %v284
    %286 = vmatmul.f32.gmra.mxu0 %v247
    %v287 = vpop.f32.mrf.mxu0
    %v288 = vadd.f32 %v216, %v287
    %289 = vdwg.mxu0
    %290 = vmatpush.msra.mxu0 0.0
    %291 = vmatpush.msra.mxu0 0.0
    %292 = vmatpush.msra.mxu0 0.0
    %293 = vmatpush.msra.mxu0 0.0
    %294 = vmatpush.msra.mxu0 0.0
    %295 = vmatpush.msra.mxu0 0.0
    %296 = vmatpush.msra.mxu0 0.0
    %297 = vmatpush.msra.mxu0 0.0
    %298 = vmatpush.msra.mxu0 0.0
    %299 = vmatpush.msra.mxu0 0.0
    %300 = vmatpush.msra.mxu0 0.0
    %301 = vmatpush.msra.mxu0 0.0
    %302 = vmatpush.msra.mxu0 0.0
    %303 = vmatpush.msra.mxu0 0.0
    %304 = vmatpush.msra.mxu0 %v211
    %305 = vmatpush.msra.mxu0 %v207
    %306 = vmatmul.f32.gmra.mxu0 %v226
    %v307 = vpop.f32.mrf.mxu0
    %v308 = vadd.f32 %v217, %v307
    %309 = vmatmul.f32.gmra.mxu0 %v229
    %v310 = vpop.f32.mrf.mxu0
    %v311 = vadd.f32 %v217, %v310
    %312 = vmatmul.f32.gmra.mxu0 %v232
    %v313 = vpop.f32.mrf.mxu0
    %v314 = vadd.f32 %v217, %v313
    %315 = vmatmul.f32.gmra.mxu0 %v235
    %v316 = vpop.f32.mrf.mxu0
    %v317 = vadd.f32 %v217, %v316
    %318 = vmatmul.f32.gmra.mxu0 %v238
    %v319 = vpop.f32.mrf.mxu0
    %v320 = vadd.f32 %v217, %v319
    %321 = vmatmul.f32.gmra.mxu0 %v241
    %v322 = vpop.f32.mrf.mxu0
    %v323 = vadd.f32 %v217, %v322
    %324 = vmatmul.f32.gmra.mxu0 %v244
    %v325 = vpop.f32.mrf.mxu0
    %v326 = vadd.f32 %v217, %v325
    %327 = vmatmul.f32.gmra.mxu0 %v247
    %v328 = vpop.f32.mrf.mxu0
    %v329 = vadd.f32 %v217, %v328
    %330 = vdwg.mxu0
    %331 = vmatpush.msra.mxu0 0.0
    %332 = vmatpush.msra.mxu0 0.0
    %333 = vmatpush.msra.mxu0 0.0
    %334 = vmatpush.msra.mxu0 0.0
    %335 = vmatpush.msra.mxu0 0.0
    %336 = vmatpush.msra.mxu0 0.0
    %337 = vmatpush.msra.mxu0 0.0
    %338 = vmatpush.msra.mxu0 0.0
    %339 = vmatpush.msra.mxu0 0.0
    %340 = vmatpush.msra.mxu0 0.0
    %341 = vmatpush.msra.mxu0 0.0
    %342 = vmatpush.msra.mxu0 0.0
    %343 = vmatpush.msra.mxu0 0.0
    %344 = vmatpush.msra.mxu0 0.0
    %345 = vmatpush.msra.mxu0 %v212
    %346 = vmatpush.msra.mxu0 %v208
    %347 = vmatmul.f32.gmra.mxu0 %v226
    %v348 = vpop.f32.mrf.mxu0
    %v349 = vadd.f32 %v218, %v348
    %350 = vmatmul.f32.gmra.mxu0 %v229
    %v351 = vpop.f32.mrf.mxu0
    %v352 = vadd.f32 %v218, %v351
    %353 = vmatmul.f32.gmra.mxu0 %v232
    %v354 = vpop.f32.mrf.mxu0
    %v355 = vadd.f32 %v218, %v354
    %356 = vmatmul.f32.gmra.mxu0 %v235
    %v357 = vpop.f32.mrf.mxu0
    %v358 = vadd.f32 %v218, %v357
    %359 = vmatmul.f32.gmra.mxu0 %v238
    %v360 = vpop.f32.mrf.mxu0
    %v361 = vadd.f32 %v218, %v360
    %362 = vmatmul.f32.gmra.mxu0 %v241
    %v363 = vpop.f32.mrf.mxu0
    %v364 = vadd.f32 %v218, %v363
    %365 = vmatmul.f32.gmra.mxu0 %v244
    %v366 = vpop.f32.mrf.mxu0
    %v367 = vadd.f32 %v218, %v366
    %368 = vmatmul.f32.gmra.mxu0 %v247
    %v369 = vpop.f32.mrf.mxu0
    %v370 = vadd.f32 %v218, %v369
    %371 = vdwg.mxu0
    %372 = vmatpush.msra.mxu0 0.0
    %373 = vmatpush.msra.mxu0 0.0
    %374 = vmatpush.msra.mxu0 0.0
    %375 = vmatpush.msra.mxu0 0.0
    %376 = vmatpush.msra.mxu0 0.0
    %377 = vmatpush.msra.mxu0 0.0
    %378 = vmatpush.msra.mxu0 0.0
    %379 = vmatpush.msra.mxu0 0.0
    %380 = vmatpush.msra.mxu0 0.0
    %381 = vmatpush.msra.mxu0 0.0
    %382 = vmatpush.msra.mxu0 0.0
    %383 = vmatpush.msra.mxu0 0.0
    %384 = vmatpush.msra.mxu0 0.0
    %385 = vmatpush.msra.mxu0 0.0
    %386 = vmatpush.msra.mxu0 %v213
    %387 = vmatpush.msra.mxu0 %v209
    %388 = vmatmul.f32.gmra.mxu0 %v226
    %v389 = vpop.f32.mrf.mxu0
    %v390 = vadd.f32 %v219, %v389
    %391 = vmatmul.f32.gmra.mxu0 %v229
    %v392 = vpop.f32.mrf.mxu0
    %v393 = vadd.f32 %v219, %v392
    %394 = vmatmul.f32.gmra.mxu0 %v232
    %v395 = vpop.f32.mrf.mxu0
    %v396 = vadd.f32 %v219, %v395
    %397 = vmatmul.f32.gmra.mxu0 %v235
    %v398 = vpop.f32.mrf.mxu0
    %v399 = vadd.f32 %v219, %v398
    %400 = vmatmul.f32.gmra.mxu0 %v238
    %v401 = vpop.f32.mrf.mxu0
    %v402 = vadd.f32 %v219, %v401
    %403 = vmatmul.f32.gmra.mxu0 %v241
    %v404 = vpop.f32.mrf.mxu0
    %v405 = vadd.f32 %v219, %v404
    %406 = vmatmul.f32.gmra.mxu0 %v244
    %v407 = vpop.f32.mrf.mxu0
    %v408 = vadd.f32 %v219, %v407
    %409 = vmatmul.f32.gmra.mxu0 %v247
    %v410 = vpop.f32.mrf.mxu0
    %v411 = vadd.f32 %v219, %v410
    %412 = vdwg.mxu0
    %413 = vst [vmem:[#allocation2] sm:$0xff] %v267
    %414 = vst [vmem:[#allocation2 + $0x8] sm:$0xff] %v308
    %415 = vst [vmem:[#allocation2 + $0x10] sm:$0xff] %v349
    %416 = vst [vmem:[#allocation2 + $0x18] sm:$0xff] %v390
    %417 = vst [vmem:[#allocation2 + $0x20] sm:$0xff] %v270
    %418 = vst [vmem:[#allocation2 + $0x28] sm:$0xff] %v311
    %419 = vst [vmem:[#allocation2 + $0x30] sm:$0xff] %v352
    %420 = vst [vmem:[#allocation2 + $0x38] sm:$0xff] %v393
    %421 = vst [vmem:[#allocation2 + $0x40] sm:$0xff] %v273
    %422 = vst [vmem:[#allocation2 + $0x48] sm:$0xff] %v314
    %423 = vst [vmem:[#allocation2 + $0x50] sm:$0xff] %v355
    %424 = vst [vmem:[#allocation2 + $0x58] sm:$0xff] %v396
    %425 = vst [vmem:[#allocation2 + $0x60] sm:$0xff] %v276
    %426 = vst [vmem:[#allocation2 + $0x68] sm:$0xff] %v317
    %427 = vst [vmem:[#allocation2 + $0x70] sm:$0xff] %v358
    %428 = vst [vmem:[#allocation2 + $0x78] sm:$0xff] %v399
    %429 = vst [vmem:[#allocation2 + $0x80] sm:$0xff] %v279
    %430 = vst [vmem:[#allocation2 + $0x88] sm:$0xff] %v320
    %431 = vst [vmem:[#allocation2 + $0x90] sm:$0xff] %v361
    %432 = vst [vmem:[#allocation2 + $0x98] sm:$0xff] %v402
    %433 = vst [vmem:[#allocation2 + $0xa0] sm:$0xff] %v282
    %434 = vst [vmem:[#allocation2 + $0xa8] sm:$0xff] %v323
    %435 = vst [vmem:[#allocation2 + $0xb0] sm:$0xff] %v364
    %436 = vst [vmem:[#allocation2 + $0xb8] sm:$0xff] %v405
    %437 = vst [vmem:[#allocation2 + $0xc0] sm:$0xff] %v285
    %438 = vst [vmem:[#allocation2 + $0xc8] sm:$0xff] %v326
    %439 = vst [vmem:[#allocation2 + $0xd0] sm:$0xff] %v367
    %440 = vst [vmem:[#allocation2 + $0xd8] sm:$0xff] %v408
    %441 = vst [vmem:[#allocation2 + $0xe0] sm:$0xff] %v288
    %442 = vst [vmem:[#allocation2 + $0xe8] sm:$0xff] %v329
    %443 = vst [vmem:[#allocation2 + $0xf0] sm:$0xff] %v370
    %444 = vst [vmem:[#allocation2 + $0xf8] sm:$0xff] %v411
    %v445 = vld [vmem:[#allocation10] sm:$0xff]
    %v446 = vld [vmem:[#allocation10 + $0x8] sm:$0xff]
    %v447 = vld [vmem:[#allocation10 + $0x10] sm:$0xff]
    %v448 = vld [vmem:[#allocation10 + $0x18] sm:$0xff]
    %v449 = vld [vmem:[#allocation10 + $0x20] sm:$0xff]
    %v450 = vld [vmem:[#allocation10 + $0x28] sm:$0xff]
    %v451 = vld [vmem:[#allocation10 + $0x30] sm:$0xff]
    %v452 = vld [vmem:[#allocation10 + $0x38] sm:$0xff]
    %v453 = vld [vmem:[#allocation10 + $0x40] sm:$0xff]
    %v454 = vld [vmem:[#allocation10 + $0x48] sm:$0xff]
    %v455 = vld [vmem:[#allocation10 + $0x50] sm:$0xff]
    %v456 = vld [vmem:[#allocation10 + $0x58] sm:$0xff]
    %v457 = vld [vmem:[#allocation10 + $0x60] sm:$0xff]
    %v458 = vld [vmem:[#allocation10 + $0x68] sm:$0xff]
    %v459 = vld [vmem:[#allocation10 + $0x70] sm:$0xff]
    %v460 = vld [vmem:[#allocation10 + $0x78] sm:$0xff]
    %v461 = vld [vmem:[#allocation10 + $0x80] sm:$0xff]
    %v462 = vld [vmem:[#allocation10 + $0x88] sm:$0xff]
    %v463 = vld [vmem:[#allocation10 + $0x90] sm:$0xff]
    %v464 = vld [vmem:[#allocation10 + $0x98] sm:$0xff]
    %v465 = vld [vmem:[#allocation10 + $0xa0] sm:$0xff]
    %v466 = vld [vmem:[#allocation10 + $0xa8] sm:$0xff]
    %v467 = vld [vmem:[#allocation10 + $0xb0] sm:$0xff]
    %v468 = vld [vmem:[#allocation10 + $0xb8] sm:$0xff]
    %v469 = vld [vmem:[#allocation10 + $0xc0] sm:$0xff]
    %v470 = vld [vmem:[#allocation10 + $0xc8] sm:$0xff]
    %v471 = vld [vmem:[#allocation10 + $0xd0] sm:$0xff]
    %v472 = vld [vmem:[#allocation10 + $0xd8] sm:$0xff]
    %v473 = vld [vmem:[#allocation10 + $0xe0] sm:$0xff]
    %v474 = vld [vmem:[#allocation10 + $0xe8] sm:$0xff]
    %v475 = vld [vmem:[#allocation10 + $0xf0] sm:$0xff]
    %v476 = vld [vmem:[#allocation10 + $0xf8] sm:$0xff]
    %v477 = vld [vmem:[#allocation10 + $0x100] sm:$0xff]
    %v478 = vld [vmem:[#allocation10 + $0x108] sm:$0xff]
    %v479 = vld [vmem:[#allocation10 + $0x110] sm:$0xff]
    %v480 = vld [vmem:[#allocation10 + $0x118] sm:$0xff]
    %v481 = vld [vmem:[#allocation10 + $0x120] sm:$0xff]
    %v482 = vld [vmem:[#allocation10 + $0x128] sm:$0xff]
    %v483 = vld [vmem:[#allocation10 + $0x130] sm:$0xff]
    %v484 = vld [vmem:[#allocation10 + $0x138] sm:$0xff]
    %v485 = vld [vmem:[#allocation10 + $0x140] sm:$0xff]
    %v486 = vld [vmem:[#allocation10 + $0x148] sm:$0xff]
    %v487 = vld [vmem:[#allocation10 + $0x150] sm:$0xff]
    %v488 = vld [vmem:[#allocation10 + $0x158] sm:$0xff]
    %v489 = vld [vmem:[#allocation10 + $0x160] sm:$0xff]
    %v490 = vld [vmem:[#allocation10 + $0x168] sm:$0xff]
    %v491 = vld [vmem:[#allocation10 + $0x170] sm:$0xff]
    %v492 = vld [vmem:[#allocation10 + $0x178] sm:$0xff]
    %v493 = vld [vmem:[#allocation10 + $0x180] sm:$0xff]
    %v494 = vld [vmem:[#allocation10 + $0x188] sm:$0xff]
    %v495 = vld [vmem:[#allocation10 + $0x190] sm:$0xff]
    %v496 = vld [vmem:[#allocation10 + $0x198] sm:$0xff]
    %v497 = vld [vmem:[#allocation10 + $0x1a0] sm:$0xff]
    %v498 = vld [vmem:[#allocation10 + $0x1a8] sm:$0xff]
    %v499 = vld [vmem:[#allocation10 + $0x1b0] sm:$0xff]
    %v500 = vld [vmem:[#allocation10 + $0x1b8] sm:$0xff]
    %v501 = vld [vmem:[#allocation10 + $0x1c0] sm:$0xff]
    %v502 = vld [vmem:[#allocation10 + $0x1c8] sm:$0xff]
    %v503 = vld [vmem:[#allocation10 + $0x1d0] sm:$0xff]
    %v504 = vld [vmem:[#allocation10 + $0x1d8] sm:$0xff]
    %v505 = vld [vmem:[#allocation10 + $0x1e0] sm:$0xff]
    %v506 = vld [vmem:[#allocation10 + $0x1e8] sm:$0xff]
    %v507 = vld [vmem:[#allocation10 + $0x1f0] sm:$0xff]
    %v508 = vld [vmem:[#allocation10 + $0x1f8] sm:$0xff]
    %v509 = vld [vmem:[#allocation3] sm:$0xff]
    %v510 = vld [vmem:[#allocation4] sm:$0xff]
    %v511 = vld [vmem:[#allocation2] sm:$0xff]
    %v512 = vld [vmem:[#allocation2 + $0x8] sm:$0xff]
    %v513 = vld [vmem:[#allocation2 + $0x10] sm:$0xff]
    %v514 = vld [vmem:[#allocation2 + $0x18] sm:$0xff]
    %515 = vmatpush.msra.mxu0 %v505
    %516 = vmatpush.msra.mxu0 %v501
    %517 = vmatpush.msra.mxu0 %v497
    %518 = vmatpush.msra.mxu0 %v493
    %519 = vmatpush.msra.mxu0 %v489
    %520 = vmatpush.msra.mxu0 %v485
    %521 = vmatpush.msra.mxu0 %v481
    %522 = vmatpush.msra.mxu0 %v477
    %523 = vmatpush.msra.mxu0 %v473
    %524 = vmatpush.msra.mxu0 %v469
    %525 = vmatpush.msra.mxu0 %v465
    %526 = vmatpush.msra.mxu0 %v461
    %527 = vmatpush.msra.mxu0 %v457
    %528 = vmatpush.msra.mxu0 %v453
    %529 = vmatpush.msra.mxu0 %v449
    %530 = vmatpush.msra.mxu0 %v445
    %531 = vmatmul.f32.gmra.mxu0 %v509
    %v532 = vpop.f32.mrf.mxu0
    %v533 = vadd.f32 0.0, %v532
    %534 = vdwg.mxu0
    %535 = vmatpush.msra.mxu0 %v506
    %536 = vmatpush.msra.mxu0 %v502
    %537 = vmatpush.msra.mxu0 %v498
    %538 = vmatpush.msra.mxu0 %v494
    %539 = vmatpush.msra.mxu0 %v490
    %540 = vmatpush.msra.mxu0 %v486
    %541 = vmatpush.msra.mxu0 %v482
    %542 = vmatpush.msra.mxu0 %v478
    %543 = vmatpush.msra.mxu0 %v474
    %544 = vmatpush.msra.mxu0 %v470
    %545 = vmatpush.msra.mxu0 %v466
    %546 = vmatpush.msra.mxu0 %v462
    %547 = vmatpush.msra.mxu0 %v458
    %548 = vmatpush.msra.mxu0 %v454
    %549 = vmatpush.msra.mxu0 %v450
    %550 = vmatpush.msra.mxu0 %v446
    %551 = vmatmul.f32.gmra.mxu0 %v509
    %v552 = vpop.f32.mrf.mxu0
    %v553 = vadd.f32 0.0, %v552
    %554 = vdwg.mxu0
    %555 = vmatpush.msra.mxu0 %v507
    %556 = vmatpush.msra.mxu0 %v503
    %557 = vmatpush.msra.mxu0 %v499
    %558 = vmatpush.msra.mxu0 %v495
    %559 = vmatpush.msra.mxu0 %v491
    %560 = vmatpush.msra.mxu0 %v487
    %561 = vmatpush.msra.mxu0 %v483
    %562 = vmatpush.msra.mxu0 %v479
    %563 = vmatpush.msra.mxu0 %v475
    %564 = vmatpush.msra.mxu0 %v471
    %565 = vmatpush.msra.mxu0 %v467
    %566 = vmatpush.msra.mxu0 %v463
    %567 = vmatpush.msra.mxu0 %v459
    %568 = vmatpush.msra.mxu0 %v455
    %569 = vmatpush.msra.mxu0 %v451
    %570 = vmatpush.msra.mxu0 %v447
    %571 = vmatmul.f32.gmra.mxu0 %v509
    %v572 = vpop.f32.mrf.mxu0
    %v573 = vadd.f32 0.0, %v572
    %574 = vdwg.mxu0
    %575 = vmatpush.msra.mxu0 %v508
    %576 = vmatpush.msra.mxu0 %v504
    %577 = vmatpush.msra.mxu0 %v500
    %578 = vmatpush.msra.mxu0 %v496
    %579 = vmatpush.msra.mxu0 %v492
    %580 = vmatpush.msra.mxu0 %v488
    %581 = vmatpush.msra.mxu0 %v484
    %582 = vmatpush.msra.mxu0 %v480
    %583 = vmatpush.msra.mxu0 %v476
    %584 = vmatpush.msra.mxu0 %v472
    %585 = vmatpush.msra.mxu0 %v468
    %586 = vmatpush.msra.mxu0 %v464
    %587 = vmatpush.msra.mxu0 %v460
    %588 = vmatpush.msra.mxu0 %v456
    %589 = vmatpush.msra.mxu0 %v452
    %590 = vmatpush.msra.mxu0 %v448
    %591 = vmatmul.f32.gmra.mxu0 %v509
    %v592 = vpop.f32.mrf.mxu0
    %v593 = vadd.f32 0.0, %v592
    %594 = vdwg.mxu0
    %v595 = vadd.f32 %v511, %v533
    %v596 = vadd.f32 %v512, %v553
    %v597 = vadd.f32 %v513, %v573
    %v598 = vadd.f32 %v514, %v593
    %v599 = vxor.u32 %v595, 2147483648
    %v600 = vmul.f32 %v599, 1.442695
    %v601 = vpow.pop %v600
    %v602 = vadd.f32 %v601, 1.0
    %v603 = vrcp.pop %v602
    %v604 = vmul.f32 %v602, %v603
    %v605 = vsub.f32 1.0, %v604
    %v606 = vmul.f32 %v603, %v605
    %v607 = vadd.f32 %v603, %v606
    %vm608 = vweird.f32 %v602
    %vm609 = vweird.f32 %v603
    %vm610 = vmor %vm608, %vm609
    %v611 = vsel %vm610, %v603, %v607
    %v612 = vand.u32 2147483647, %v602
    %vm613 = vcmp.eq.f32.partialorder %v612, 8.507059e+37
    %v614 = vand.u32 %v602, 2147483648
    %v615 = vor.u32 1.1754944e-38, %v614
    %v616 = vsel %vm613, %v615, %v611
    %v617 = vmul.f32 1.0, %v616
    %v618 = vxor.u32 %v596, 2147483648
    %v619 = vmul.f32 %v618, 1.442695
    %v620 = vpow.pop %v619
    %v621 = vadd.f32 %v620, 1.0
    %v622 = vrcp.pop %v621
    %v623 = vmul.f32 %v621, %v622
    %v624 = vsub.f32 1.0, %v623
    %v625 = vmul.f32 %v622, %v624
    %v626 = vadd.f32 %v622, %v625
    %vm627 = vweird.f32 %v621
    %vm628 = vweird.f32 %v622
    %vm629 = vmor %vm627, %vm628
    %v630 = vsel %vm629, %v622, %v626
    %v631 = vand.u32 2147483647, %v621
    %vm632 = vcmp.eq.f32.partialorder %v631, 8.507059e+37
    %v633 = vand.u32 %v621, 2147483648
    %v634 = vor.u32 1.1754944e-38, %v633
    %v635 = vsel %vm632, %v634, %v630
    %v636 = vmul.f32 1.0, %v635
    %v637 = vtanh.pop %v597
    %v638 = vxor.u32 %v598, 2147483648
    %v639 = vmul.f32 %v638, 1.442695
    %v640 = vpow.pop %v639
    %v641 = vadd.f32 %v640, 1.0
    %v642 = vrcp.pop %v641
    %v643 = vmul.f32 %v641, %v642
    %v644 = vsub.f32 1.0, %v643
    %v645 = vmul.f32 %v642, %v644
    %v646 = vadd.f32 %v642, %v645
    %vm647 = vweird.f32 %v641
    %vm648 = vweird.f32 %v642
    %vm649 = vmor %vm647, %vm648
    %v650 = vsel %vm649, %v642, %v646
    %v651 = vand.u32 2147483647, %v641
    %vm652 = vcmp.eq.f32.partialorder %v651, 8.507059e+37
    %v653 = vand.u32 %v641, 2147483648
    %v654 = vor.u32 1.1754944e-38, %v653
    %v655 = vsel %vm652, %v654, %v650
    %v656 = vmul.f32 1.0, %v655
    %v657 = vmul.f32 %v636, %v510
    %v658 = vmul.f32 %v617, %v637
    %v659 = vadd.f32 %v657, %v658
    %v660 = vtanh.pop %v659
    %v661 = vmul.f32 %v656, %v660
    %s662 = scalar_lea.vmem [#allocation2], 32
    %v663 = vld [vmem:[%s662] sm:$0xff]
    %v664 = vld [vmem:[%s662 + $0x8] sm:$0xff]
    %v665 = vld [vmem:[%s662 + $0x10] sm:$0xff]
    %v666 = vld [vmem:[%s662 + $0x18] sm:$0xff]
    %667 = vmatpush.msra.mxu0 %v505
    %668 = vmatpush.msra.mxu0 %v501
    %669 = vmatpush.msra.mxu0 %v497
    %670 = vmatpush.msra.mxu0 %v493
    %671 = vmatpush.msra.mxu0 %v489
    %672 = vmatpush.msra.mxu0 %v485
    %673 = vmatpush.msra.mxu0 %v481
    %674 = vmatpush.msra.mxu0 %v477
    %675 = vmatpush.msra.mxu0 %v473
    %676 = vmatpush.msra.mxu0 %v469
    %677 = vmatpush.msra.mxu0 %v465
    %678 = vmatpush.msra.mxu0 %v461
    %679 = vmatpush.msra.mxu0 %v457
    %680 = vmatpush.msra.mxu0 %v453
    %681 = vmatpush.msra.mxu0 %v449
    %682 = vmatpush.msra.mxu0 %v445
    %683 = vmatmul.f32.gmra.mxu0 %v661
    %v684 = vpop.f32.mrf.mxu0
    %v685 = vadd.f32 0.0, %v684
    %686 = vdwg.mxu0
    %687 = vmatpush.msra.mxu0 %v506
    %688 = vmatpush.msra.mxu0 %v502
    %689 = vmatpush.msra.mxu0 %v498
    %690 = vmatpush.msra.mxu0 %v494
    %691 = vmatpush.msra.mxu0 %v490
    %692 = vmatpush.msra.mxu0 %v486
    %693 = vmatpush.msra.mxu0 %v482
    %694 = vmatpush.msra.mxu0 %v478
    %695 = vmatpush.msra.mxu0 %v474
    %696 = vmatpush.msra.mxu0 %v470
    %697 = vmatpush.msra.mxu0 %v466
    %698 = vmatpush.msra.mxu0 %v462
    %699 = vmatpush.msra.mxu0 %v458
    %700 = vmatpush.msra.mxu0 %v454
    %701 = vmatpush.msra.mxu0 %v450
    %702 = vmatpush.msra.mxu0 %v446
    %703 = vmatmul.f32.gmra.mxu0 %v661
    %v704 = vpop.f32.mrf.mxu0
    %v705 = vadd.f32 0.0, %v704
    %706 = vdwg.mxu0
    %707 = vmatpush.msra.mxu0 %v507
    %708 = vmatpush.msra.mxu0 %v503
    %709 = vmatpush.msra.mxu0 %v499
    %710 = vmatpush.msra.mxu0 %v495
    %711 = vmatpush.msra.mxu0 %v491
    %712 = vmatpush.msra.mxu0 %v487
    %713 = vmatpush.msra.mxu0 %v483
    %714 = vmatpush.msra.mxu0 %v479
    %715 = vmatpush.msra.mxu0 %v475
    %716 = vmatpush.msra.mxu0 %v471
    %717 = vmatpush.msra.mxu0 %v467
    %718 = vmatpush.msra.mxu0 %v463
    %719 = vmatpush.msra.mxu0 %v459
    %720 = vmatpush.msra.mxu0 %v455
    %721 = vmatpush.msra.mxu0 %v451
    %722 = vmatpush.msra.mxu0 %v447
    %723 = vmatmul.f32.gmra.mxu0 %v661
    %v724 = vpop.f32.mrf.mxu0
    %v725 = vadd.f32 0.0, %v724
    %726 = vdwg.mxu0
    %727 = vmatpush.msra.mxu0 %v508
    %728 = vmatpush.msra.mxu0 %v504
    %729 = vmatpush.msra.mxu0 %v500
    %730 = vmatpush.msra.mxu0 %v496
    %731 = vmatpush.msra.mxu0 %v492
    %732 = vmatpush.msra.mxu0 %v488
    %733 = vmatpush.msra.mxu0 %v484
    %734 = vmatpush.msra.mxu0 %v480
    %735 = vmatpush.msra.mxu0 %v476
    %736 = vmatpush.msra.mxu0 %v472
    %737 = vmatpush.msra.mxu0 %v468
    %738 = vmatpush.msra.mxu0 %v464
    %739 = vmatpush.msra.mxu0 %v460
    %740 = vmatpush.msra.mxu0 %v456
    %741 = vmatpush.msra.mxu0 %v452
    %742 = vmatpush.msra.mxu0 %v448
    %743 = vmatmul.f32.gmra.mxu0 %v661
    %v744 = vpop.f32.mrf.mxu0
    %v745 = vadd.f32 0.0, %v744
    %746 = vdwg.mxu0
    %v747 = vadd.f32 %v663, %v685
    %v748 = vadd.f32 %v664, %v705
    %v749 = vadd.f32 %v665, %v725
    %v750 = vadd.f32 %v666, %v745
    %v751 = vxor.u32 %v747, 2147483648
    %v752 = vmul.f32 %v751, 1.442695
    %v753 = vpow.pop %v752
    %v754 = vadd.f32 %v753, 1.0
    %v755 = vrcp.pop %v754
    %v756 = vmul.f32 %v754, %v755
    %v757 = vsub.f32 1.0, %v756
    %v758 = vmul.f32 %v755, %v757
    %v759 = vadd.f32 %v755, %v758
    %vm760 = vweird.f32 %v754
    %vm761 = vweird.f32 %v755
    %vm762 = vmor %vm760, %vm761
    %v763 = vsel %vm762, %v755, %v759
    %v764 = vand.u32 2147483647, %v754
    %vm765 = vcmp.eq.f32.partialorder %v764, 8.507059e+37
    %v766 = vand.u32 %v754, 2147483648
    %v767 = vor.u32 1.1754944e-38, %v766
    %v768 = vsel %vm765, %v767, %v763
    %v769 = vmul.f32 1.0, %v768
    %v770 = vxor.u32 %v748, 2147483648
    %v771 = vmul.f32 %v770, 1.442695
    %v772 = vpow.pop %v771
    %v773 = vadd.f32 %v772, 1.0
    %v774 = vrcp.pop %v773
    %v775 = vmul.f32 %v773, %v774
    %v776 = vsub.f32 1.0, %v775
    %v777 = vmul.f32 %v774, %v776
    %v778 = vadd.f32 %v774, %v777
    %vm779 = vweird.f32 %v773
    %vm780 = vweird.f32 %v774
    %vm781 = vmor %vm779, %vm780
    %v782 = vsel %vm781, %v774, %v778
    %v783 = vand.u32 2147483647, %v773
    %vm784 = vcmp.eq.f32.partialorder %v783, 8.507059e+37
    %v785 = vand.u32 %v773, 2147483648
    %v786 = vor.u32 1.1754944e-38, %v785
    %v787 = vsel %vm784, %v786, %v782
    %v788 = vmul.f32 1.0, %v787
    %v789 = vtanh.pop %v749
    %v790 = vxor.u32 %v750, 2147483648
    %v791 = vmul.f32 %v790, 1.442695
    %v792 = vpow.pop %v791
    %v793 = vadd.f32 %v792, 1.0
    %v794 = vrcp.pop %v793
    %v795 = vmul.f32 %v793, %v794
    %v796 = vsub.f32 1.0, %v795
    %v797 = vmul.f32 %v794, %v796
    %v798 = vadd.f32 %v794, %v797
    %vm799 = vweird.f32 %v793
    %vm800 = vweird.f32 %v794
    %vm801 = vmor %vm799, %vm800
    %v802 = vsel %vm801, %v794, %v798
    %v803 = vand.u32 2147483647, %v793
    %vm804 = vcmp.eq.f32.partialorder %v803, 8.507059e+37
    %v805 = vand.u32 %v793, 2147483648
    %v806 = vor.u32 1.1754944e-38, %v805
    %v807 = vsel %vm804, %v806, %v802
    %v808 = vmul.f32 1.0, %v807
    %v809 = vmul.f32 %v788, %v659
    %v810 = vmul.f32 %v769, %v789
    %v811 = vadd.f32 %v809, %v810
    %v812 = vtanh.pop %v811
    %v813 = vmul.f32 %v808, %v812
    %s814 = scalar_lea.vmem [#allocation2], 64
    %v815 = vld [vmem:[%s814] sm:$0xff]
    %v816 = vld [vmem:[%s814 + $0x8] sm:$0xff]
    %v817 = vld [vmem:[%s814 + $0x10] sm:$0xff]
    %v818 = vld [vmem:[%s814 + $0x18] sm:$0xff]
    %819 = vmatpush.msra.mxu0 %v505
    %820 = vmatpush.msra.mxu0 %v501
    %821 = vmatpush.msra.mxu0 %v497
    %822 = vmatpush.msra.mxu0 %v493
    %823 = vmatpush.msra.mxu0 %v489
    %824 = vmatpush.msra.mxu0 %v485
    %825 = vmatpush.msra.mxu0 %v481
    %826 = vmatpush.msra.mxu0 %v477
    %827 = vmatpush.msra.mxu0 %v473
    %828 = vmatpush.msra.mxu0 %v469
    %829 = vmatpush.msra.mxu0 %v465
    %830 = vmatpush.msra.mxu0 %v461
    %831 = vmatpush.msra.mxu0 %v457
    %832 = vmatpush.msra.mxu0 %v453
    %833 = vmatpush.msra.mxu0 %v449
    %834 = vmatpush.msra.mxu0 %v445
    %835 = vmatmul.f32.gmra.mxu0 %v813
    %v836 = vpop.f32.mrf.mxu0
    %v837 = vadd.f32 0.0, %v836
    %838 = vdwg.mxu0
    %839 = vmatpush.msra.mxu0 %v506
    %840 = vmatpush.msra.mxu0 %v502
    %841 = vmatpush.msra.mxu0 %v498
    %842 = vmatpush.msra.mxu0 %v494
    %843 = vmatpush.msra.mxu0 %v490
    %844 = vmatpush.msra.mxu0 %v486
    %845 = vmatpush.msra.mxu0 %v482
    %846 = vmatpush.msra.mxu0 %v478
    %847 = vmatpush.msra.mxu0 %v474
    %848 = vmatpush.msra.mxu0 %v470
    %849 = vmatpush.msra.mxu0 %v466
    %850 = vmatpush.msra.mxu0 %v462
    %851 = vmatpush.msra.mxu0 %v458
    %852 = vmatpush.msra.mxu0 %v454
    %853 = vmatpush.msra.mxu0 %v450
    %854 = vmatpush.msra.mxu0 %v446
    %855 = vmatmul.f32.gmra.mxu0 %v813
    %v856 = vpop.f32.mrf.mxu0
    %v857 = vadd.f32 0.0, %v856
    %858 = vdwg.mxu0
    %859 = vmatpush.msra.mxu0 %v507
    %860 = vmatpush.msra.mxu0 %v503
    %861 = vmatpush.msra.mxu0 %v499
    %862 = vmatpush.msra.mxu0 %v495
    %863 = vmatpush.msra.mxu0 %v491
    %864 = vmatpush.msra.mxu0 %v487
    %865 = vmatpush.msra.mxu0 %v483
    %866 = vmatpush.msra.mxu0 %v479
    %867 = vmatpush.msra.mxu0 %v475
    %868 = vmatpush.msra.mxu0 %v471
    %869 = vmatpush.msra.mxu0 %v467
    %870 = vmatpush.msra.mxu0 %v463
    %871 = vmatpush.msra.mxu0 %v459
    %872 = vmatpush.msra.mxu0 %v455
    %873 = vmatpush.msra.mxu0 %v451
    %874 = vmatpush.msra.mxu0 %v447
    %875 = vmatmul.f32.gmra.mxu0 %v813
    %v876 = vpop.f32.mrf.mxu0
    %v877 = vadd.f32 0.0, %v876
    %878 = vdwg.mxu0
    %879 = vmatpush.msra.mxu0 %v508
    %880 = vmatpush.msra.mxu0 %v504
    %881 = vmatpush.msra.mxu0 %v500
    %882 = vmatpush.msra.mxu0 %v496
    %883 = vmatpush.msra.mxu0 %v492
    %884 = vmatpush.msra.mxu0 %v488
    %885 = vmatpush.msra.mxu0 %v484
    %886 = vmatpush.msra.mxu0 %v480
    %887 = vmatpush.msra.mxu0 %v476
    %888 = vmatpush.msra.mxu0 %v472
    %889 = vmatpush.msra.mxu0 %v468
    %890 = vmatpush.msra.mxu0 %v464
    %891 = vmatpush.msra.mxu0 %v460
    %892 = vmatpush.msra.mxu0 %v456
    %893 = vmatpush.msra.mxu0 %v452
    %894 = vmatpush.msra.mxu0 %v448
    %895 = vmatmul.f32.gmra.mxu0 %v813
    %v896 = vpop.f32.mrf.mxu0
    %v897 = vadd.f32 0.0, %v896
    %898 = vdwg.mxu0
    %v899 = vadd.f32 %v815, %v837
    %v900 = vadd.f32 %v816, %v857
    %v901 = vadd.f32 %v817, %v877
    %v902 = vadd.f32 %v818, %v897
    %v903 = vxor.u32 %v899, 2147483648
    %v904 = vmul.f32 %v903, 1.442695
    %v905 = vpow.pop %v904
    %v906 = vadd.f32 %v905, 1.0
    %v907 = vrcp.pop %v906
    %v908 = vmul.f32 %v906, %v907
    %v909 = vsub.f32 1.0, %v908
    %v910 = vmul.f32 %v907, %v909
    %v911 = vadd.f32 %v907, %v910
    %vm912 = vweird.f32 %v906
    %vm913 = vweird.f32 %v907
    %vm914 = vmor %vm912, %vm913
    %v915 = vsel %vm914, %v907, %v911
    %v916 = vand.u32 2147483647, %v906
    %vm917 = vcmp.eq.f32.partialorder %v916, 8.507059e+37
    %v918 = vand.u32 %v906, 2147483648
    %v919 = vor.u32 1.1754944e-38, %v918
    %v920 = vsel %vm917, %v919, %v915
    %v921 = vmul.f32 1.0, %v920
    %v922 = vxor.u32 %v900, 2147483648
    %v923 = vmul.f32 %v922, 1.442695
    %v924 = vpow.pop %v923
    %v925 = vadd.f32 %v924, 1.0
    %v926 = vrcp.pop %v925
    %v927 = vmul.f32 %v925, %v926
    %v928 = vsub.f32 1.0, %v927
    %v929 = vmul.f32 %v926, %v928
    %v930 = vadd.f32 %v926, %v929
    %vm931 = vweird.f32 %v925
    %vm932 = vweird.f32 %v926
    %vm933 = vmor %vm931, %vm932
    %v934 = vsel %vm933, %v926, %v930
    %v935 = vand.u32 2147483647, %v925
    %vm936 = vcmp.eq.f32.partialorder %v935, 8.507059e+37
    %v937 = vand.u32 %v925, 2147483648
    %v938 = vor.u32 1.1754944e-38, %v937
    %v939 = vsel %vm936, %v938, %v934
    %v940 = vmul.f32 1.0, %v939
    %v941 = vtanh.pop %v901
    %v942 = vxor.u32 %v902, 2147483648
    %v943 = vmul.f32 %v942, 1.442695
    %v944 = vpow.pop %v943
    %v945 = vadd.f32 %v944, 1.0
    %v946 = vrcp.pop %v945
    %v947 = vmul.f32 %v945, %v946
    %v948 = vsub.f32 1.0, %v947
    %v949 = vmul.f32 %v946, %v948
    %v950 = vadd.f32 %v946, %v949
    %vm951 = vweird.f32 %v945
    %vm952 = vweird.f32 %v946
    %vm953 = vmor %vm951, %vm952
    %v954 = vsel %vm953, %v946, %v950
    %v955 = vand.u32 2147483647, %v945
    %vm956 = vcmp.eq.f32.partialorder %v955, 8.507059e+37
    %v957 = vand.u32 %v945, 2147483648
    %v958 = vor.u32 1.1754944e-38, %v957
    %v959 = vsel %vm956, %v958, %v954
    %v960 = vmul.f32 1.0, %v959
    %v961 = vmul.f32 %v940, %v811
    %v962 = vmul.f32 %v921, %v941
    %v963 = vadd.f32 %v961, %v962
    %v964 = vtanh.pop %v963
    %v965 = vmul.f32 %v960, %v964
    %s966 = scalar_lea.vmem [#allocation2], 96
    %v967 = vld [vmem:[%s966] sm:$0xff]
    %v968 = vld [vmem:[%s966 + $0x8] sm:$0xff]
    %v969 = vld [vmem:[%s966 + $0x10] sm:$0xff]
    %v970 = vld [vmem:[%s966 + $0x18] sm:$0xff]
    %971 = vmatpush.msra.mxu0 %v505
    %972 = vmatpush.msra.mxu0 %v501
    %973 = vmatpush.msra.mxu0 %v497
    %974 = vmatpush.msra.mxu0 %v493
    %975 = vmatpush.msra.mxu0 %v489
    %976 = vmatpush.msra.mxu0 %v485
    %977 = vmatpush.msra.mxu0 %v481
    %978 = vmatpush.msra.mxu0 %v477
    %979 = vmatpush.msra.mxu0 %v473
    %980 = vmatpush.msra.mxu0 %v469
    %981 = vmatpush.msra.mxu0 %v465
    %982 = vmatpush.msra.mxu0 %v461
    %983 = vmatpush.msra.mxu0 %v457
    %984 = vmatpush.msra.mxu0 %v453
    %985 = vmatpush.msra.mxu0 %v449
    %986 = vmatpush.msra.mxu0 %v445
    %987 = vmatmul.f32.gmra.mxu0 %v965
    %v988 = vpop.f32.mrf.mxu0
    %v989 = vadd.f32 0.0, %v988
    %990 = vdwg.mxu0
    %991 = vmatpush.msra.mxu0 %v506
    %992 = vmatpush.msra.mxu0 %v502
    %993 = vmatpush.msra.mxu0 %v498
    %994 = vmatpush.msra.mxu0 %v494
    %995 = vmatpush.msra.mxu0 %v490
    %996 = vmatpush.msra.mxu0 %v486
    %997 = vmatpush.msra.mxu0 %v482
    %998 = vmatpush.msra.mxu0 %v478
    %999 = vmatpush.msra.mxu0 %v474
    %1000 = vmatpush.msra.mxu0 %v470
    %1001 = vmatpush.msra.mxu0 %v466
    %1002 = vmatpush.msra.mxu0 %v462
    %1003 = vmatpush.msra.mxu0 %v458
    %1004 = vmatpush.msra.mxu0 %v454
    %1005 = vmatpush.msra.mxu0 %v450
    %1006 = vmatpush.msra.mxu0 %v446
    %1007 = vmatmul.f32.gmra.mxu0 %v965
    %v1008 = vpop.f32.mrf.mxu0
    %v1009 = vadd.f32 0.0, %v1008
    %1010 = vdwg.mxu0
    %1011 = vmatpush.msra.mxu0 %v507
    %1012 = vmatpush.msra.mxu0 %v503
    %1013 = vmatpush.msra.mxu0 %v499
    %1014 = vmatpush.msra.mxu0 %v495
    %1015 = vmatpush.msra.mxu0 %v491
    %1016 = vmatpush.msra.mxu0 %v487
    %1017 = vmatpush.msra.mxu0 %v483
    %1018 = vmatpush.msra.mxu0 %v479
    %1019 = vmatpush.msra.mxu0 %v475
    %1020 = vmatpush.msra.mxu0 %v471
    %1021 = vmatpush.msra.mxu0 %v467
    %1022 = vmatpush.msra.mxu0 %v463
    %1023 = vmatpush.msra.mxu0 %v459
    %1024 = vmatpush.msra.mxu0 %v455
    %1025 = vmatpush.msra.mxu0 %v451
    %1026 = vmatpush.msra.mxu0 %v447
    %1027 = vmatmul.f32.gmra.mxu0 %v965
    %v1028 = vpop.f32.mrf.mxu0
    %v1029 = vadd.f32 0.0, %v1028
    %1030 = vdwg.mxu0
    %1031 = vmatpush.msra.mxu0 %v508
    %1032 = vmatpush.msra.mxu0 %v504
    %1033 = vmatpush.msra.mxu0 %v500
    %1034 = vmatpush.msra.mxu0 %v496
    %1035 = vmatpush.msra.mxu0 %v492
    %1036 = vmatpush.msra.mxu0 %v488
    %1037 = vmatpush.msra.mxu0 %v484
    %1038 = vmatpush.msra.mxu0 %v480
    %1039 = vmatpush.msra.mxu0 %v476
    %1040 = vmatpush.msra.mxu0 %v472
    %1041 = vmatpush.msra.mxu0 %v468
    %1042 = vmatpush.msra.mxu0 %v464
    %1043 = vmatpush.msra.mxu0 %v460
    %1044 = vmatpush.msra.mxu0 %v456
    %1045 = vmatpush.msra.mxu0 %v452
    %1046 = vmatpush.msra.mxu0 %v448
    %1047 = vmatmul.f32.gmra.mxu0 %v965
    %v1048 = vpop.f32.mrf.mxu0
    %v1049 = vadd.f32 0.0, %v1048
    %1050 = vdwg.mxu0
    %v1051 = vadd.f32 %v967, %v989
    %v1052 = vadd.f32 %v968, %v1009
    %v1053 = vadd.f32 %v969, %v1029
    %v1054 = vadd.f32 %v970, %v1049
    %v1055 = vxor.u32 %v1051, 2147483648
    %v1056 = vmul.f32 %v1055, 1.442695
    %v1057 = vpow.pop %v1056
    %v1058 = vadd.f32 %v1057, 1.0
    %v1059 = vrcp.pop %v1058
    %v1060 = vmul.f32 %v1058, %v1059
    %v1061 = vsub.f32 1.0, %v1060
    %v1062 = vmul.f32 %v1059, %v1061
    %v1063 = vadd.f32 %v1059, %v1062
    %vm1064 = vweird.f32 %v1058
    %vm1065 = vweird.f32 %v1059
    %vm1066 = vmor %vm1064, %vm1065
    %v1067 = vsel %vm1066, %v1059, %v1063
    %v1068 = vand.u32 2147483647, %v1058
    %vm1069 = vcmp.eq.f32.partialorder %v1068, 8.507059e+37
    %v1070 = vand.u32 %v1058, 2147483648
    %v1071 = vor.u32 1.1754944e-38, %v1070
    %v1072 = vsel %vm1069, %v1071, %v1067
    %v1073 = vmul.f32 1.0, %v1072
    %v1074 = vxor.u32 %v1052, 2147483648
    %v1075 = vmul.f32 %v1074, 1.442695
    %v1076 = vpow.pop %v1075
    %v1077 = vadd.f32 %v1076, 1.0
    %v1078 = vrcp.pop %v1077
    %v1079 = vmul.f32 %v1077, %v1078
    %v1080 = vsub.f32 1.0, %v1079
    %v1081 = vmul.f32 %v1078, %v1080
    %v1082 = vadd.f32 %v1078, %v1081
    %vm1083 = vweird.f32 %v1077
    %vm1084 = vweird.f32 %v1078
    %vm1085 = vmor %vm1083, %vm1084
    %v1086 = vsel %vm1085, %v1078, %v1082
    %v1087 = vand.u32 2147483647, %v1077
    %vm1088 = vcmp.eq.f32.partialorder %v1087, 8.507059e+37
    %v1089 = vand.u32 %v1077, 2147483648
    %v1090 = vor.u32 1.1754944e-38, %v1089
    %v1091 = vsel %vm1088, %v1090, %v1086
    %v1092 = vmul.f32 1.0, %v1091
    %v1093 = vtanh.pop %v1053
    %v1094 = vxor.u32 %v1054, 2147483648
    %v1095 = vmul.f32 %v1094, 1.442695
    %v1096 = vpow.pop %v1095
    %v1097 = vadd.f32 %v1096, 1.0
    %v1098 = vrcp.pop %v1097
    %v1099 = vmul.f32 %v1097, %v1098
    %v1100 = vsub.f32 1.0, %v1099
    %v1101 = vmul.f32 %v1098, %v1100
    %v1102 = vadd.f32 %v1098, %v1101
    %vm1103 = vweird.f32 %v1097
    %vm1104 = vweird.f32 %v1098
    %vm1105 = vmor %vm1103, %vm1104
    %v1106 = vsel %vm1105, %v1098, %v1102
    %v1107 = vand.u32 2147483647, %v1097
    %vm1108 = vcmp.eq.f32.partialorder %v1107, 8.507059e+37
    %v1109 = vand.u32 %v1097, 2147483648
    %v1110 = vor.u32 1.1754944e-38, %v1109
    %v1111 = vsel %vm1108, %v1110, %v1106
    %v1112 = vmul.f32 1.0, %v1111
    %v1113 = vmul.f32 %v1092, %v963
    %v1114 = vmul.f32 %v1073, %v1093
    %v1115 = vadd.f32 %v1113, %v1114
    %v1116 = vtanh.pop %v1115
    %v1117 = vmul.f32 %v1112, %v1116
    %s1118 = scalar_lea.vmem [#allocation2], 128
    %v1119 = vld [vmem:[%s1118] sm:$0xff]
    %v1120 = vld [vmem:[%s1118 + $0x8] sm:$0xff]
    %v1121 = vld [vmem:[%s1118 + $0x10] sm:$0xff]
    %v1122 = vld [vmem:[%s1118 + $0x18] sm:$0xff]
    %1123 = vmatpush.msra.mxu0 %v505
    %1124 = vmatpush.msra.mxu0 %v501
    %1125 = vmatpush.msra.mxu0 %v497
    %1126 = vmatpush.msra.mxu0 %v493
    %1127 = vmatpush.msra.mxu0 %v489
    %1128 = vmatpush.msra.mxu0 %v485
    %1129 = vmatpush.msra.mxu0 %v481
    %1130 = vmatpush.msra.mxu0 %v477
    %1131 = vmatpush.msra.mxu0 %v473
    %1132 = vmatpush.msra.mxu0 %v469
    %1133 = vmatpush.msra.mxu0 %v465
    %1134 = vmatpush.msra.mxu0 %v461
    %1135 = vmatpush.msra.mxu0 %v457
    %1136 = vmatpush.msra.mxu0 %v453
    %1137 = vmatpush.msra.mxu0 %v449
    %1138 = vmatpush.msra.mxu0 %v445
    %1139 = vmatmul.f32.gmra.mxu0 %v1117
    %v1140 = vpop.f32.mrf.mxu0
    %v1141 = vadd.f32 0.0, %v1140
    %1142 = vdwg.mxu0
    %1143 = vmatpush.msra.mxu0 %v506
    %1144 = vmatpush.msra.mxu0 %v502
    %1145 = vmatpush.msra.mxu0 %v498
    %1146 = vmatpush.msra.mxu0 %v494
    %1147 = vmatpush.msra.mxu0 %v490
    %1148 = vmatpush.msra.mxu0 %v486
    %1149 = vmatpush.msra.mxu0 %v482
    %1150 = vmatpush.msra.mxu0 %v478
    %1151 = vmatpush.msra.mxu0 %v474
    %1152 = vmatpush.msra.mxu0 %v470
    %1153 = vmatpush.msra.mxu0 %v466
    %1154 = vmatpush.msra.mxu0 %v462
    %1155 = vmatpush.msra.mxu0 %v458
    %1156 = vmatpush.msra.mxu0 %v454
    %1157 = vmatpush.msra.mxu0 %v450
    %1158 = vmatpush.msra.mxu0 %v446
    %1159 = vmatmul.f32.gmra.mxu0 %v1117
    %v1160 = vpop.f32.mrf.mxu0
    %v1161 = vadd.f32 0.0, %v1160
    %1162 = vdwg.mxu0
    %1163 = vmatpush.msra.mxu0 %v507
    %1164 = vmatpush.msra.mxu0 %v503
    %1165 = vmatpush.msra.mxu0 %v499
    %1166 = vmatpush.msra.mxu0 %v495
    %1167 = vmatpush.msra.mxu0 %v491
    %1168 = vmatpush.msra.mxu0 %v487
    %1169 = vmatpush.msra.mxu0 %v483
    %1170 = vmatpush.msra.mxu0 %v479
    %1171 = vmatpush.msra.mxu0 %v475
    %1172 = vmatpush.msra.mxu0 %v471
    %1173 = vmatpush.msra.mxu0 %v467
    %1174 = vmatpush.msra.mxu0 %v463
    %1175 = vmatpush.msra.mxu0 %v459
    %1176 = vmatpush.msra.mxu0 %v455
    %1177 = vmatpush.msra.mxu0 %v451
    %1178 = vmatpush.msra.mxu0 %v447
    %1179 = vmatmul.f32.gmra.mxu0 %v1117
    %v1180 = vpop.f32.mrf.mxu0
    %v1181 = vadd.f32 0.0, %v1180
    %1182 = vdwg.mxu0
    %1183 = vmatpush.msra.mxu0 %v508
    %1184 = vmatpush.msra.mxu0 %v504
    %1185 = vmatpush.msra.mxu0 %v500
    %1186 = vmatpush.msra.mxu0 %v496
    %1187 = vmatpush.msra.mxu0 %v492
    %1188 = vmatpush.msra.mxu0 %v488
    %1189 = vmatpush.msra.mxu0 %v484
    %1190 = vmatpush.msra.mxu0 %v480
    %1191 = vmatpush.msra.mxu0 %v476
    %1192 = vmatpush.msra.mxu0 %v472
    %1193 = vmatpush.msra.mxu0 %v468
    %1194 = vmatpush.msra.mxu0 %v464
    %1195 = vmatpush.msra.mxu0 %v460
    %1196 = vmatpush.msra.mxu0 %v456
    %1197 = vmatpush.msra.mxu0 %v452
    %1198 = vmatpush.msra.mxu0 %v448
    %1199 = vmatmul.f32.gmra.mxu0 %v1117
    %v1200 = vpop.f32.mrf.mxu0
    %v1201 = vadd.f32 0.0, %v1200
    %1202 = vdwg.mxu0
    %v1203 = vadd.f32 %v1119, %v1141
    %v1204 = vadd.f32 %v1120, %v1161
    %v1205 = vadd.f32 %v1121, %v1181
    %v1206 = vadd.f32 %v1122, %v1201
    %v1207 = vxor.u32 %v1203, 2147483648
    %v1208 = vmul.f32 %v1207, 1.442695
    %v1209 = vpow.pop %v1208
    %v1210 = vadd.f32 %v1209, 1.0
    %v1211 = vrcp.pop %v1210
    %v1212 = vmul.f32 %v1210, %v1211
    %v1213 = vsub.f32 1.0, %v1212
    %v1214 = vmul.f32 %v1211, %v1213
    %v1215 = vadd.f32 %v1211, %v1214
    %vm1216 = vweird.f32 %v1210
    %vm1217 = vweird.f32 %v1211
    %vm1218 = vmor %vm1216, %vm1217
    %v1219 = vsel %vm1218, %v1211, %v1215
    %v1220 = vand.u32 2147483647, %v1210
    %vm1221 = vcmp.eq.f32.partialorder %v1220, 8.507059e+37
    %v1222 = vand.u32 %v1210, 2147483648
    %v1223 = vor.u32 1.1754944e-38, %v1222
    %v1224 = vsel %vm1221, %v1223, %v1219
    %v1225 = vmul.f32 1.0, %v1224
    %v1226 = vxor.u32 %v1204, 2147483648
    %v1227 = vmul.f32 %v1226, 1.442695
    %v1228 = vpow.pop %v1227
    %v1229 = vadd.f32 %v1228, 1.0
    %v1230 = vrcp.pop %v1229
    %v1231 = vmul.f32 %v1229, %v1230
    %v1232 = vsub.f32 1.0, %v1231
    %v1233 = vmul.f32 %v1230, %v1232
    %v1234 = vadd.f32 %v1230, %v1233
    %vm1235 = vweird.f32 %v1229
    %vm1236 = vweird.f32 %v1230
    %vm1237 = vmor %vm1235, %vm1236
    %v1238 = vsel %vm1237, %v1230, %v1234
    %v1239 = vand.u32 2147483647, %v1229
    %vm1240 = vcmp.eq.f32.partialorder %v1239, 8.507059e+37
    %v1241 = vand.u32 %v1229, 2147483648
    %v1242 = vor.u32 1.1754944e-38, %v1241
    %v1243 = vsel %vm1240, %v1242, %v1238
    %v1244 = vmul.f32 1.0, %v1243
    %v1245 = vtanh.pop %v1205
    %v1246 = vxor.u32 %v1206, 2147483648
    %v1247 = vmul.f32 %v1246, 1.442695
    %v1248 = vpow.pop %v1247
    %v1249 = vadd.f32 %v1248, 1.0
    %v1250 = vrcp.pop %v1249
    %v1251 = vmul.f32 %v1249, %v1250
    %v1252 = vsub.f32 1.0, %v1251
    %v1253 = vmul.f32 %v1250, %v1252
    %v1254 = vadd.f32 %v1250, %v1253
    %vm1255 = vweird.f32 %v1249
    %vm1256 = vweird.f32 %v1250
    %vm1257 = vmor %vm1255, %vm1256
    %v1258 = vsel %vm1257, %v1250, %v1254
    %v1259 = vand.u32 2147483647, %v1249
    %vm1260 = vcmp.eq.f32.partialorder %v1259, 8.507059e+37
    %v1261 = vand.u32 %v1249, 2147483648
    %v1262 = vor.u32 1.1754944e-38, %v1261
    %v1263 = vsel %vm1260, %v1262, %v1258
    %v1264 = vmul.f32 1.0, %v1263
    %v1265 = vmul.f32 %v1244, %v1115
    %v1266 = vmul.f32 %v1225, %v1245
    %v1267 = vadd.f32 %v1265, %v1266
    %v1268 = vtanh.pop %v1267
    %v1269 = vmul.f32 %v1264, %v1268
    %s1270 = scalar_lea.vmem [#allocation2], 160
    %v1271 = vld [vmem:[%s1270] sm:$0xff]
    %v1272 = vld [vmem:[%s1270 + $0x8] sm:$0xff]
    %v1273 = vld [vmem:[%s1270 + $0x10] sm:$0xff]
    %v1274 = vld [vmem:[%s1270 + $0x18] sm:$0xff]
    %1275 = vmatpush.msra.mxu0 %v505
    %1276 = vmatpush.msra.mxu0 %v501
    %1277 = vmatpush.msra.mxu0 %v497
    %1278 = vmatpush.msra.mxu0 %v493
    %1279 = vmatpush.msra.mxu0 %v489
    %1280 = vmatpush.msra.mxu0 %v485
    %1281 = vmatpush.msra.mxu0 %v481
    %1282 = vmatpush.msra.mxu0 %v477
    %1283 = vmatpush.msra.mxu0 %v473
    %1284 = vmatpush.msra.mxu0 %v469
    %1285 = vmatpush.msra.mxu0 %v465
    %1286 = vmatpush.msra.mxu0 %v461
    %1287 = vmatpush.msra.mxu0 %v457
    %1288 = vmatpush.msra.mxu0 %v453
    %1289 = vmatpush.msra.mxu0 %v449
    %1290 = vmatpush.msra.mxu0 %v445
    %1291 = vmatmul.f32.gmra.mxu0 %v1269
    %v1292 = vpop.f32.mrf.mxu0
    %v1293 = vadd.f32 0.0, %v1292
    %1294 = vdwg.mxu0
    %1295 = vmatpush.msra.mxu0 %v506
    %1296 = vmatpush.msra.mxu0 %v502
    %1297 = vmatpush.msra.mxu0 %v498
    %1298 = vmatpush.msra.mxu0 %v494
    %1299 = vmatpush.msra.mxu0 %v490
    %1300 = vmatpush.msra.mxu0 %v486
    %1301 = vmatpush.msra.mxu0 %v482
    %1302 = vmatpush.msra.mxu0 %v478
    %1303 = vmatpush.msra.mxu0 %v474
    %1304 = vmatpush.msra.mxu0 %v470
    %1305 = vmatpush.msra.mxu0 %v466
    %1306 = vmatpush.msra.mxu0 %v462
    %1307 = vmatpush.msra.mxu0 %v458
    %1308 = vmatpush.msra.mxu0 %v454
    %1309 = vmatpush.msra.mxu0 %v450
    %1310 = vmatpush.msra.mxu0 %v446
    %1311 = vmatmul.f32.gmra.mxu0 %v1269
    %v1312 = vpop.f32.mrf.mxu0
    %v1313 = vadd.f32 0.0, %v1312
    %1314 = vdwg.mxu0
    %1315 = vmatpush.msra.mxu0 %v507
    %1316 = vmatpush.msra.mxu0 %v503
    %1317 = vmatpush.msra.mxu0 %v499
    %1318 = vmatpush.msra.mxu0 %v495
    %1319 = vmatpush.msra.mxu0 %v491
    %1320 = vmatpush.msra.mxu0 %v487
    %1321 = vmatpush.msra.mxu0 %v483
    %1322 = vmatpush.msra.mxu0 %v479
    %1323 = vmatpush.msra.mxu0 %v475
    %1324 = vmatpush.msra.mxu0 %v471
    %1325 = vmatpush.msra.mxu0 %v467
    %1326 = vmatpush.msra.mxu0 %v463
    %1327 = vmatpush.msra.mxu0 %v459
    %1328 = vmatpush.msra.mxu0 %v455
    %1329 = vmatpush.msra.mxu0 %v451
    %1330 = vmatpush.msra.mxu0 %v447
    %1331 = vmatmul.f32.gmra.mxu0 %v1269
    %v1332 = vpop.f32.mrf.mxu0
    %v1333 = vadd.f32 0.0, %v1332
    %1334 = vdwg.mxu0
    %1335 = vmatpush.msra.mxu0 %v508
    %1336 = vmatpush.msra.mxu0 %v504
    %1337 = vmatpush.msra.mxu0 %v500
    %1338 = vmatpush.msra.mxu0 %v496
    %1339 = vmatpush.msra.mxu0 %v492
    %1340 = vmatpush.msra.mxu0 %v488
    %1341 = vmatpush.msra.mxu0 %v484
    %1342 = vmatpush.msra.mxu0 %v480
    %1343 = vmatpush.msra.mxu0 %v476
    %1344 = vmatpush.msra.mxu0 %v472
    %1345 = vmatpush.msra.mxu0 %v468
    %1346 = vmatpush.msra.mxu0 %v464
    %1347 = vmatpush.msra.mxu0 %v460
    %1348 = vmatpush.msra.mxu0 %v456
    %1349 = vmatpush.msra.mxu0 %v452
    %1350 = vmatpush.msra.mxu0 %v448
    %1351 = vmatmul.f32.gmra.mxu0 %v1269
    %v1352 = vpop.f32.mrf.mxu0
    %v1353 = vadd.f32 0.0, %v1352
    %1354 = vdwg.mxu0
    %v1355 = vadd.f32 %v1271, %v1293
    %v1356 = vadd.f32 %v1272, %v1313
    %v1357 = vadd.f32 %v1273, %v1333
    %v1358 = vadd.f32 %v1274, %v1353
    %v1359 = vxor.u32 %v1355, 2147483648
    %v1360 = vmul.f32 %v1359, 1.442695
    %v1361 = vpow.pop %v1360
    %v1362 = vadd.f32 %v1361, 1.0
    %v1363 = vrcp.pop %v1362
    %v1364 = vmul.f32 %v1362, %v1363
    %v1365 = vsub.f32 1.0, %v1364
    %v1366 = vmul.f32 %v1363, %v1365
    %v1367 = vadd.f32 %v1363, %v1366
    %vm1368 = vweird.f32 %v1362
    %vm1369 = vweird.f32 %v1363
    %vm1370 = vmor %vm1368, %vm1369
    %v1371 = vsel %vm1370, %v1363, %v1367
    %v1372 = vand.u32 2147483647, %v1362
    %vm1373 = vcmp.eq.f32.partialorder %v1372, 8.507059e+37
    %v1374 = vand.u32 %v1362, 2147483648
    %v1375 = vor.u32 1.1754944e-38, %v1374
    %v1376 = vsel %vm1373, %v1375, %v1371
    %v1377 = vmul.f32 1.0, %v1376
    %v1378 = vxor.u32 %v1356, 2147483648
    %v1379 = vmul.f32 %v1378, 1.442695
    %v1380 = vpow.pop %v1379
    %v1381 = vadd.f32 %v1380, 1.0
    %v1382 = vrcp.pop %v1381
    %v1383 = vmul.f32 %v1381, %v1382
    %v1384 = vsub.f32 1.0, %v1383
    %v1385 = vmul.f32 %v1382, %v1384
    %v1386 = vadd.f32 %v1382, %v1385
    %vm1387 = vweird.f32 %v1381
    %vm1388 = vweird.f32 %v1382
    %vm1389 = vmor %vm1387, %vm1388
    %v1390 = vsel %vm1389, %v1382, %v1386
    %v1391 = vand.u32 2147483647, %v1381
    %vm1392 = vcmp.eq.f32.partialorder %v1391, 8.507059e+37
    %v1393 = vand.u32 %v1381, 2147483648
    %v1394 = vor.u32 1.1754944e-38, %v1393
    %v1395 = vsel %vm1392, %v1394, %v1390
    %v1396 = vmul.f32 1.0, %v1395
    %v1397 = vtanh.pop %v1357
    %v1398 = vxor.u32 %v1358, 2147483648
    %v1399 = vmul.f32 %v1398, 1.442695
    %v1400 = vpow.pop %v1399
    %v1401 = vadd.f32 %v1400, 1.0
    %v1402 = vrcp.pop %v1401
    %v1403 = vmul.f32 %v1401, %v1402
    %v1404 = vsub.f32 1.0, %v1403
    %v1405 = vmul.f32 %v1402, %v1404
    %v1406 = vadd.f32 %v1402, %v1405
    %vm1407 = vweird.f32 %v1401
    %vm1408 = vweird.f32 %v1402
    %vm1409 = vmor %vm1407, %vm1408
    %v1410 = vsel %vm1409, %v1402, %v1406
    %v1411 = vand.u32 2147483647, %v1401
    %vm1412 = vcmp.eq.f32.partialorder %v1411, 8.507059e+37
    %v1413 = vand.u32 %v1401, 2147483648
    %v1414 = vor.u32 1.1754944e-38, %v1413
    %v1415 = vsel %vm1412, %v1414, %v1410
    %v1416 = vmul.f32 1.0, %v1415
    %v1417 = vmul.f32 %v1396, %v1267
    %v1418 = vmul.f32 %v1377, %v1397
    %v1419 = vadd.f32 %v1417, %v1418
    %v1420 = vtanh.pop %v1419
    %v1421 = vmul.f32 %v1416, %v1420
    %s1422 = scalar_lea.vmem [#allocation2], 192
    %v1423 = vld [vmem:[%s1422] sm:$0xff]
    %v1424 = vld [vmem:[%s1422 + $0x8] sm:$0xff]
    %v1425 = vld [vmem:[%s1422 + $0x10] sm:$0xff]
    %v1426 = vld [vmem:[%s1422 + $0x18] sm:$0xff]
    %1427 = vmatpush.msra.mxu0 %v505
    %1428 = vmatpush.msra.mxu0 %v501
    %1429 = vmatpush.msra.mxu0 %v497
    %1430 = vmatpush.msra.mxu0 %v493
    %1431 = vmatpush.msra.mxu0 %v489
    %1432 = vmatpush.msra.mxu0 %v485
    %1433 = vmatpush.msra.mxu0 %v481
    %1434 = vmatpush.msra.mxu0 %v477
    %1435 = vmatpush.msra.mxu0 %v473
    %1436 = vmatpush.msra.mxu0 %v469
    %1437 = vmatpush.msra.mxu0 %v465
    %1438 = vmatpush.msra.mxu0 %v461
    %1439 = vmatpush.msra.mxu0 %v457
    %1440 = vmatpush.msra.mxu0 %v453
    %1441 = vmatpush.msra.mxu0 %v449
    %1442 = vmatpush.msra.mxu0 %v445
    %1443 = vmatmul.f32.gmra.mxu0 %v1421
    %v1444 = vpop.f32.mrf.mxu0
    %v1445 = vadd.f32 0.0, %v1444
    %1446 = vdwg.mxu0
    %1447 = vmatpush.msra.mxu0 %v506
    %1448 = vmatpush.msra.mxu0 %v502
    %1449 = vmatpush.msra.mxu0 %v498
    %1450 = vmatpush.msra.mxu0 %v494
    %1451 = vmatpush.msra.mxu0 %v490
    %1452 = vmatpush.msra.mxu0 %v486
    %1453 = vmatpush.msra.mxu0 %v482
    %1454 = vmatpush.msra.mxu0 %v478
    %1455 = vmatpush.msra.mxu0 %v474
    %1456 = vmatpush.msra.mxu0 %v470
    %1457 = vmatpush.msra.mxu0 %v466
    %1458 = vmatpush.msra.mxu0 %v462
    %1459 = vmatpush.msra.mxu0 %v458
    %1460 = vmatpush.msra.mxu0 %v454
    %1461 = vmatpush.msra.mxu0 %v450
    %1462 = vmatpush.msra.mxu0 %v446
    %1463 = vmatmul.f32.gmra.mxu0 %v1421
    %v1464 = vpop.f32.mrf.mxu0
    %v1465 = vadd.f32 0.0, %v1464
    %1466 = vdwg.mxu0
    %1467 = vmatpush.msra.mxu0 %v507
    %1468 = vmatpush.msra.mxu0 %v503
    %1469 = vmatpush.msra.mxu0 %v499
    %1470 = vmatpush.msra.mxu0 %v495
    %1471 = vmatpush.msra.mxu0 %v491
    %1472 = vmatpush.msra.mxu0 %v487
    %1473 = vmatpush.msra.mxu0 %v483
    %1474 = vmatpush.msra.mxu0 %v479
    %1475 = vmatpush.msra.mxu0 %v475
    %1476 = vmatpush.msra.mxu0 %v471
    %1477 = vmatpush.msra.mxu0 %v467
    %1478 = vmatpush.msra.mxu0 %v463
    %1479 = vmatpush.msra.mxu0 %v459
    %1480 = vmatpush.msra.mxu0 %v455
    %1481 = vmatpush.msra.mxu0 %v451
    %1482 = vmatpush.msra.mxu0 %v447
    %1483 = vmatmul.f32.gmra.mxu0 %v1421
    %v1484 = vpop.f32.mrf.mxu0
    %v1485 = vadd.f32 0.0, %v1484
    %1486 = vdwg.mxu0
    %1487 = vmatpush.msra.mxu0 %v508
    %1488 = vmatpush.msra.mxu0 %v504
    %1489 = vmatpush.msra.mxu0 %v500
    %1490 = vmatpush.msra.mxu0 %v496
    %1491 = vmatpush.msra.mxu0 %v492
    %1492 = vmatpush.msra.mxu0 %v488
    %1493 = vmatpush.msra.mxu0 %v484
    %1494 = vmatpush.msra.mxu0 %v480
    %1495 = vmatpush.msra.mxu0 %v476
    %1496 = vmatpush.msra.mxu0 %v472
    %1497 = vmatpush.msra.mxu0 %v468
    %1498 = vmatpush.msra.mxu0 %v464
    %1499 = vmatpush.msra.mxu0 %v460
    %1500 = vmatpush.msra.mxu0 %v456
    %1501 = vmatpush.msra.mxu0 %v452
    %1502 = vmatpush.msra.mxu0 %v448
    %1503 = vmatmul.f32.gmra.mxu0 %v1421
    %v1504 = vpop.f32.mrf.mxu0
    %v1505 = vadd.f32 0.0, %v1504
    %1506 = vdwg.mxu0
    %v1507 = vadd.f32 %v1423, %v1445
    %v1508 = vadd.f32 %v1424, %v1465
    %v1509 = vadd.f32 %v1425, %v1485
    %v1510 = vadd.f32 %v1426, %v1505
    %v1511 = vxor.u32 %v1507, 2147483648
    %v1512 = vmul.f32 %v1511, 1.442695
    %v1513 = vpow.pop %v1512
    %v1514 = vadd.f32 %v1513, 1.0
    %v1515 = vrcp.pop %v1514
    %v1516 = vmul.f32 %v1514, %v1515
    %v1517 = vsub.f32 1.0, %v1516
    %v1518 = vmul.f32 %v1515, %v1517
    %v1519 = vadd.f32 %v1515, %v1518
    %vm1520 = vweird.f32 %v1514
    %vm1521 = vweird.f32 %v1515
    %vm1522 = vmor %vm1520, %vm1521
    %v1523 = vsel %vm1522, %v1515, %v1519
    %v1524 = vand.u32 2147483647, %v1514
    %vm1525 = vcmp.eq.f32.partialorder %v1524, 8.507059e+37
    %v1526 = vand.u32 %v1514, 2147483648
    %v1527 = vor.u32 1.1754944e-38, %v1526
    %v1528 = vsel %vm1525, %v1527, %v1523
    %v1529 = vmul.f32 1.0, %v1528
    %v1530 = vxor.u32 %v1508, 2147483648
    %v1531 = vmul.f32 %v1530, 1.442695
    %v1532 = vpow.pop %v1531
    %v1533 = vadd.f32 %v1532, 1.0
    %v1534 = vrcp.pop %v1533
    %v1535 = vmul.f32 %v1533, %v1534
    %v1536 = vsub.f32 1.0, %v1535
    %v1537 = vmul.f32 %v1534, %v1536
    %v1538 = vadd.f32 %v1534, %v1537
    %vm1539 = vweird.f32 %v1533
    %vm1540 = vweird.f32 %v1534
    %vm1541 = vmor %vm1539, %vm1540
    %v1542 = vsel %vm1541, %v1534, %v1538
    %v1543 = vand.u32 2147483647, %v1533
    %vm1544 = vcmp.eq.f32.partialorder %v1543, 8.507059e+37
    %v1545 = vand.u32 %v1533, 2147483648
    %v1546 = vor.u32 1.1754944e-38, %v1545
    %v1547 = vsel %vm1544, %v1546, %v1542
    %v1548 = vmul.f32 1.0, %v1547
    %v1549 = vtanh.pop %v1509
    %v1550 = vxor.u32 %v1510, 2147483648
    %v1551 = vmul.f32 %v1550, 1.442695
    %v1552 = vpow.pop %v1551
    %v1553 = vadd.f32 %v1552, 1.0
    %v1554 = vrcp.pop %v1553
    %v1555 = vmul.f32 %v1553, %v1554
    %v1556 = vsub.f32 1.0, %v1555
    %v1557 = vmul.f32 %v1554, %v1556
    %v1558 = vadd.f32 %v1554, %v1557
    %vm1559 = vweird.f32 %v1553
    %vm1560 = vweird.f32 %v1554
    %vm1561 = vmor %vm1559, %vm1560
    %v1562 = vsel %vm1561, %v1554, %v1558
    %v1563 = vand.u32 2147483647, %v1553
    %vm1564 = vcmp.eq.f32.partialorder %v1563, 8.507059e+37
    %v1565 = vand.u32 %v1553, 2147483648
    %v1566 = vor.u32 1.1754944e-38, %v1565
    %v1567 = vsel %vm1564, %v1566, %v1562
    %v1568 = vmul.f32 1.0, %v1567
    %v1569 = vmul.f32 %v1548, %v1419
    %v1570 = vmul.f32 %v1529, %v1549
    %v1571 = vadd.f32 %v1569, %v1570
    %v1572 = vtanh.pop %v1571
    %v1573 = vmul.f32 %v1568, %v1572
    %s1574 = scalar_lea.vmem [#allocation2], 224
    %v1575 = vld [vmem:[%s1574] sm:$0xff]
    %v1576 = vld [vmem:[%s1574 + $0x8] sm:$0xff]
    %v1577 = vld [vmem:[%s1574 + $0x10] sm:$0xff]
    %v1578 = vld [vmem:[%s1574 + $0x18] sm:$0xff]
    %1579 = vmatpush.msra.mxu0 %v505
    %1580 = vmatpush.msra.mxu0 %v501
    %1581 = vmatpush.msra.mxu0 %v497
    %1582 = vmatpush.msra.mxu0 %v493
    %1583 = vmatpush.msra.mxu0 %v489
    %1584 = vmatpush.msra.mxu0 %v485
    %1585 = vmatpush.msra.mxu0 %v481
    %1586 = vmatpush.msra.mxu0 %v477
    %1587 = vmatpush.msra.mxu0 %v473
    %1588 = vmatpush.msra.mxu0 %v469
    %1589 = vmatpush.msra.mxu0 %v465
    %1590 = vmatpush.msra.mxu0 %v461
    %1591 = vmatpush.msra.mxu0 %v457
    %1592 = vmatpush.msra.mxu0 %v453
    %1593 = vmatpush.msra.mxu0 %v449
    %1594 = vmatpush.msra.mxu0 %v445
    %1595 = vmatmul.f32.gmra.mxu0 %v1573
    %v1596 = vpop.f32.mrf.mxu0
    %v1597 = vadd.f32 0.0, %v1596
    %1598 = vdwg.mxu0
    %1599 = vmatpush.msra.mxu0 %v506
    %1600 = vmatpush.msra.mxu0 %v502
    %1601 = vmatpush.msra.mxu0 %v498
    %1602 = vmatpush.msra.mxu0 %v494
    %1603 = vmatpush.msra.mxu0 %v490
    %1604 = vmatpush.msra.mxu0 %v486
    %1605 = vmatpush.msra.mxu0 %v482
    %1606 = vmatpush.msra.mxu0 %v478
    %1607 = vmatpush.msra.mxu0 %v474
    %1608 = vmatpush.msra.mxu0 %v470
    %1609 = vmatpush.msra.mxu0 %v466
    %1610 = vmatpush.msra.mxu0 %v462
    %1611 = vmatpush.msra.mxu0 %v458
    %1612 = vmatpush.msra.mxu0 %v454
    %1613 = vmatpush.msra.mxu0 %v450
    %1614 = vmatpush.msra.mxu0 %v446
    %1615 = vmatmul.f32.gmra.mxu0 %v1573
    %v1616 = vpop.f32.mrf.mxu0
    %v1617 = vadd.f32 0.0, %v1616
    %1618 = vdwg.mxu0
    %1619 = vmatpush.msra.mxu0 %v507
    %1620 = vmatpush.msra.mxu0 %v503
    %1621 = vmatpush.msra.mxu0 %v499
    %1622 = vmatpush.msra.mxu0 %v495
    %1623 = vmatpush.msra.mxu0 %v491
    %1624 = vmatpush.msra.mxu0 %v487
    %1625 = vmatpush.msra.mxu0 %v483
    %1626 = vmatpush.msra.mxu0 %v479
    %1627 = vmatpush.msra.mxu0 %v475
    %1628 = vmatpush.msra.mxu0 %v471
    %1629 = vmatpush.msra.mxu0 %v467
    %1630 = vmatpush.msra.mxu0 %v463
    %1631 = vmatpush.msra.mxu0 %v459
    %1632 = vmatpush.msra.mxu0 %v455
    %1633 = vmatpush.msra.mxu0 %v451
    %1634 = vmatpush.msra.mxu0 %v447
    %1635 = vmatmul.f32.gmra.mxu0 %v1573
    %v1636 = vpop.f32.mrf.mxu0
    %v1637 = vadd.f32 0.0, %v1636
    %1638 = vdwg.mxu0
    %1639 = vmatpush.msra.mxu0 %v508
    %1640 = vmatpush.msra.mxu0 %v504
    %1641 = vmatpush.msra.mxu0 %v500
    %1642 = vmatpush.msra.mxu0 %v496
    %1643 = vmatpush.msra.mxu0 %v492
    %1644 = vmatpush.msra.mxu0 %v488
    %1645 = vmatpush.msra.mxu0 %v484
    %1646 = vmatpush.msra.mxu0 %v480
    %1647 = vmatpush.msra.mxu0 %v476
    %1648 = vmatpush.msra.mxu0 %v472
    %1649 = vmatpush.msra.mxu0 %v468
    %1650 = vmatpush.msra.mxu0 %v464
    %1651 = vmatpush.msra.mxu0 %v460
    %1652 = vmatpush.msra.mxu0 %v456
    %1653 = vmatpush.msra.mxu0 %v452
    %1654 = vmatpush.msra.mxu0 %v448
    %1655 = vmatmul.f32.gmra.mxu0 %v1573
    %v1656 = vpop.f32.mrf.mxu0
    %v1657 = vadd.f32 0.0, %v1656
    %1658 = vdwg.mxu0
    %v1659 = vadd.f32 %v1575, %v1597
    %v1660 = vadd.f32 %v1576, %v1617
    %v1661 = vadd.f32 %v1577, %v1637
    %v1662 = vadd.f32 %v1578, %v1657
    %v1663 = vxor.u32 %v1659, 2147483648
    %v1664 = vmul.f32 %v1663, 1.442695
    %v1665 = vpow.pop %v1664
    %v1666 = vadd.f32 %v1665, 1.0
    %v1667 = vrcp.pop %v1666
    %v1668 = vmul.f32 %v1666, %v1667
    %v1669 = vsub.f32 1.0, %v1668
    %v1670 = vmul.f32 %v1667, %v1669
    %v1671 = vadd.f32 %v1667, %v1670
    %vm1672 = vweird.f32 %v1666
    %vm1673 = vweird.f32 %v1667
    %vm1674 = vmor %vm1672, %vm1673
    %v1675 = vsel %vm1674, %v1667, %v1671
    %v1676 = vand.u32 2147483647, %v1666
    %vm1677 = vcmp.eq.f32.partialorder %v1676, 8.507059e+37
    %v1678 = vand.u32 %v1666, 2147483648
    %v1679 = vor.u32 1.1754944e-38, %v1678
    %v1680 = vsel %vm1677, %v1679, %v1675
    %v1681 = vmul.f32 1.0, %v1680
    %v1682 = vxor.u32 %v1660, 2147483648
    %v1683 = vmul.f32 %v1682, 1.442695
    %v1684 = vpow.pop %v1683
    %v1685 = vadd.f32 %v1684, 1.0
    %v1686 = vrcp.pop %v1685
    %v1687 = vmul.f32 %v1685, %v1686
    %v1688 = vsub.f32 1.0, %v1687
    %v1689 = vmul.f32 %v1686, %v1688
    %v1690 = vadd.f32 %v1686, %v1689
    %vm1691 = vweird.f32 %v1685
    %vm1692 = vweird.f32 %v1686
    %vm1693 = vmor %vm1691, %vm1692
    %v1694 = vsel %vm1693, %v1686, %v1690
    %v1695 = vand.u32 2147483647, %v1685
    %vm1696 = vcmp.eq.f32.partialorder %v1695, 8.507059e+37
    %v1697 = vand.u32 %v1685, 2147483648
    %v1698 = vor.u32 1.1754944e-38, %v1697
    %v1699 = vsel %vm1696, %v1698, %v1694
    %v1700 = vmul.f32 1.0, %v1699
    %v1701 = vtanh.pop %v1661
    %v1702 = vxor.u32 %v1662, 2147483648
    %v1703 = vmul.f32 %v1702, 1.442695
    %v1704 = vpow.pop %v1703
    %v1705 = vadd.f32 %v1704, 1.0
    %v1706 = vrcp.pop %v1705
    %v1707 = vmul.f32 %v1705, %v1706
    %v1708 = vsub.f32 1.0, %v1707
    %v1709 = vmul.f32 %v1706, %v1708
    %v1710 = vadd.f32 %v1706, %v1709
    %vm1711 = vweird.f32 %v1705
    %vm1712 = vweird.f32 %v1706
    %vm1713 = vmor %vm1711, %vm1712
    %v1714 = vsel %vm1713, %v1706, %v1710
    %v1715 = vand.u32 2147483647, %v1705
    %vm1716 = vcmp.eq.f32.partialorder %v1715, 8.507059e+37
    %v1717 = vand.u32 %v1705, 2147483648
    %v1718 = vor.u32 1.1754944e-38, %v1717
    %v1719 = vsel %vm1716, %v1718, %v1714
    %v1720 = vmul.f32 1.0, %v1719
    %v1721 = vmul.f32 %v1700, %v1571
    %v1722 = vmul.f32 %v1681, %v1701
    %v1723 = vadd.f32 %v1721, %v1722
    %v1724 = vtanh.pop %v1723
    %v1725 = vmul.f32 %v1720, %v1724
    %1726 = vst [vmem:[#allocation3] sm:$0xff] %v1725
    %1727 = vst [vmem:[#allocation4] sm:$0xff] %v1723
    // Predicated region
    $region38: #{tpu_custom_call.1} parent=1 // pred_check
      %p1728 = pneg %p79
    $region39: #{tpu_custom_call.1} parent=1 // pred_check_branch
      %1730 = sbr.rel (%p1728) target = $region41
    $region40: #{tpu_custom_call.1} parent=1 // pred_region
      %1731 = vst [vmem:[#allocation13] sm:$0xff] %v1725
    $region41: #{tpu_custom_call.1} parent=1 // pred_fallthru
      _
    // Predicated region
    $region42: #{tpu_custom_call.1} parent=1 // pred_check
      _
    $region43: #{tpu_custom_call.1} parent=1 // pred_check_branch
      %1733 = sbr.rel (0) target = $region45
    $region44: #{tpu_custom_call.1} parent=1 // pred_region
      %1735 = vsyncadd [#allocation7], 0
      %s1737 = sshll.u32 [#allocation13], 4
      %s1738 = int_to_ptr.vmem [resolvable:$true] %s1737
      %s1739 = sshll.u32 %s4, 4
      %s1740 = int_to_ptr.hbm [resolvable:$true] %s1739
      %1742 = dma.vmem_to_hbm [thread:$0]  %s1738, 128, %s1740, [#allocation7]
    $region45: #{tpu_custom_call.1} parent=1 // pred_fallthru
      _
    // Predicated region
    $region46: #{tpu_custom_call.1} parent=1 // pred_check
      _
    $region47: #{tpu_custom_call.1} parent=1 // pred_check_branch
      %1744 = sbr.rel (0) target = $region49
    $region48: #{tpu_custom_call.1} parent=1 // pred_region
      %1746 = dma.done [#allocation7], 128
    $region49: #{tpu_custom_call.1} parent=1 // pred_fallthru
      _
    %1747 = vsyncpa [#allocation6], 1
    %1748 = vsyncpa [#allocation9], 1
    %1749 = vsyncpa [#allocation12], 1
    %1750 = vsyncpa [#allocation7], 1

// kernel: tpu_custom_call.1
$region0: #{tpu_custom_call.1}
  #allocation0 [shape = 'u32[]', space=smem, size = 0x4, offset = 0x4, fixed_abs, tag = 'smem constant byte address 0x4 - core index']
  #allocation1 [shape = 'u32[72,128]{1,0:T(1,128)}', space=vmem, size = 0x9000, scoped, tag = 'internal scratch']
  #allocation2 [shape = 'f32[8,8,512]{2,1,0:T(8,128)}', space=vmem, size = 0x20000, scoped, tag = 'scratch operand']
  #allocation3 [shape = 'f32[8,128]{1,0:T(8,128)}', space=vmem, size = 0x1000, scoped, tag = 'scratch operand']
  #allocation4 [shape = 'f32[8,128]{1,0:T(8,128)}', space=vmem, size = 0x1000, scoped, tag = 'scratch operand']
  %s0 = inlined_call_operand.hbm [shape: f32[8,8,16], index: 0, kind: input, shape index: {}]
  %s1 = inlined_call_operand.hbm [shape: f32[16,512], index: 1, kind: input, shape index: {}]
  %s2 = inlined_call_operand.hbm [shape: f32[128,512], index: 2, kind: input, shape index: {}]
  %s3 = inlined_call_operand.hbm [shape: f32[1,512], index: 3, kind: input, shape index: {}]
  %s4 = inlined_call_operand.hbm [shape: f32[8,128], index: 4, kind: output, shape index: {}]
  %s5 = sld [smem:[#allocation0]]
  $region50: #{tpu_custom_call.1} parent=0
    _
  %s7 = ssub.s32 1, %s5
  %s8 = scalar_select 0, %s7, %s5
  $region1: #{tpu_custom_call.1} parent=0
    #allocation5 [shape = 'u8[32768]{0}', space=vmem, size = 0x8000, scoped, tag = 'input window, operand 0, single buffered']
    #allocation6 [shape = 's32[1]{0}', space=sflag, size = 0x4, scoped, tag = 'scoped memory for tpu_custom_call.1']
    #allocation7 [shape = 's32[1]{0}', space=sflag, size = 0x4, scoped, tag = 'scoped memory for tpu_custom_call.1']
    #allocation8 [shape = 'u8[32768]{0}', space=vmem, size = 0x8000, scoped, tag = 'input window, operand 1, single buffered']
    #allocation9 [shape = 's32[1]{0}', space=sflag, size = 0x4, scoped, tag = 'scoped memory for tpu_custom_call.1']
    #allocation10 [shape = 'u8[262144]{0}', space=vmem, size = 0x40000, scoped, tag = 'input window, operand 2, single buffered']
    #allocation11 [shape = 'u8[2048]{0}', space=vmem, size = 0x800, scoped, tag = 'input window, operand 3, single buffered']
    #allocation12 [shape = 's32[1]{0}', space=sflag, size = 0x4, scoped, tag = 'scoped memory for tpu_custom_call.1']
    #allocation13 [shape = 'u8[4096]{0}', space=vmem, size = 0x1000, scoped, tag = 'output window, operand 0, single buffered']
    %9 = vsyncpa [#allocation6], 0
    %10 = vsyncpa [#allocation9], 0
    %11 = vsyncpa [#allocation12], 0
    %12 = vsyncpa [#allocation7], 0
    // Predicated region
    $region2: #{tpu_custom_call.1} parent=1 // pred_check
      _
    $region3: #{tpu_custom_call.1} parent=1 // pred_check_branch
      %14 = sbr.rel (0) target = $region5
    $region4: #{tpu_custom_call.1} parent=1 // pred_region
      %16 = vsyncadd [#allocation6], 0
      %s17 = sshll.u32 %s0, 4
      %s18 = int_to_ptr.hbm [resolvable:$true] %s17
      %s19 = sshll.u32 [#allocation5], 4
      %s20 = int_to_ptr.vmem [resolvable:$true] %s19
      %25 = dma.hbm_to_vmem [thread:$0]  %s18, 1024, %s20, [#allocation6], 128, 128, 8
    $region5: #{tpu_custom_call.1} parent=1 // pred_fallthru
      _
    // Predicated region
    $region6: #{tpu_custom_call.1} parent=1 // pred_check
      _
    $region7: #{tpu_custom_call.1} parent=1 // pred_check_branch
      %27 = sbr.rel (0) target = $region9
    $region8: #{tpu_custom_call.1} parent=1 // pred_region
      %29 = vsyncadd [#allocation9], 0
      %s30 = sshll.u32 %s1, 4
      %s31 = int_to_ptr.hbm [resolvable:$true] %s30
      %s32 = sshll.u32 [#allocation8], 4
      %s33 = int_to_ptr.vmem [resolvable:$true] %s32
      %38 = dma.hbm_to_vmem [thread:$0]  %s31, 1024, %s33, [#allocation9], 512, 512, 32
    $region9: #{tpu_custom_call.1} parent=1 // pred_fallthru
      _
    // Predicated region
    $region10: #{tpu_custom_call.1} parent=1 // pred_check
      _
    $region11: #{tpu_custom_call.1} parent=1 // pred_check_branch
      %40 = sbr.rel (0) target = $region13
    $region12: #{tpu_custom_call.1} parent=1 // pred_region
      %42 = vsyncadd [#allocation9], 0
      %s43 = sshll.u32 %s2, 4
      %s44 = int_to_ptr.hbm [resolvable:$true] %s43
      %s45 = sshll.u32 [#allocation10], 4
      %s46 = int_to_ptr.vmem [resolvable:$true] %s45
      %51 = dma.hbm_to_vmem [thread:$0]  %s44, 8192, %s46, [#allocation9], 512, 512, 32
    $region13: #{tpu_custom_call.1} parent=1 // pred_fallthru
      _
    // Predicated region
    $region14: #{tpu_custom_call.1} parent=1 // pred_check
      _
    $region15: #{tpu_custom_call.1} parent=1 // pred_check_branch
      %53 = sbr.rel (0) target = $region17
    $region16: #{tpu_custom_call.1} parent=1 // pred_region
      %55 = vsyncadd [#allocation12], 0
      %s57 = sshll.u32 %s3, 4
      %s58 = int_to_ptr.hbm [resolvable:$true] %s57
      %s59 = sshll.u32 [#allocation11], 4
      %s60 = int_to_ptr.vmem [resolvable:$true] %s59
      %62 = dma.hbm_to_vmem [thread:$0]  %s58, 64, %s60, [#allocation12]
    $region17: #{tpu_custom_call.1} parent=1 // pred_fallthru
      _
    // Predicated region
    $region18: #{tpu_custom_call.1} parent=1 // pred_check
      _
    $region19: #{tpu_custom_call.1} parent=1 // pred_check_branch
      %64 = sbr.rel (0) target = $region21
    $region20: #{tpu_custom_call.1} parent=1 // pred_region
      %66 = dma.done [#allocation6], 1024
    $region21: #{tpu_custom_call.1} parent=1 // pred_fallthru
      _
    // Predicated region
    $region22: #{tpu_custom_call.1} parent=1 // pred_check
      _
    $region23: #{tpu_custom_call.1} parent=1 // pred_check_branch
      %68 = sbr.rel (0) target = $region25
    $region24: #{tpu_custom_call.1} parent=1 // pred_region
      %70 = dma.done [#allocation9], 1024
    $region25: #{tpu_custom_call.1} parent=1 // pred_fallthru
      _
    // Predicated region
    $region26: #{tpu_custom_call.1} parent=1 // pred_check
      _
    $region27: #{tpu_custom_call.1} parent=1 // pred_check_branch
      %72 = sbr.rel (0) target = $region29
    $region28: #{tpu_custom_call.1} parent=1 // pred_region
      %74 = dma.done [#allocation9], 8192
    $region29: #{tpu_custom_call.1} parent=1 // pred_fallthru
      _
    // Predicated region
    $region30: #{tpu_custom_call.1} parent=1 // pred_check
      _
    $region31: #{tpu_custom_call.1} parent=1 // pred_check_branch
      %76 = sbr.rel (0) target = $region33
    $region32: #{tpu_custom_call.1} parent=1 // pred_region
      %78 = dma.done [#allocation12], 64
    $region33: #{tpu_custom_call.1} parent=1 // pred_fallthru
      _
    %p79 = scmp.eq.s32.totalorder 0, 0
    // Predicated region
    $region34: #{tpu_custom_call.1} parent=1 // pred_check
      %p80 = pneg %p79
    $region35: #{tpu_custom_call.1} parent=1 // pred_check_branch
      %82 = sbr.rel (%p80) target = $region37
    $region36: #{tpu_custom_call.1} parent=1 // pred_region
      %83 = vst [vmem:[#allocation3] sm:$0xff] 0.0
      %84 = vst [vmem:[#allocation4] sm:$0xff] 0.0
    $region37: #{tpu_custom_call.1} parent=1 // pred_fallthru
      _
    %v85 = vld [vmem:[#allocation5] sm:$0xff]
    %v86 = vld [vmem:[#allocation5 + $0x8] sm:$0xff]
    %v87 = vld [vmem:[#allocation5 + $0x10] sm:$0xff]
    %v88 = vld [vmem:[#allocation5 + $0x18] sm:$0xff]
    %v89 = vld [vmem:[#allocation5 + $0x20] sm:$0xff]
    %v90 = vld [vmem:[#allocation5 + $0x28] sm:$0xff]
    %v91 = vld [vmem:[#allocation5 + $0x30] sm:$0xff]
    %v92 = vld [vmem:[#allocation5 + $0x38] sm:$0xff]
    %v93 = vrot.slane %v87, 4
    %vm94 = vcmask 1047556
    %v95 = vsel %vm94, %v93, %v85
    %v96 = vrot.slane %v85, 4
    %v97 = vsel %vm94, %v87, %v96
    %v99 = vunpack.c.l.s4 1983009808
    %v100 = vunpack.c.0.s8 %v99
    %v101 = vperm.slane %v95, %v100
    %v103 = vunpack.c.l.s4 1983009808
    %v104 = vunpack.c.0.s8 %v103
    %v105 = vperm.slane %v97, %v104
    %v106 = vrot.slane %v88, 4
    %v107 = vsel %vm94, %v106, %v86
    %v108 = vrot.slane %v86, 4
    %v109 = vsel %vm94, %v88, %v108
    %v111 = vunpack.c.l.s4 1983009808
    %v112 = vunpack.c.0.s8 %v111
    %v113 = vperm.slane %v107, %v112
    %v115 = vunpack.c.l.s4 1983009808
    %v116 = vunpack.c.0.s8 %v115
    %v117 = vperm.slane %v109, %v116
    %v118 = vrot.slane %v91, 4
    %v119 = vsel %vm94, %v118, %v89
    %v120 = vrot.slane %v89, 4
    %v121 = vsel %vm94, %v91, %v120
    %v123 = vunpack.c.l.s4 1983009808
    %v124 = vunpack.c.0.s8 %v123
    %v125 = vperm.slane %v119, %v124
    %v127 = vunpack.c.l.s4 1983009808
    %v128 = vunpack.c.0.s8 %v127
    %v129 = vperm.slane %v121, %v128
    %v130 = vrot.slane %v92, 4
    %v131 = vsel %vm94, %v130, %v90
    %v132 = vrot.slane %v90, 4
    %v133 = vsel %vm94, %v92, %v132
    %v135 = vunpack.c.l.s4 1983009808
    %v136 = vunpack.c.0.s8 %v135
    %v137 = vperm.slane %v131, %v136
    %v139 = vunpack.c.l.s4 1983009808
    %v140 = vunpack.c.0.s8 %v139
    %v141 = vperm.slane %v133, %v140
    %v142 = vrot.slane %v113, 4
    %v143 = vsel %vm94, %v142, %v101
    %v144 = vrot.slane %v101, 4
    %v145 = vsel %vm94, %v113, %v144
    %v147 = vunpack.c.l.s4 1934713408
    %v148 = vunpack.c.0.s8 %v147
    %v149 = vperm.slane %v143, %v148
    %v151 = vunpack.c.l.s4 1934713408
    %v152 = vunpack.c.0.s8 %v151
    %v153 = vperm.slane %v145, %v152
    %v154 = vrot.slane %v117, 4
    %v155 = vsel %vm94, %v154, %v105
    %v156 = vrot.slane %v105, 4
    %v157 = vsel %vm94, %v117, %v156
    %v159 = vunpack.c.l.s4 1934713408
    %v160 = vunpack.c.0.s8 %v159
    %v161 = vperm.slane %v155, %v160
    %v163 = vunpack.c.l.s4 1934713408
    %v164 = vunpack.c.0.s8 %v163
    %v165 = vperm.slane %v157, %v164
    %v166 = vrot.slane %v137, 4
    %v167 = vsel %vm94, %v166, %v125
    %v168 = vrot.slane %v125, 4
    %v169 = vsel %vm94, %v137, %v168
    %v171 = vunpack.c.l.s4 1934713408
    %v172 = vunpack.c.0.s8 %v171
    %v173 = vperm.slane %v167, %v172
    %v175 = vunpack.c.l.s4 1934713408
    %v176 = vunpack.c.0.s8 %v175
    %v177 = vperm.slane %v169, %v176
    %v178 = vrot.slane %v141, 4
    %v179 = vsel %vm94, %v178, %v129
    %v180 = vrot.slane %v129, 4
    %v181 = vsel %vm94, %v141, %v180
    %v183 = vunpack.c.l.s4 1934713408
    %v184 = vunpack.c.0.s8 %v183
    %v185 = vperm.slane %v179, %v184
    %v187 = vunpack.c.l.s4 1934713408
    %v188 = vunpack.c.0.s8 %v187
    %v189 = vperm.slane %v181, %v188
    %v190 = vrot.slane %v173, 4
    %v191 = vsel %vm94, %v190, %v149
    %v192 = vrot.slane %v149, 4
    %v193 = vsel %vm94, %v173, %v192
    %v194 = vrot.slane %v177, 4
    %v195 = vsel %vm94, %v194, %v153
    %v196 = vrot.slane %v153, 4
    %v197 = vsel %vm94, %v177, %v196
    %v198 = vrot.slane %v185, 4
    %v199 = vsel %vm94, %v198, %v161
    %v200 = vrot.slane %v161, 4
    %v201 = vsel %vm94, %v185, %v200
    %v202 = vrot.slane %v189, 4
    %v203 = vsel %vm94, %v202, %v165
    %v204 = vrot.slane %v165, 4
    %v205 = vsel %vm94, %v189, %v204
    %v206 = vld [vmem:[#allocation8] sm:$0xff]
    %v207 = vld [vmem:[#allocation8 + $0x8] sm:$0xff]
    %v208 = vld [vmem:[#allocation8 + $0x10] sm:$0xff]
    %v209 = vld [vmem:[#allocation8 + $0x18] sm:$0xff]
    %v210 = vld [vmem:[#allocation8 + $0x20] sm:$0xff]
    %v211 = vld [vmem:[#allocation8 + $0x28] sm:$0xff]
    %v212 = vld [vmem:[#allocation8 + $0x30] sm:$0xff]
    %v213 = vld [vmem:[#allocation8 + $0x38] sm:$0xff]
    %v214 = vld [vmem:[#allocation11] sm:$0xf]
    %v216 = vperm.slane %v214, 0
    %v217 = vperm.slane %v214, 1
    %v218 = vperm.slane %v214, 2
    %v219 = vperm.slane %v214, 3
    %vm224 = vcmask 130048
    %v226 = vsel %vm224, %v191, 0
    %v229 = vsel %vm224, %v193, 0
    %v232 = vsel %vm224, %v195, 0
    %v235 = vsel %vm224, %v197, 0
    %v238 = vsel %vm224, %v199, 0
    %v241 = vsel %vm224, %v201, 0
    %v244 = vsel %vm224, %v203, 0
    %v247 = vsel %vm224, %v205, 0
    %249 = vmatpush.msra.mxu0 0.0
    %250 = vmatpush.msra.mxu0 0.0
    %251 = vmatpush.msra.mxu0 0.0
    %252 = vmatpush.msra.mxu0 0.0
    %253 = vmatpush.msra.mxu0 0.0
    %254 = vmatpush.msra.mxu0 0.0
    %255 = vmatpush.msra.mxu0 0.0
    %256 = vmatpush.msra.mxu0 0.0
    %257 = vmatpush.msra.mxu0 0.0
    %258 = vmatpush.msra.mxu0 0.0
    %259 = vmatpush.msra.mxu0 0.0
    %260 = vmatpush.msra.mxu0 0.0
    %261 = vmatpush.msra.mxu0 0.0
    %262 = vmatpush.msra.mxu0 0.0
    %263 = vmatpush.msra.mxu0 %v210
    %264 = vmatpush.msra.mxu0 %v206
    %265 = vmatmul.f32.gmra.mxu0 %v226
    %v266 = vpop.f32.mrf.mxu0
    %v267 = vadd.f32 %v216, %v266
    %268 = vmatmul.f32.gmra.mxu0 %v229
    %v269 = vpop.f32.mrf.mxu0
    %v270 = vadd.f32 %v216, %v269
    %271 = vmatmul.f32.gmra.mxu0 %v232
    %v272 = vpop.f32.mrf.mxu0
    %v273 = vadd.f32 %v216, %v272
    %274 = vmatmul.f32.gmra.mxu0 %v235
    %v275 = vpop.f32.mrf.mxu0
    %v276 = vadd.f32 %v216, %v275
    %277 = vmatmul.f32.gmra.mxu0 %v238
    %v278 = vpop.f32.mrf.mxu0
    %v279 = vadd.f32 %v216, %v278
    %280 = vmatmul.f32.gmra.mxu0 %v241
    %v281 = vpop.f32.mrf.mxu0
    %v282 = vadd.f32 %v216, %v281
    %283 = vmatmul.f32.gmra.mxu0 %v244
    %v284 = vpop.f32.mrf.mxu0
    %v285 = vadd.f32 %v216, %v284
    %286 = vmatmul.f32.gmra.mxu0 %v247
    %v287 = vpop.f32.mrf.mxu0
    %v288 = vadd.f32 %v216, %v287
    %289 = vdwg.mxu0
    %290 = vmatpush.msra.mxu0 0.0
    %291 = vmatpush.msra.mxu0 0.0
    %292 = vmatpush.msra.mxu0 0.0
    %293 = vmatpush.msra.mxu0 0.0
    %294 = vmatpush.msra.mxu0 0.0
    %295 = vmatpush.msra.mxu0 0.0
    %296 = vmatpush.msra.mxu0 0.0
    %297 = vmatpush.msra.mxu0 0.0
    %298 = vmatpush.msra.mxu0 0.0
    %299 = vmatpush.msra.mxu0 0.0
    %300 = vmatpush.msra.mxu0 0.0
    %301 = vmatpush.msra.mxu0 0.0
    %302 = vmatpush.msra.mxu0 0.0
    %303 = vmatpush.msra.mxu0 0.0
    %304 = vmatpush.msra.mxu0 %v211
    %305 = vmatpush.msra.mxu0 %v207
    %306 = vmatmul.f32.gmra.mxu0 %v226
    %v307 = vpop.f32.mrf.mxu0
    %v308 = vadd.f32 %v217, %v307
    %309 = vmatmul.f32.gmra.mxu0 %v229
    %v310 = vpop.f32.mrf.mxu0
    %v311 = vadd.f32 %v217, %v310
    %312 = vmatmul.f32.gmra.mxu0 %v232
    %v313 = vpop.f32.mrf.mxu0
    %v314 = vadd.f32 %v217, %v313
    %315 = vmatmul.f32.gmra.mxu0 %v235
    %v316 = vpop.f32.mrf.mxu0
    %v317 = vadd.f32 %v217, %v316
    %318 = vmatmul.f32.gmra.mxu0 %v238
    %v319 = vpop.f32.mrf.mxu0
    %v320 = vadd.f32 %v217, %v319
    %321 = vmatmul.f32.gmra.mxu0 %v241
    %v322 = vpop.f32.mrf.mxu0
    %v323 = vadd.f32 %v217, %v322
    %324 = vmatmul.f32.gmra.mxu0 %v244
    %v325 = vpop.f32.mrf.mxu0
    %v326 = vadd.f32 %v217, %v325
    %327 = vmatmul.f32.gmra.mxu0 %v247
    %v328 = vpop.f32.mrf.mxu0
    %v329 = vadd.f32 %v217, %v328
    %330 = vdwg.mxu0
    %331 = vmatpush.msra.mxu0 0.0
    %332 = vmatpush.msra.mxu0 0.0
    %333 = vmatpush.msra.mxu0 0.0
    %334 = vmatpush.msra.mxu0 0.0
    %335 = vmatpush.msra.mxu0 0.0
    %336 = vmatpush.msra.mxu0 0.0
    %337 = vmatpush.msra.mxu0 0.0
    %338 = vmatpush.msra.mxu0 0.0
    %339 = vmatpush.msra.mxu0 0.0
    %340 = vmatpush.msra.mxu0 0.0
    %341 = vmatpush.msra.mxu0 0.0
    %342 = vmatpush.msra.mxu0 0.0
    %343 = vmatpush.msra.mxu0 0.0
    %344 = vmatpush.msra.mxu0 0.0
    %345 = vmatpush.msra.mxu0 %v212
    %346 = vmatpush.msra.mxu0 %v208
    %347 = vmatmul.f32.gmra.mxu0 %v226
    %v348 = vpop.f32.mrf.mxu0
    %v349 = vadd.f32 %v218, %v348
    %350 = vmatmul.f32.gmra.mxu0 %v229
    %v351 = vpop.f32.mrf.mxu0
    %v352 = vadd.f32 %v218, %v351
    %353 = vmatmul.f32.gmra.mxu0 %v232
    %v354 = vpop.f32.mrf.mxu0
    %v355 = vadd.f32 %v218, %v354
    %356 = vmatmul.f32.gmra.mxu0 %v235
    %v357 = vpop.f32.mrf.mxu0
    %v358 = vadd.f32 %v218, %v357
    %359 = vmatmul.f32.gmra.mxu0 %v238
    %v360 = vpop.f32.mrf.mxu0
    %v361 = vadd.f32 %v218, %v360
    %362 = vmatmul.f32.gmra.mxu0 %v241
    %v363 = vpop.f32.mrf.mxu0
    %v364 = vadd.f32 %v218, %v363
    %365 = vmatmul.f32.gmra.mxu0 %v244
    %v366 = vpop.f32.mrf.mxu0
    %v367 = vadd.f32 %v218, %v366
    %368 = vmatmul.f32.gmra.mxu0 %v247
    %v369 = vpop.f32.mrf.mxu0
    %v370 = vadd.f32 %v218, %v369
    %371 = vdwg.mxu0
    %372 = vmatpush.msra.mxu0 0.0
    %373 = vmatpush.msra.mxu0 0.0
    %374 = vmatpush.msra.mxu0 0.0
    %375 = vmatpush.msra.mxu0 0.0
    %376 = vmatpush.msra.mxu0 0.0
    %377 = vmatpush.msra.mxu0 0.0
    %378 = vmatpush.msra.mxu0 0.0
    %379 = vmatpush.msra.mxu0 0.0
    %380 = vmatpush.msra.mxu0 0.0
    %381 = vmatpush.msra.mxu0 0.0
    %382 = vmatpush.msra.mxu0 0.0
    %383 = vmatpush.msra.mxu0 0.0
    %384 = vmatpush.msra.mxu0 0.0
    %385 = vmatpush.msra.mxu0 0.0
    %386 = vmatpush.msra.mxu0 %v213
    %387 = vmatpush.msra.mxu0 %v209
    %388 = vmatmul.f32.gmra.mxu0 %v226
    %v389 = vpop.f32.mrf.mxu0
    %v390 = vadd.f32 %v219, %v389
    %391 = vmatmul.f32.gmra.mxu0 %v229
    %v392 = vpop.f32.mrf.mxu0
    %v393 = vadd.f32 %v219, %v392
    %394 = vmatmul.f32.gmra.mxu0 %v232
    %v395 = vpop.f32.mrf.mxu0
    %v396 = vadd.f32 %v219, %v395
    %397 = vmatmul.f32.gmra.mxu0 %v235
    %v398 = vpop.f32.mrf.mxu0
    %v399 = vadd.f32 %v219, %v398
    %400 = vmatmul.f32.gmra.mxu0 %v238
    %v401 = vpop.f32.mrf.mxu0
    %v402 = vadd.f32 %v219, %v401
    %403 = vmatmul.f32.gmra.mxu0 %v241
    %v404 = vpop.f32.mrf.mxu0
    %v405 = vadd.f32 %v219, %v404
    %406 = vmatmul.f32.gmra.mxu0 %v244
    %v407 = vpop.f32.mrf.mxu0
    %v408 = vadd.f32 %v219, %v407
    %409 = vmatmul.f32.gmra.mxu0 %v247
    %v410 = vpop.f32.mrf.mxu0
    %v411 = vadd.f32 %v219, %v410
    %412 = vdwg.mxu0
    %413 = vst [vmem:[#allocation2] sm:$0xff] %v267
    %414 = vst [vmem:[#allocation2 + $0x8] sm:$0xff] %v308
    %415 = vst [vmem:[#allocation2 + $0x10] sm:$0xff] %v349
    %416 = vst [vmem:[#allocation2 + $0x18] sm:$0xff] %v390
    %417 = vst [vmem:[#allocation2 + $0x20] sm:$0xff] %v270
    %418 = vst [vmem:[#allocation2 + $0x28] sm:$0xff] %v311
    %419 = vst [vmem:[#allocation2 + $0x30] sm:$0xff] %v352
    %420 = vst [vmem:[#allocation2 + $0x38] sm:$0xff] %v393
    %421 = vst [vmem:[#allocation2 + $0x40] sm:$0xff] %v273
    %422 = vst [vmem:[#allocation2 + $0x48] sm:$0xff] %v314
    %423 = vst [vmem:[#allocation2 + $0x50] sm:$0xff] %v355
    %424 = vst [vmem:[#allocation2 + $0x58] sm:$0xff] %v396
    %425 = vst [vmem:[#allocation2 + $0x60] sm:$0xff] %v276
    %426 = vst [vmem:[#allocation2 + $0x68] sm:$0xff] %v317
    %427 = vst [vmem:[#allocation2 + $0x70] sm:$0xff] %v358
    %428 = vst [vmem:[#allocation2 + $0x78] sm:$0xff] %v399
    %429 = vst [vmem:[#allocation2 + $0x80] sm:$0xff] %v279
    %430 = vst [vmem:[#allocation2 + $0x88] sm:$0xff] %v320
    %431 = vst [vmem:[#allocation2 + $0x90] sm:$0xff] %v361
    %432 = vst [vmem:[#allocation2 + $0x98] sm:$0xff] %v402
    %433 = vst [vmem:[#allocation2 + $0xa0] sm:$0xff] %v282
    %434 = vst [vmem:[#allocation2 + $0xa8] sm:$0xff] %v323
    %435 = vst [vmem:[#allocation2 + $0xb0] sm:$0xff] %v364
    %436 = vst [vmem:[#allocation2 + $0xb8] sm:$0xff] %v405
    %437 = vst [vmem:[#allocation2 + $0xc0] sm:$0xff] %v285
    %438 = vst [vmem:[#allocation2 + $0xc8] sm:$0xff] %v326
    %439 = vst [vmem:[#allocation2 + $0xd0] sm:$0xff] %v367
    %440 = vst [vmem:[#allocation2 + $0xd8] sm:$0xff] %v408
    %441 = vst [vmem:[#allocation2 + $0xe0] sm:$0xff] %v288
    %442 = vst [vmem:[#allocation2 + $0xe8] sm:$0xff] %v329
    %443 = vst [vmem:[#allocation2 + $0xf0] sm:$0xff] %v370
    %444 = vst [vmem:[#allocation2 + $0xf8] sm:$0xff] %v411
    %v445 = vld [vmem:[#allocation10] sm:$0xff]
    %v446 = vld [vmem:[#allocation10 + $0x8] sm:$0xff]
    %v447 = vld [vmem:[#allocation10 + $0x10] sm:$0xff]
    %v448 = vld [vmem:[#allocation10 + $0x18] sm:$0xff]
    %v449 = vld [vmem:[#allocation10 + $0x20] sm:$0xff]
    %v450 = vld [vmem:[#allocation10 + $0x28] sm:$0xff]
    %v451 = vld [vmem:[#allocation10 + $0x30] sm:$0xff]
    %v452 = vld [vmem:[#allocation10 + $0x38] sm:$0xff]
    %v453 = vld [vmem:[#allocation10 + $0x40] sm:$0xff]
    %v454 = vld [vmem:[#allocation10 + $0x48] sm:$0xff]
    %v455 = vld [vmem:[#allocation10 + $0x50] sm:$0xff]
    %v456 = vld [vmem:[#allocation10 + $0x58] sm:$0xff]
    %v457 = vld [vmem:[#allocation10 + $0x60] sm:$0xff]
    %v458 = vld [vmem:[#allocation10 + $0x68] sm:$0xff]
    %v459 = vld [vmem:[#allocation10 + $0x70] sm:$0xff]
    %v460 = vld [vmem:[#allocation10 + $0x78] sm:$0xff]
    %v461 = vld [vmem:[#allocation10 + $0x80] sm:$0xff]
    %v462 = vld [vmem:[#allocation10 + $0x88] sm:$0xff]
    %v463 = vld [vmem:[#allocation10 + $0x90] sm:$0xff]
    %v464 = vld [vmem:[#allocation10 + $0x98] sm:$0xff]
    %v465 = vld [vmem:[#allocation10 + $0xa0] sm:$0xff]
    %v466 = vld [vmem:[#allocation10 + $0xa8] sm:$0xff]
    %v467 = vld [vmem:[#allocation10 + $0xb0] sm:$0xff]
    %v468 = vld [vmem:[#allocation10 + $0xb8] sm:$0xff]
    %v469 = vld [vmem:[#allocation10 + $0xc0] sm:$0xff]
    %v470 = vld [vmem:[#allocation10 + $0xc8] sm:$0xff]
    %v471 = vld [vmem:[#allocation10 + $0xd0] sm:$0xff]
    %v472 = vld [vmem:[#allocation10 + $0xd8] sm:$0xff]
    %v473 = vld [vmem:[#allocation10 + $0xe0] sm:$0xff]
    %v474 = vld [vmem:[#allocation10 + $0xe8] sm:$0xff]
    %v475 = vld [vmem:[#allocation10 + $0xf0] sm:$0xff]
    %v476 = vld [vmem:[#allocation10 + $0xf8] sm:$0xff]
    %v477 = vld [vmem:[#allocation10 + $0x100] sm:$0xff]
    %v478 = vld [vmem:[#allocation10 + $0x108] sm:$0xff]
    %v479 = vld [vmem:[#allocation10 + $0x110] sm:$0xff]
    %v480 = vld [vmem:[#allocation10 + $0x118] sm:$0xff]
    %v481 = vld [vmem:[#allocation10 + $0x120] sm:$0xff]
    %v482 = vld [vmem:[#allocation10 + $0x128] sm:$0xff]
    %v483 = vld [vmem:[#allocation10 + $0x130] sm:$0xff]
    %v484 = vld [vmem:[#allocation10 + $0x138] sm:$0xff]
    %v485 = vld [vmem:[#allocation10 + $0x140] sm:$0xff]
    %v486 = vld [vmem:[#allocation10 + $0x148] sm:$0xff]
    %v487 = vld [vmem:[#allocation10 + $0x150] sm:$0xff]
    %v488 = vld [vmem:[#allocation10 + $0x158] sm:$0xff]
    %v489 = vld [vmem:[#allocation10 + $0x160] sm:$0xff]
    %v490 = vld [vmem:[#allocation10 + $0x168] sm:$0xff]
    %v491 = vld [vmem:[#allocation10 + $0x170] sm:$0xff]
    %v492 = vld [vmem:[#allocation10 + $0x178] sm:$0xff]
    %v493 = vld [vmem:[#allocation10 + $0x180] sm:$0xff]
    %v494 = vld [vmem:[#allocation10 + $0x188] sm:$0xff]
    %v495 = vld [vmem:[#allocation10 + $0x190] sm:$0xff]
    %v496 = vld [vmem:[#allocation10 + $0x198] sm:$0xff]
    %v497 = vld [vmem:[#allocation10 + $0x1a0] sm:$0xff]
    %v498 = vld [vmem:[#allocation10 + $0x1a8] sm:$0xff]
    %v499 = vld [vmem:[#allocation10 + $0x1b0] sm:$0xff]
    %v500 = vld [vmem:[#allocation10 + $0x1b8] sm:$0xff]
    %v501 = vld [vmem:[#allocation10 + $0x1c0] sm:$0xff]
    %v502 = vld [vmem:[#allocation10 + $0x1c8] sm:$0xff]
    %v503 = vld [vmem:[#allocation10 + $0x1d0] sm:$0xff]
    %v504 = vld [vmem:[#allocation10 + $0x1d8] sm:$0xff]
    %v505 = vld [vmem:[#allocation10 + $0x1e0] sm:$0xff]
    %v506 = vld [vmem:[#allocation10 + $0x1e8] sm:$0xff]
    %v507 = vld [vmem:[#allocation10 + $0x1f0] sm:$0xff]
    %v508 = vld [vmem:[#allocation10 + $0x1f8] sm:$0xff]
    %v509 = vld [vmem:[#allocation3] sm:$0xff]
    %v510 = vld [vmem:[#allocation4] sm:$0xff]
    %v511 = vld [vmem:[#allocation2] sm:$0xff]
    %v512 = vld [vmem:[#allocation2 + $0x8] sm:$0xff]
    %v513 = vld [vmem:[#allocation2 + $0x10] sm:$0xff]
    %v514 = vld [vmem:[#allocation2 + $0x18] sm:$0xff]
    %515 = vmatpush.msra.mxu0 %v505
    %516 = vmatpush.msra.mxu0 %v501
    %517 = vmatpush.msra.mxu0 %v497
    %518 = vmatpush.msra.mxu0 %v493
    %519 = vmatpush.msra.mxu0 %v489
    %520 = vmatpush.msra.mxu0 %v485
    %521 = vmatpush.msra.mxu0 %v481
    %522 = vmatpush.msra.mxu0 %v477
    %523 = vmatpush.msra.mxu0 %v473
    %524 = vmatpush.msra.mxu0 %v469
    %525 = vmatpush.msra.mxu0 %v465
    %526 = vmatpush.msra.mxu0 %v461
    %527 = vmatpush.msra.mxu0 %v457
    %528 = vmatpush.msra.mxu0 %v453
    %529 = vmatpush.msra.mxu0 %v449
    %530 = vmatpush.msra.mxu0 %v445
    %531 = vmatmul.f32.gmra.mxu0 %v509
    %v532 = vpop.f32.mrf.mxu0
    %v533 = vadd.f32 0.0, %v532
    %534 = vdwg.mxu0
    %535 = vmatpush.msra.mxu0 %v506
    %536 = vmatpush.msra.mxu0 %v502
    %537 = vmatpush.msra.mxu0 %v498
    %538 = vmatpush.msra.mxu0 %v494
    %539 = vmatpush.msra.mxu0 %v490
    %540 = vmatpush.msra.mxu0 %v486
    %541 = vmatpush.msra.mxu0 %v482
    %542 = vmatpush.msra.mxu0 %v478
    %543 = vmatpush.msra.mxu0 %v474
    %544 = vmatpush.msra.mxu0 %v470
    %545 = vmatpush.msra.mxu0 %v466
    %546 = vmatpush.msra.mxu0 %v462
    %547 = vmatpush.msra.mxu0 %v458
    %548 = vmatpush.msra.mxu0 %v454
    %549 = vmatpush.msra.mxu0 %v450
    %550 = vmatpush.msra.mxu0 %v446
    %551 = vmatmul.f32.gmra.mxu0 %v509
    %v552 = vpop.f32.mrf.mxu0
    %v553 = vadd.f32 0.0, %v552
    %554 = vdwg.mxu0
    %555 = vmatpush.msra.mxu0 %v507
    %556 = vmatpush.msra.mxu0 %v503
    %557 = vmatpush.msra.mxu0 %v499
    %558 = vmatpush.msra.mxu0 %v495
    %559 = vmatpush.msra.mxu0 %v491
    %560 = vmatpush.msra.mxu0 %v487
    %561 = vmatpush.msra.mxu0 %v483
    %562 = vmatpush.msra.mxu0 %v479
    %563 = vmatpush.msra.mxu0 %v475
    %564 = vmatpush.msra.mxu0 %v471
    %565 = vmatpush.msra.mxu0 %v467
    %566 = vmatpush.msra.mxu0 %v463
    %567 = vmatpush.msra.mxu0 %v459
    %568 = vmatpush.msra.mxu0 %v455
    %569 = vmatpush.msra.mxu0 %v451
    %570 = vmatpush.msra.mxu0 %v447
    %571 = vmatmul.f32.gmra.mxu0 %v509
    %v572 = vpop.f32.mrf.mxu0
    %v573 = vadd.f32 0.0, %v572
    %574 = vdwg.mxu0
    %575 = vmatpush.msra.mxu0 %v508
    %576 = vmatpush.msra.mxu0 %v504
    %577 = vmatpush.msra.mxu0 %v500
    %578 = vmatpush.msra.mxu0 %v496
    %579 = vmatpush.msra.mxu0 %v492
    %580 = vmatpush.msra.mxu0 %v488
    %581 = vmatpush.msra.mxu0 %v484
    %582 = vmatpush.msra.mxu0 %v480
    %583 = vmatpush.msra.mxu0 %v476
    %584 = vmatpush.msra.mxu0 %v472
    %585 = vmatpush.msra.mxu0 %v468
    %586 = vmatpush.msra.mxu0 %v464
    %587 = vmatpush.msra.mxu0 %v460
    %588 = vmatpush.msra.mxu0 %v456
    %589 = vmatpush.msra.mxu0 %v452
    %590 = vmatpush.msra.mxu0 %v448
    %591 = vmatmul.f32.gmra.mxu0 %v509
    %v592 = vpop.f32.mrf.mxu0
    %v593 = vadd.f32 0.0, %v592
    %594 = vdwg.mxu0
    %v595 = vadd.f32 %v511, %v533
    %v596 = vadd.f32 %v512, %v553
    %v597 = vadd.f32 %v513, %v573
    %v598 = vadd.f32 %v514, %v593
    %v599 = vxor.u32 %v595, 2147483648
    %v600 = vmul.f32 %v599, 1.442695
    %v601 = vpow.pop %v600
    %v602 = vadd.f32 %v601, 1.0
    %v603 = vrcp.pop %v602
    %v604 = vmul.f32 %v602, %v603
    %v605 = vsub.f32 1.0, %v604
    %v606 = vmul.f32 %v603, %v605
    %v607 = vadd.f32 %v603, %v606
    %vm608 = vweird.f32 %v602
    %vm609 = vweird.f32 %v603
    %vm610 = vmor %vm608, %vm609
    %v611 = vsel %vm610, %v603, %v607
    %v612 = vand.u32 2147483647, %v602
    %vm613 = vcmp.eq.f32.partialorder %v612, 8.507059e+37
    %v614 = vand.u32 %v602, 2147483648
    %v615 = vor.u32 1.1754944e-38, %v614
    %v616 = vsel %vm613, %v615, %v611
    %v617 = vmul.f32 1.0, %v616
    %v618 = vxor.u32 %v596, 2147483648
    %v619 = vmul.f32 %v618, 1.442695
    %v620 = vpow.pop %v619
    %v621 = vadd.f32 %v620, 1.0
    %v622 = vrcp.pop %v621
    %v623 = vmul.f32 %v621, %v622
    %v624 = vsub.f32 1.0, %v623
    %v625 = vmul.f32 %v622, %v624
    %v626 = vadd.f32 %v622, %v625
    %vm627 = vweird.f32 %v621
    %vm628 = vweird.f32 %v622
    %vm629 = vmor %vm627, %vm628
    %v630 = vsel %vm629, %v622, %v626
    %v631 = vand.u32 2147483647, %v621
    %vm632 = vcmp.eq.f32.partialorder %v631, 8.507059e+37
    %v633 = vand.u32 %v621, 2147483648
    %v634 = vor.u32 1.1754944e-38, %v633
    %v635 = vsel %vm632, %v634, %v630
    %v636 = vmul.f32 1.0, %v635
    %v637 = vtanh.pop %v597
    %v638 = vxor.u32 %v598, 2147483648
    %v639 = vmul.f32 %v638, 1.442695
    %v640 = vpow.pop %v639
    %v641 = vadd.f32 %v640, 1.0
    %v642 = vrcp.pop %v641
    %v643 = vmul.f32 %v641, %v642
    %v644 = vsub.f32 1.0, %v643
    %v645 = vmul.f32 %v642, %v644
    %v646 = vadd.f32 %v642, %v645
    %vm647 = vweird.f32 %v641
    %vm648 = vweird.f32 %v642
    %vm649 = vmor %vm647, %vm648
    %v650 = vsel %vm649, %v642, %v646
    %v651 = vand.u32 2147483647, %v641
    %vm652 = vcmp.eq.f32.partialorder %v651, 8.507059e+37
    %v653 = vand.u32 %v641, 2147483648
    %v654 = vor.u32 1.1754944e-38, %v653
    %v655 = vsel %vm652, %v654, %v650
    %v656 = vmul.f32 1.0, %v655
    %v657 = vmul.f32 %v636, %v510
    %v658 = vmul.f32 %v617, %v637
    %v659 = vadd.f32 %v657, %v658
    %v660 = vtanh.pop %v659
    %v661 = vmul.f32 %v656, %v660
    %s662 = scalar_lea.vmem [#allocation2], 32
    %v663 = vld [vmem:[%s662] sm:$0xff]
    %v664 = vld [vmem:[%s662 + $0x8] sm:$0xff]
    %v665 = vld [vmem:[%s662 + $0x10] sm:$0xff]
    %v666 = vld [vmem:[%s662 + $0x18] sm:$0xff]
    %667 = vmatpush.msra.mxu0 %v505
    %668 = vmatpush.msra.mxu0 %v501
    %669 = vmatpush.msra.mxu0 %v497
    %670 = vmatpush.msra.mxu0 %v493
    %671 = vmatpush.msra.mxu0 %v489
    %672 = vmatpush.msra.mxu0 %v485
    %673 = vmatpush.msra.mxu0 %v481
    %674 = vmatpush.msra.mxu0 %v477
    %675 = vmatpush.msra.mxu0 %v473
    %676 = vmatpush.msra.mxu0 %v469
    %677 = vmatpush.msra.mxu0 %v465
    %678 = vmatpush.msra.mxu0 %v461
    %679 = vmatpush.msra.mxu0 %v457
    %680 = vmatpush.msra.mxu0 %v453
    %681 = vmatpush.msra.mxu0 %v449
    %682 = vmatpush.msra.mxu0 %v445
    %683 = vmatmul.f32.gmra.mxu0 %v661
    %v684 = vpop.f32.mrf.mxu0
    %v685 = vadd.f32 0.0, %v684
    %686 = vdwg.mxu0
    %687 = vmatpush.msra.mxu0 %v506
    %688 = vmatpush.msra.mxu0 %v502
    %689 = vmatpush.msra.mxu0 %v498
    %690 = vmatpush.msra.mxu0 %v494
    %691 = vmatpush.msra.mxu0 %v490
    %692 = vmatpush.msra.mxu0 %v486
    %693 = vmatpush.msra.mxu0 %v482
    %694 = vmatpush.msra.mxu0 %v478
    %695 = vmatpush.msra.mxu0 %v474
    %696 = vmatpush.msra.mxu0 %v470
    %697 = vmatpush.msra.mxu0 %v466
    %698 = vmatpush.msra.mxu0 %v462
    %699 = vmatpush.msra.mxu0 %v458
    %700 = vmatpush.msra.mxu0 %v454
    %701 = vmatpush.msra.mxu0 %v450
    %702 = vmatpush.msra.mxu0 %v446
    %703 = vmatmul.f32.gmra.mxu0 %v661
    %v704 = vpop.f32.mrf.mxu0
    %v705 = vadd.f32 0.0, %v704
    %706 = vdwg.mxu0
    %707 = vmatpush.msra.mxu0 %v507
    %708 = vmatpush.msra.mxu0 %v503
    %709 = vmatpush.msra.mxu0 %v499
    %710 = vmatpush.msra.mxu0 %v495
    %711 = vmatpush.msra.mxu0 %v491
    %712 = vmatpush.msra.mxu0 %v487
    %713 = vmatpush.msra.mxu0 %v483
    %714 = vmatpush.msra.mxu0 %v479
    %715 = vmatpush.msra.mxu0 %v475
    %716 = vmatpush.msra.mxu0 %v471
    %717 = vmatpush.msra.mxu0 %v467
    %718 = vmatpush.msra.mxu0 %v463
    %719 = vmatpush.msra.mxu0 %v459
    %720 = vmatpush.msra.mxu0 %v455
    %721 = vmatpush.msra.mxu0 %v451
    %722 = vmatpush.msra.mxu0 %v447
    %723 = vmatmul.f32.gmra.mxu0 %v661
    %v724 = vpop.f32.mrf.mxu0
    %v725 = vadd.f32 0.0, %v724
    %726 = vdwg.mxu0
    %727 = vmatpush.msra.mxu0 %v508
    %728 = vmatpush.msra.mxu0 %v504
    %729 = vmatpush.msra.mxu0 %v500
    %730 = vmatpush.msra.mxu0 %v496
    %731 = vmatpush.msra.mxu0 %v492
    %732 = vmatpush.msra.mxu0 %v488
    %733 = vmatpush.msra.mxu0 %v484
    %734 = vmatpush.msra.mxu0 %v480
    %735 = vmatpush.msra.mxu0 %v476
    %736 = vmatpush.msra.mxu0 %v472
    %737 = vmatpush.msra.mxu0 %v468
    %738 = vmatpush.msra.mxu0 %v464
    %739 = vmatpush.msra.mxu0 %v460
    %740 = vmatpush.msra.mxu0 %v456
    %741 = vmatpush.msra.mxu0 %v452
    %742 = vmatpush.msra.mxu0 %v448
    %743 = vmatmul.f32.gmra.mxu0 %v661
    %v744 = vpop.f32.mrf.mxu0
    %v745 = vadd.f32 0.0, %v744
    %746 = vdwg.mxu0
    %v747 = vadd.f32 %v663, %v685
    %v748 = vadd.f32 %v664, %v705
    %v749 = vadd.f32 %v665, %v725
    %v750 = vadd.f32 %v666, %v745
    %v751 = vxor.u32 %v747, 2147483648
    %v752 = vmul.f32 %v751, 1.442695
    %v753 = vpow.pop %v752
    %v754 = vadd.f32 %v753, 1.0
    %v755 = vrcp.pop %v754
    %v756 = vmul.f32 %v754, %v755
    %v757 = vsub.f32 1.0, %v756
    %v758 = vmul.f32 %v755, %v757
    %v759 = vadd.f32 %v755, %v758
    %vm760 = vweird.f32 %v754
    %vm761 = vweird.f32 %v755
    %vm762 = vmor %vm760, %vm761
    %v763 = vsel %vm762, %v755, %v759
    %v764 = vand.u32 2147483647, %v754
    %vm765 = vcmp.eq.f32.partialorder %v764, 8.507059e+37
    %v766 = vand.u32 %v754, 2147483648
    %v767 = vor.u32 1.1754944e-38, %v766
    %v768 = vsel %vm765, %v767, %v763
    %v769 = vmul.f32 1.0, %v768
    %v770 = vxor.u32 %v748, 2147483648
    %v771 = vmul.f32 %v770, 1.442695
    %v772 = vpow.pop %v771
    %v773 = vadd.f32 %v772, 1.0
    %v774 = vrcp.pop %v773
    %v775 = vmul.f32 %v773, %v774
    %v776 = vsub.f32 1.0, %v775
    %v777 = vmul.f32 %v774, %v776
    %v778 = vadd.f32 %v774, %v777
    %vm779 = vweird.f32 %v773
    %vm780 = vweird.f32 %v774
    %vm781 = vmor %vm779, %vm780
    %v782 = vsel %vm781, %v774, %v778
    %v783 = vand.u32 2147483647, %v773
    %vm784 = vcmp.eq.f32.partialorder %v783, 8.507059e+37
    %v785 = vand.u32 %v773, 2147483648
    %v786 = vor.u32 1.1754944e-38, %v785
    %v787 = vsel %vm784, %v786, %v782
    %v788 = vmul.f32 1.0, %v787
    %v789 = vtanh.pop %v749
    %v790 = vxor.u32 %v750, 2147483648
    %v791 = vmul.f32 %v790, 1.442695
    %v792 = vpow.pop %v791
    %v793 = vadd.f32 %v792, 1.0
    %v794 = vrcp.pop %v793
    %v795 = vmul.f32 %v793, %v794
    %v796 = vsub.f32 1.0, %v795
    %v797 = vmul.f32 %v794, %v796
    %v798 = vadd.f32 %v794, %v797
    %vm799 = vweird.f32 %v793
    %vm800 = vweird.f32 %v794
    %vm801 = vmor %vm799, %vm800
    %v802 = vsel %vm801, %v794, %v798
    %v803 = vand.u32 2147483647, %v793
    %vm804 = vcmp.eq.f32.partialorder %v803, 8.507059e+37
    %v805 = vand.u32 %v793, 2147483648
    %v806 = vor.u32 1.1754944e-38, %v805
    %v807 = vsel %vm804, %v806, %v802
    %v808 = vmul.f32 1.0, %v807
    %v809 = vmul.f32 %v788, %v659
    %v810 = vmul.f32 %v769, %v789
    %v811 = vadd.f32 %v809, %v810
    %v812 = vtanh.pop %v811
    %v813 = vmul.f32 %v808, %v812
    %s814 = scalar_lea.vmem [#allocation2], 64
    %v815 = vld [vmem:[%s814] sm:$0xff]
    %v816 = vld [vmem:[%s814 + $0x8] sm:$0xff]
    %v817 = vld [vmem:[%s814 + $0x10] sm:$0xff]
    %v818 = vld [vmem:[%s814 + $0x18] sm:$0xff]
    %819 = vmatpush.msra.mxu0 %v505
    %820 = vmatpush.msra.mxu0 %v501
    %821 = vmatpush.msra.mxu0 %v497
    %822 = vmatpush.msra.mxu0 %v493
    %823 = vmatpush.msra.mxu0 %v489
    %824 = vmatpush.msra.mxu0 %v485
    %825 = vmatpush.msra.mxu0 %v481
    %826 = vmatpush.msra.mxu0 %v477
    %827 = vmatpush.msra.mxu0 %v473
    %828 = vmatpush.msra.mxu0 %v469
    %829 = vmatpush.msra.mxu0 %v465
    %830 = vmatpush.msra.mxu0 %v461
    %831 = vmatpush.msra.mxu0 %v457
    %832 = vmatpush.msra.mxu0 %v453
    %833 = vmatpush.msra.mxu0 %v449
    %834 = vmatpush.msra.mxu0 %v445
    %835 = vmatmul.f32.gmra.mxu0 %v813
    %v836 = vpop.f32.mrf.mxu0
    %v837 = vadd.f32 0.0, %v836
    %838 = vdwg.mxu0
    %839 = vmatpush.msra.mxu0 %v506
    %840 = vmatpush.msra.mxu0 %v502
    %841 = vmatpush.msra.mxu0 %v498
    %842 = vmatpush.msra.mxu0 %v494
    %843 = vmatpush.msra.mxu0 %v490
    %844 = vmatpush.msra.mxu0 %v486
    %845 = vmatpush.msra.mxu0 %v482
    %846 = vmatpush.msra.mxu0 %v478
    %847 = vmatpush.msra.mxu0 %v474
    %848 = vmatpush.msra.mxu0 %v470
    %849 = vmatpush.msra.mxu0 %v466
    %850 = vmatpush.msra.mxu0 %v462
    %851 = vmatpush.msra.mxu0 %v458
    %852 = vmatpush.msra.mxu0 %v454
    %853 = vmatpush.msra.mxu0 %v450
    %854 = vmatpush.msra.mxu0 %v446
    %855 = vmatmul.f32.gmra.mxu0 %v813
    %v856 = vpop.f32.mrf.mxu0
    %v857 = vadd.f32 0.0, %v856
    %858 = vdwg.mxu0
    %859 = vmatpush.msra.mxu0 %v507
    %860 = vmatpush.msra.mxu0 %v503
    %861 = vmatpush.msra.mxu0 %v499
    %862 = vmatpush.msra.mxu0 %v495
    %863 = vmatpush.msra.mxu0 %v491
    %864 = vmatpush.msra.mxu0 %v487
    %865 = vmatpush.msra.mxu0 %v483
    %866 = vmatpush.msra.mxu0 %v479
    %867 = vmatpush.msra.mxu0 %v475
    %868 = vmatpush.msra.mxu0 %v471
    %869 = vmatpush.msra.mxu0 %v467
    %870 = vmatpush.msra.mxu0 %v463
    %871 = vmatpush.msra.mxu0 %v459
    %872 = vmatpush.msra.mxu0 %v455
    %873 = vmatpush.msra.mxu0 %v451
    %874 = vmatpush.msra.mxu0 %v447
    %875 = vmatmul.f32.gmra.mxu0 %v813
    %v876 = vpop.f32.mrf.mxu0
    %v877 = vadd.f32 0.0, %v876
    %878 = vdwg.mxu0
    %879 = vmatpush.msra.mxu0 %v508
    %880 = vmatpush.msra.mxu0 %v504
    %881 = vmatpush.msra.mxu0 %v500
    %882 = vmatpush.msra.mxu0 %v496
    %883 = vmatpush.msra.mxu0 %v492
    %884 = vmatpush.msra.mxu0 %v488
    %885 = vmatpush.msra.mxu0 %v484
    %886 = vmatpush.msra.mxu0 %v480
    %887 = vmatpush.msra.mxu0 %v476
    %888 = vmatpush.msra.mxu0 %v472
    %889 = vmatpush.msra.mxu0 %v468
    %890 = vmatpush.msra.mxu0 %v464
    %891 = vmatpush.msra.mxu0 %v460
    %892 = vmatpush.msra.mxu0 %v456
    %893 = vmatpush.msra.mxu0 %v452
    %894 = vmatpush.msra.mxu0 %v448
    %895 = vmatmul.f32.gmra.mxu0 %v813
    %v896 = vpop.f32.mrf.mxu0
    %v897 = vadd.f32 0.0, %v896
    %898 = vdwg.mxu0
    %v899 = vadd.f32 %v815, %v837
    %v900 = vadd.f32 %v816, %v857
    %v901 = vadd.f32 %v817, %v877
    %v902 = vadd.f32 %v818, %v897
    %v903 = vxor.u32 %v899, 2147483648
    %v904 = vmul.f32 %v903, 1.442695
    %v905 = vpow.pop %v904
    %v906 = vadd.f32 %v905, 1.0
    %v907 = vrcp.pop %v906
    %v908 = vmul.f32 %v906, %v907
    %v909 = vsub.f32 1.0, %v908
    %v910 = vmul.f32 %v907, %v909
    %v911 = vadd.f32 %v907, %v910
    %vm912 = vweird.f32 %v906
    %vm913 = vweird.f32 %v907
    %vm914 = vmor %vm912, %vm913
    %v915 = vsel %vm914, %v907, %v911
    %v916 = vand.u32 2147483647, %v906
    %vm917 = vcmp.eq.f32.partialorder %v916, 8.507059e+37
    %v918 = vand.u32 %v906, 2147483648
    %v919 = vor.u32 1.1754944e-38, %v918
    %v920 = vsel %vm917, %v919, %v915
    %v921 = vmul.f32 1.0, %v920
    %v922 = vxor.u32 %v900, 2147483648
    %v923 = vmul.f32 %v922, 1.442695
    %v924 = vpow.pop %v923
    %v925 = vadd.f32 %v924, 1.0
    %v926 = vrcp.pop %v925
    %v927 = vmul.f32 %v925, %v926
    %v928 = vsub.f32 1.0, %v927
    %v929 = vmul.f32 %v926, %v928
    %v930 = vadd.f32 %v926, %v929
    %vm931 = vweird.f32 %v925
    %vm932 = vweird.f32 %v926
    %vm933 = vmor %vm931, %vm932
    %v934 = vsel %vm933, %v926, %v930
    %v935 = vand.u32 2147483647, %v925
    %vm936 = vcmp.eq.f32.partialorder %v935, 8.507059e+37
    %v937 = vand.u32 %v925, 2147483648
    %v938 = vor.u32 1.1754944e-38, %v937
    %v939 = vsel %vm936, %v938, %v934
    %v940 = vmul.f32 1.0, %v939
    %v941 = vtanh.pop %v901
    %v942 = vxor.u32 %v902, 2147483648
    %v943 = vmul.f32 %v942, 1.442695
    %v944 = vpow.pop %v943
    %v945 = vadd.f32 %v944, 1.0
    %v946 = vrcp.pop %v945
    %v947 = vmul.f32 %v945, %v946
    %v948 = vsub.f32 1.0, %v947
    %v949 = vmul.f32 %v946, %v948
    %v950 = vadd.f32 %v946, %v949
    %vm951 = vweird.f32 %v945
    %vm952 = vweird.f32 %v946
    %vm953 = vmor %vm951, %vm952
    %v954 = vsel %vm953, %v946, %v950
    %v955 = vand.u32 2147483647, %v945
    %vm956 = vcmp.eq.f32.partialorder %v955, 8.507059e+37
    %v957 = vand.u32 %v945, 2147483648
    %v958 = vor.u32 1.1754944e-38, %v957
    %v959 = vsel %vm956, %v958, %v954
    %v960 = vmul.f32 1.0, %v959
    %v961 = vmul.f32 %v940, %v811
    %v962 = vmul.f32 %v921, %v941
    %v963 = vadd.f32 %v961, %v962
    %v964 = vtanh.pop %v963
    %v965 = vmul.f32 %v960, %v964
    %s966 = scalar_lea.vmem [#allocation2], 96
    %v967 = vld [vmem:[%s966] sm:$0xff]
    %v968 = vld [vmem:[%s966 + $0x8] sm:$0xff]
    %v969 = vld [vmem:[%s966 + $0x10] sm:$0xff]
    %v970 = vld [vmem:[%s966 + $0x18] sm:$0xff]
    %971 = vmatpush.msra.mxu0 %v505
    %972 = vmatpush.msra.mxu0 %v501
    %973 = vmatpush.msra.mxu0 %v497
    %974 = vmatpush.msra.mxu0 %v493
    %975 = vmatpush.msra.mxu0 %v489
    %976 = vmatpush.msra.mxu0 %v485
    %977 = vmatpush.msra.mxu0 %v481
    %978 = vmatpush.msra.mxu0 %v477
    %979 = vmatpush.msra.mxu0 %v473
    %980 = vmatpush.msra.mxu0 %v469
    %981 = vmatpush.msra.mxu0 %v465
    %982 = vmatpush.msra.mxu0 %v461
    %983 = vmatpush.msra.mxu0 %v457
    %984 = vmatpush.msra.mxu0 %v453
    %985 = vmatpush.msra.mxu0 %v449
    %986 = vmatpush.msra.mxu0 %v445
    %987 = vmatmul.f32.gmra.mxu0 %v965
    %v988 = vpop.f32.mrf.mxu0
    %v989 = vadd.f32 0.0, %v988
    %990 = vdwg.mxu0
    %991 = vmatpush.msra.mxu0 %v506
    %992 = vmatpush.msra.mxu0 %v502
    %993 = vmatpush.msra.mxu0 %v498
    %994 = vmatpush.msra.mxu0 %v494
    %995 = vmatpush.msra.mxu0 %v490
    %996 = vmatpush.msra.mxu0 %v486
    %997 = vmatpush.msra.mxu0 %v482
    %998 = vmatpush.msra.mxu0 %v478
    %999 = vmatpush.msra.mxu0 %v474
    %1000 = vmatpush.msra.mxu0 %v470
    %1001 = vmatpush.msra.mxu0 %v466
    %1002 = vmatpush.msra.mxu0 %v462
    %1003 = vmatpush.msra.mxu0 %v458
    %1004 = vmatpush.msra.mxu0 %v454
    %1005 = vmatpush.msra.mxu0 %v450
    %1006 = vmatpush.msra.mxu0 %v446
    %1007 = vmatmul.f32.gmra.mxu0 %v965
    %v1008 = vpop.f32.mrf.mxu0
    %v1009 = vadd.f32 0.0, %v1008
    %1010 = vdwg.mxu0
    %1011 = vmatpush.msra.mxu0 %v507
    %1012 = vmatpush.msra.mxu0 %v503
    %1013 = vmatpush.msra.mxu0 %v499
    %1014 = vmatpush.msra.mxu0 %v495
    %1015 = vmatpush.msra.mxu0 %v491
    %1016 = vmatpush.msra.mxu0 %v487
    %1017 = vmatpush.msra.mxu0 %v483
    %1018 = vmatpush.msra.mxu0 %v479
    %1019 = vmatpush.msra.mxu0 %v475
    %1020 = vmatpush.msra.mxu0 %v471
    %1021 = vmatpush.msra.mxu0 %v467
    %1022 = vmatpush.msra.mxu0 %v463
    %1023 = vmatpush.msra.mxu0 %v459
    %1024 = vmatpush.msra.mxu0 %v455
    %1025 = vmatpush.msra.mxu0 %v451
    %1026 = vmatpush.msra.mxu0 %v447
    %1027 = vmatmul.f32.gmra.mxu0 %v965
    %v1028 = vpop.f32.mrf.mxu0
    %v1029 = vadd.f32 0.0, %v1028
    %1030 = vdwg.mxu0
    %1031 = vmatpush.msra.mxu0 %v508
    %1032 = vmatpush.msra.mxu0 %v504
    %1033 = vmatpush.msra.mxu0 %v500
    %1034 = vmatpush.msra.mxu0 %v496
    %1035 = vmatpush.msra.mxu0 %v492
    %1036 = vmatpush.msra.mxu0 %v488
    %1037 = vmatpush.msra.mxu0 %v484
    %1038 = vmatpush.msra.mxu0 %v480
    %1039 = vmatpush.msra.mxu0 %v476
    %1040 = vmatpush.msra.mxu0 %v472
    %1041 = vmatpush.msra.mxu0 %v468
    %1042 = vmatpush.msra.mxu0 %v464
    %1043 = vmatpush.msra.mxu0 %v460
    %1044 = vmatpush.msra.mxu0 %v456
    %1045 = vmatpush.msra.mxu0 %v452
    %1046 = vmatpush.msra.mxu0 %v448
    %1047 = vmatmul.f32.gmra.mxu0 %v965
    %v1048 = vpop.f32.mrf.mxu0
    %v1049 = vadd.f32 0.0, %v1048
    %1050 = vdwg.mxu0
    %v1051 = vadd.f32 %v967, %v989
    %v1052 = vadd.f32 %v968, %v1009
    %v1053 = vadd.f32 %v969, %v1029
    %v1054 = vadd.f32 %v970, %v1049
    %v1055 = vxor.u32 %v1051, 2147483648
    %v1056 = vmul.f32 %v1055, 1.442695
    %v1057 = vpow.pop %v1056
    %v1058 = vadd.f32 %v1057, 1.0
    %v1059 = vrcp.pop %v1058
    %v1060 = vmul.f32 %v1058, %v1059
    %v1061 = vsub.f32 1.0, %v1060
    %v1062 = vmul.f32 %v1059, %v1061
    %v1063 = vadd.f32 %v1059, %v1062
    %vm1064 = vweird.f32 %v1058
    %vm1065 = vweird.f32 %v1059
    %vm1066 = vmor %vm1064, %vm1065
    %v1067 = vsel %vm1066, %v1059, %v1063
    %v1068 = vand.u32 2147483647, %v1058
    %vm1069 = vcmp.eq.f32.partialorder %v1068, 8.507059e+37
    %v1070 = vand.u32 %v1058, 2147483648
    %v1071 = vor.u32 1.1754944e-38, %v1070
    %v1072 = vsel %vm1069, %v1071, %v1067
    %v1073 = vmul.f32 1.0, %v1072
    %v1074 = vxor.u32 %v1052, 2147483648
    %v1075 = vmul.f32 %v1074, 1.442695
    %v1076 = vpow.pop %v1075
    %v1077 = vadd.f32 %v1076, 1.0
    %v1078 = vrcp.pop %v1077
    %v1079 = vmul.f32 %v1077, %v1078
    %v1080 = vsub.f32 1.0, %v1079
    %v1081 = vmul.f32 %v1078, %v1080
    %v1082 = vadd.f32 %v1078, %v1081
    %vm1083 = vweird.f32 %v1077
    %vm1084 = vweird.f32 %v1078
    %vm1085 = vmor %vm1083, %vm1084
    %v1086 = vsel %vm1085, %v1078, %v1082
    %v1087 = vand.u32 2147483647, %v1077
    %vm1088 = vcmp.eq.f32.partialorder %v1087, 8.507059e+37
    %v1089 = vand.u32 %v1077, 2147483648
    %v1090 = vor.u32 1.1754944e-38, %v1089
    %v1091 = vsel %vm1088, %v1090, %v1086
    %v1092 = vmul.f32 1.0, %v1091
    %v1093 = vtanh.pop %v1053
    %v1094 = vxor.u32 %v1054, 2147483648
    %v1095 = vmul.f32 %v1094, 1.442695
    %v1096 = vpow.pop %v1095
    %v1097 = vadd.f32 %v1096, 1.0
    %v1098 = vrcp.pop %v1097
    %v1099 = vmul.f32 %v1097, %v1098
    %v1100 = vsub.f32 1.0, %v1099
    %v1101 = vmul.f32 %v1098, %v1100
    %v1102 = vadd.f32 %v1098, %v1101
    %vm1103 = vweird.f32 %v1097
    %vm1104 = vweird.f32 %v1098
    %vm1105 = vmor %vm1103, %vm1104
    %v1106 = vsel %vm1105, %v1098, %v1102
    %v1107 = vand.u32 2147483647, %v1097
    %vm1108 = vcmp.eq.f32.partialorder %v1107, 8.507059e+37
    %v1109 = vand.u32 %v1097, 2147483648
    %v1110 = vor.u32 1.1754944e-38, %v1109
    %v1111 = vsel %vm1108, %v1110, %v1106
    %v1112 = vmul.f32 1.0, %v1111
    %v1113 = vmul.f32 %v1092, %v963
    %v1114 = vmul.f32 %v1073, %v1093
    %v1115 = vadd.f32 %v1113, %v1114
    %v1116 = vtanh.pop %v1115
    %v1117 = vmul.f32 %v1112, %v1116
    %s1118 = scalar_lea.vmem [#allocation2], 128
    %v1119 = vld [vmem:[%s1118] sm:$0xff]
    %v1120 = vld [vmem:[%s1118 + $0x8] sm:$0xff]
    %v1121 = vld [vmem:[%s1118 + $0x10] sm:$0xff]
    %v1122 = vld [vmem:[%s1118 + $0x18] sm:$0xff]
    %1123 = vmatpush.msra.mxu0 %v505
    %1124 = vmatpush.msra.mxu0 %v501
    %1125 = vmatpush.msra.mxu0 %v497
    %1126 = vmatpush.msra.mxu0 %v493
    %1127 = vmatpush.msra.mxu0 %v489
    %1128 = vmatpush.msra.mxu0 %v485
    %1129 = vmatpush.msra.mxu0 %v481
    %1130 = vmatpush.msra.mxu0 %v477
    %1131 = vmatpush.msra.mxu0 %v473
    %1132 = vmatpush.msra.mxu0 %v469
    %1133 = vmatpush.msra.mxu0 %v465
    %1134 = vmatpush.msra.mxu0 %v461
    %1135 = vmatpush.msra.mxu0 %v457
    %1136 = vmatpush.msra.mxu0 %v453
    %1137 = vmatpush.msra.mxu0 %v449
    %1138 = vmatpush.msra.mxu0 %v445
    %1139 = vmatmul.f32.gmra.mxu0 %v1117
    %v1140 = vpop.f32.mrf.mxu0
    %v1141 = vadd.f32 0.0, %v1140
    %1142 = vdwg.mxu0
    %1143 = vmatpush.msra.mxu0 %v506
    %1144 = vmatpush.msra.mxu0 %v502
    %1145 = vmatpush.msra.mxu0 %v498
    %1146 = vmatpush.msra.mxu0 %v494
    %1147 = vmatpush.msra.mxu0 %v490
    %1148 = vmatpush.msra.mxu0 %v486
    %1149 = vmatpush.msra.mxu0 %v482
    %1150 = vmatpush.msra.mxu0 %v478
    %1151 = vmatpush.msra.mxu0 %v474
    %1152 = vmatpush.msra.mxu0 %v470
    %1153 = vmatpush.msra.mxu0 %v466
    %1154 = vmatpush.msra.mxu0 %v462
    %1155 = vmatpush.msra.mxu0 %v458
    %1156 = vmatpush.msra.mxu0 %v454
    %1157 = vmatpush.msra.mxu0 %v450
    %1158 = vmatpush.msra.mxu0 %v446
    %1159 = vmatmul.f32.gmra.mxu0 %v1117
    %v1160 = vpop.f32.mrf.mxu0
    %v1161 = vadd.f32 0.0, %v1160
    %1162 = vdwg.mxu0
    %1163 = vmatpush.msra.mxu0 %v507
    %1164 = vmatpush.msra.mxu0 %v503
    %1165 = vmatpush.msra.mxu0 %v499
    %1166 = vmatpush.msra.mxu0 %v495
    %1167 = vmatpush.msra.mxu0 %v491
    %1168 = vmatpush.msra.mxu0 %v487
    %1169 = vmatpush.msra.mxu0 %v483
    %1170 = vmatpush.msra.mxu0 %v479
    %1171 = vmatpush.msra.mxu0 %v475
    %1172 = vmatpush.msra.mxu0 %v471
    %1173 = vmatpush.msra.mxu0 %v467
    %1174 = vmatpush.msra.mxu0 %v463
    %1175 = vmatpush.msra.mxu0 %v459
    %1176 = vmatpush.msra.mxu0 %v455
    %1177 = vmatpush.msra.mxu0 %v451
    %1178 = vmatpush.msra.mxu0 %v447
    %1179 = vmatmul.f32.gmra.mxu0 %v1117
    %v1180 = vpop.f32.mrf.mxu0
    %v1181 = vadd.f32 0.0, %v1180
    %1182 = vdwg.mxu0
    %1183 = vmatpush.msra.mxu0 %v508
    %1184 = vmatpush.msra.mxu0 %v504
    %1185 = vmatpush.msra.mxu0 %v500
    %1186 = vmatpush.msra.mxu0 %v496
    %1187 = vmatpush.msra.mxu0 %v492
    %1188 = vmatpush.msra.mxu0 %v488
    %1189 = vmatpush.msra.mxu0 %v484
    %1190 = vmatpush.msra.mxu0 %v480
    %1191 = vmatpush.msra.mxu0 %v476
    %1192 = vmatpush.msra.mxu0 %v472
    %1193 = vmatpush.msra.mxu0 %v468
    %1194 = vmatpush.msra.mxu0 %v464
    %1195 = vmatpush.msra.mxu0 %v460
    %1196 = vmatpush.msra.mxu0 %v456
    %1197 = vmatpush.msra.mxu0 %v452
    %1198 = vmatpush.msra.mxu0 %v448
    %1199 = vmatmul.f32.gmra.mxu0 %v1117
    %v1200 = vpop.f32.mrf.mxu0
    %v1201 = vadd.f32 0.0, %v1200
    %1202 = vdwg.mxu0
    %v1203 = vadd.f32 %v1119, %v1141
    %v1204 = vadd.f32 %v1120, %v1161
    %v1205 = vadd.f32 %v1121, %v1181
    %v1206 = vadd.f32 %v1122, %v1201
    %v1207 = vxor.u32 %v1203, 2147483648
    %v1208 = vmul.f32 %v1207, 1.442695
    %v1209 = vpow.pop %v1208
    %v1210 = vadd.f32 %v1209, 1.0
    %v1211 = vrcp.pop %v1210
    %v1212 = vmul.f32 %v1210, %v1211
    %v1213 = vsub.f32 1.0, %v1212
    %v1214 = vmul.f32 %v1211, %v1213
    %v1215 = vadd.f32 %v1211, %v1214
    %vm1216 = vweird.f32 %v1210
    %vm1217 = vweird.f32 %v1211
    %vm1218 = vmor %vm1216, %vm1217
    %v1219 = vsel %vm1218, %v1211, %v1215
    %v1220 = vand.u32 2147483647, %v1210
    %vm1221 = vcmp.eq.f32.partialorder %v1220, 8.507059e+37
    %v1222 = vand.u32 %v1210, 2147483648
    %v1223 = vor.u32 1.1754944e-38, %v1222
    %v1224 = vsel %vm1221, %v1223, %v1219
    %v1225 = vmul.f32 1.0, %v1224
    %v1226 = vxor.u32 %v1204, 2147483648
    %v1227 = vmul.f32 %v1226, 1.442695
    %v1228 = vpow.pop %v1227
    %v1229 = vadd.f32 %v1228, 1.0
    %v1230 = vrcp.pop %v1229
    %v1231 = vmul.f32 %v1229, %v1230
    %v1232 = vsub.f32 1.0, %v1231
    %v1233 = vmul.f32 %v1230, %v1232
    %v1234 = vadd.f32 %v1230, %v1233
    %vm1235 = vweird.f32 %v1229
    %vm1236 = vweird.f32 %v1230
    %vm1237 = vmor %vm1235, %vm1236
    %v1238 = vsel %vm1237, %v1230, %v1234
    %v1239 = vand.u32 2147483647, %v1229
    %vm1240 = vcmp.eq.f32.partialorder %v1239, 8.507059e+37
    %v1241 = vand.u32 %v1229, 2147483648
    %v1242 = vor.u32 1.1754944e-38, %v1241
    %v1243 = vsel %vm1240, %v1242, %v1238
    %v1244 = vmul.f32 1.0, %v1243
    %v1245 = vtanh.pop %v1205
    %v1246 = vxor.u32 %v1206, 2147483648
    %v1247 = vmul.f32 %v1246, 1.442695
    %v1248 = vpow.pop %v1247
    %v1249 = vadd.f32 %v1248, 1.0
    %v1250 = vrcp.pop %v1249
    %v1251 = vmul.f32 %v1249, %v1250
    %v1252 = vsub.f32 1.0, %v1251
    %v1253 = vmul.f32 %v1250, %v1252
    %v1254 = vadd.f32 %v1250, %v1253
    %vm1255 = vweird.f32 %v1249
    %vm1256 = vweird.f32 %v1250
    %vm1257 = vmor %vm1255, %vm1256
    %v1258 = vsel %vm1257, %v1250, %v1254
    %v1259 = vand.u32 2147483647, %v1249
    %vm1260 = vcmp.eq.f32.partialorder %v1259, 8.507059e+37
    %v1261 = vand.u32 %v1249, 2147483648
    %v1262 = vor.u32 1.1754944e-38, %v1261
    %v1263 = vsel %vm1260, %v1262, %v1258
    %v1264 = vmul.f32 1.0, %v1263
    %v1265 = vmul.f32 %v1244, %v1115
    %v1266 = vmul.f32 %v1225, %v1245
    %v1267 = vadd.f32 %v1265, %v1266
    %v1268 = vtanh.pop %v1267
    %v1269 = vmul.f32 %v1264, %v1268
    %s1270 = scalar_lea.vmem [#allocation2], 160
    %v1271 = vld [vmem:[%s1270] sm:$0xff]
    %v1272 = vld [vmem:[%s1270 + $0x8] sm:$0xff]
    %v1273 = vld [vmem:[%s1270 + $0x10] sm:$0xff]
    %v1274 = vld [vmem:[%s1270 + $0x18] sm:$0xff]
    %1275 = vmatpush.msra.mxu0 %v505
    %1276 = vmatpush.msra.mxu0 %v501
    %1277 = vmatpush.msra.mxu0 %v497
    %1278 = vmatpush.msra.mxu0 %v493
    %1279 = vmatpush.msra.mxu0 %v489
    %1280 = vmatpush.msra.mxu0 %v485
    %1281 = vmatpush.msra.mxu0 %v481
    %1282 = vmatpush.msra.mxu0 %v477
    %1283 = vmatpush.msra.mxu0 %v473
    %1284 = vmatpush.msra.mxu0 %v469
    %1285 = vmatpush.msra.mxu0 %v465
    %1286 = vmatpush.msra.mxu0 %v461
    %1287 = vmatpush.msra.mxu0 %v457
    %1288 = vmatpush.msra.mxu0 %v453
    %1289 = vmatpush.msra.mxu0 %v449
    %1290 = vmatpush.msra.mxu0 %v445
    %1291 = vmatmul.f32.gmra.mxu0 %v1269
    %v1292 = vpop.f32.mrf.mxu0
    %v1293 = vadd.f32 0.0, %v1292
    %1294 = vdwg.mxu0
    %1295 = vmatpush.msra.mxu0 %v506
    %1296 = vmatpush.msra.mxu0 %v502
    %1297 = vmatpush.msra.mxu0 %v498
    %1298 = vmatpush.msra.mxu0 %v494
    %1299 = vmatpush.msra.mxu0 %v490
    %1300 = vmatpush.msra.mxu0 %v486
    %1301 = vmatpush.msra.mxu0 %v482
    %1302 = vmatpush.msra.mxu0 %v478
    %1303 = vmatpush.msra.mxu0 %v474
    %1304 = vmatpush.msra.mxu0 %v470
    %1305 = vmatpush.msra.mxu0 %v466
    %1306 = vmatpush.msra.mxu0 %v462
    %1307 = vmatpush.msra.mxu0 %v458
    %1308 = vmatpush.msra.mxu0 %v454
    %1309 = vmatpush.msra.mxu0 %v450
    %1310 = vmatpush.msra.mxu0 %v446
    %1311 = vmatmul.f32.gmra.mxu0 %v1269
    %v1312 = vpop.f32.mrf.mxu0
    %v1313 = vadd.f32 0.0, %v1312
    %1314 = vdwg.mxu0
    %1315 = vmatpush.msra.mxu0 %v507
    %1316 = vmatpush.msra.mxu0 %v503
    %1317 = vmatpush.msra.mxu0 %v499
    %1318 = vmatpush.msra.mxu0 %v495
    %1319 = vmatpush.msra.mxu0 %v491
    %1320 = vmatpush.msra.mxu0 %v487
    %1321 = vmatpush.msra.mxu0 %v483
    %1322 = vmatpush.msra.mxu0 %v479
    %1323 = vmatpush.msra.mxu0 %v475
    %1324 = vmatpush.msra.mxu0 %v471
    %1325 = vmatpush.msra.mxu0 %v467
    %1326 = vmatpush.msra.mxu0 %v463
    %1327 = vmatpush.msra.mxu0 %v459
    %1328 = vmatpush.msra.mxu0 %v455
    %1329 = vmatpush.msra.mxu0 %v451
    %1330 = vmatpush.msra.mxu0 %v447
    %1331 = vmatmul.f32.gmra.mxu0 %v1269
    %v1332 = vpop.f32.mrf.mxu0
    %v1333 = vadd.f32 0.0, %v1332
    %1334 = vdwg.mxu0
    %1335 = vmatpush.msra.mxu0 %v508
    %1336 = vmatpush.msra.mxu0 %v504
    %1337 = vmatpush.msra.mxu0 %v500
    %1338 = vmatpush.msra.mxu0 %v496
    %1339 = vmatpush.msra.mxu0 %v492
    %1340 = vmatpush.msra.mxu0 %v488
    %1341 = vmatpush.msra.mxu0 %v484
    %1342 = vmatpush.msra.mxu0 %v480
    %1343 = vmatpush.msra.mxu0 %v476
    %1344 = vmatpush.msra.mxu0 %v472
    %1345 = vmatpush.msra.mxu0 %v468
    %1346 = vmatpush.msra.mxu0 %v464
    %1347 = vmatpush.msra.mxu0 %v460
    %1348 = vmatpush.msra.mxu0 %v456
    %1349 = vmatpush.msra.mxu0 %v452
    %1350 = vmatpush.msra.mxu0 %v448
    %1351 = vmatmul.f32.gmra.mxu0 %v1269
    %v1352 = vpop.f32.mrf.mxu0
    %v1353 = vadd.f32 0.0, %v1352
    %1354 = vdwg.mxu0
    %v1355 = vadd.f32 %v1271, %v1293
    %v1356 = vadd.f32 %v1272, %v1313
    %v1357 = vadd.f32 %v1273, %v1333
    %v1358 = vadd.f32 %v1274, %v1353
    %v1359 = vxor.u32 %v1355, 2147483648
    %v1360 = vmul.f32 %v1359, 1.442695
    %v1361 = vpow.pop %v1360
    %v1362 = vadd.f32 %v1361, 1.0
    %v1363 = vrcp.pop %v1362
    %v1364 = vmul.f32 %v1362, %v1363
    %v1365 = vsub.f32 1.0, %v1364
    %v1366 = vmul.f32 %v1363, %v1365
    %v1367 = vadd.f32 %v1363, %v1366
    %vm1368 = vweird.f32 %v1362
    %vm1369 = vweird.f32 %v1363
    %vm1370 = vmor %vm1368, %vm1369
    %v1371 = vsel %vm1370, %v1363, %v1367
    %v1372 = vand.u32 2147483647, %v1362
    %vm1373 = vcmp.eq.f32.partialorder %v1372, 8.507059e+37
    %v1374 = vand.u32 %v1362, 2147483648
    %v1375 = vor.u32 1.1754944e-38, %v1374
    %v1376 = vsel %vm1373, %v1375, %v1371
    %v1377 = vmul.f32 1.0, %v1376
    %v1378 = vxor.u32 %v1356, 2147483648
    %v1379 = vmul.f32 %v1378, 1.442695
    %v1380 = vpow.pop %v1379
    %v1381 = vadd.f32 %v1380, 1.0
    %v1382 = vrcp.pop %v1381
    %v1383 = vmul.f32 %v1381, %v1382
    %v1384 = vsub.f32 1.0, %v1383
    %v1385 = vmul.f32 %v1382, %v1384
    %v1386 = vadd.f32 %v1382, %v1385
    %vm1387 = vweird.f32 %v1381
    %vm1388 = vweird.f32 %v1382
    %vm1389 = vmor %vm1387, %vm1388
    %v1390 = vsel %vm1389, %v1382, %v1386
    %v1391 = vand.u32 2147483647, %v1381
    %vm1392 = vcmp.eq.f32.partialorder %v1391, 8.507059e+37
    %v1393 = vand.u32 %v1381, 2147483648
    %v1394 = vor.u32 1.1754944e-38, %v1393
    %v1395 = vsel %vm1392, %v1394, %v1390
    %v1396 = vmul.f32 1.0, %v1395
    %v1397 = vtanh.pop %v1357
    %v1398 = vxor.u32 %v1358, 2147483648
    %v1399 = vmul.f32 %v1398, 1.442695
    %v1400 = vpow.pop %v1399
    %v1401 = vadd.f32 %v1400, 1.0
    %v1402 = vrcp.pop %v1401
    %v1403 = vmul.f32 %v1401, %v1402
    %v1404 = vsub.f32 1.0, %v1403
    %v1405 = vmul.f32 %v1402, %v1404
    %v1406 = vadd.f32 %v1402, %v1405
    %vm1407 = vweird.f32 %v1401
    %vm1408 = vweird.f32 %v1402
    %vm1409 = vmor %vm1407, %vm1408
    %v1410 = vsel %vm1409, %v1402, %v1406
    %v1411 = vand.u32 2147483647, %v1401
    %vm1412 = vcmp.eq.f32.partialorder %v1411, 8.507059e+37
    %v1413 = vand.u32 %v1401, 2147483648
    %v1414 = vor.u32 1.1754944e-38, %v1413
    %v1415 = vsel %vm1412, %v1414, %v1410
    %v1416 = vmul.f32 1.0, %v1415
    %v1417 = vmul.f32 %v1396, %v1267
    %v1418 = vmul.f32 %v1377, %v1397
    %v1419 = vadd.f32 %v1417, %v1418
    %v1420 = vtanh.pop %v1419
    %v1421 = vmul.f32 %v1416, %v1420
    %s1422 = scalar_lea.vmem [#allocation2], 192
    %v1423 = vld [vmem:[%s1422] sm:$0xff]
    %v1424 = vld [vmem:[%s1422 + $0x8] sm:$0xff]
    %v1425 = vld [vmem:[%s1422 + $0x10] sm:$0xff]
    %v1426 = vld [vmem:[%s1422 + $0x18] sm:$0xff]
    %1427 = vmatpush.msra.mxu0 %v505
    %1428 = vmatpush.msra.mxu0 %v501
    %1429 = vmatpush.msra.mxu0 %v497
    %1430 = vmatpush.msra.mxu0 %v493
    %1431 = vmatpush.msra.mxu0 %v489
    %1432 = vmatpush.msra.mxu0 %v485
    %1433 = vmatpush.msra.mxu0 %v481
    %1434 = vmatpush.msra.mxu0 %v477
    %1435 = vmatpush.msra.mxu0 %v473
    %1436 = vmatpush.msra.mxu0 %v469
    %1437 = vmatpush.msra.mxu0 %v465
    %1438 = vmatpush.msra.mxu0 %v461
    %1439 = vmatpush.msra.mxu0 %v457
    %1440 = vmatpush.msra.mxu0 %v453
    %1441 = vmatpush.msra.mxu0 %v449
    %1442 = vmatpush.msra.mxu0 %v445
    %1443 = vmatmul.f32.gmra.mxu0 %v1421
    %v1444 = vpop.f32.mrf.mxu0
    %v1445 = vadd.f32 0.0, %v1444
    %1446 = vdwg.mxu0
    %1447 = vmatpush.msra.mxu0 %v506
    %1448 = vmatpush.msra.mxu0 %v502
    %1449 = vmatpush.msra.mxu0 %v498
    %1450 = vmatpush.msra.mxu0 %v494
    %1451 = vmatpush.msra.mxu0 %v490
    %1452 = vmatpush.msra.mxu0 %v486
    %1453 = vmatpush.msra.mxu0 %v482
    %1454 = vmatpush.msra.mxu0 %v478
    %1455 = vmatpush.msra.mxu0 %v474
    %1456 = vmatpush.msra.mxu0 %v470
    %1457 = vmatpush.msra.mxu0 %v466
    %1458 = vmatpush.msra.mxu0 %v462
    %1459 = vmatpush.msra.mxu0 %v458
    %1460 = vmatpush.msra.mxu0 %v454
    %1461 = vmatpush.msra.mxu0 %v450
    %1462 = vmatpush.msra.mxu0 %v446
    %1463 = vmatmul.f32.gmra.mxu0 %v1421
    %v1464 = vpop.f32.mrf.mxu0
    %v1465 = vadd.f32 0.0, %v1464
    %1466 = vdwg.mxu0
    %1467 = vmatpush.msra.mxu0 %v507
    %1468 = vmatpush.msra.mxu0 %v503
    %1469 = vmatpush.msra.mxu0 %v499
    %1470 = vmatpush.msra.mxu0 %v495
    %1471 = vmatpush.msra.mxu0 %v491
    %1472 = vmatpush.msra.mxu0 %v487
    %1473 = vmatpush.msra.mxu0 %v483
    %1474 = vmatpush.msra.mxu0 %v479
    %1475 = vmatpush.msra.mxu0 %v475
    %1476 = vmatpush.msra.mxu0 %v471
    %1477 = vmatpush.msra.mxu0 %v467
    %1478 = vmatpush.msra.mxu0 %v463
    %1479 = vmatpush.msra.mxu0 %v459
    %1480 = vmatpush.msra.mxu0 %v455
    %1481 = vmatpush.msra.mxu0 %v451
    %1482 = vmatpush.msra.mxu0 %v447
    %1483 = vmatmul.f32.gmra.mxu0 %v1421
    %v1484 = vpop.f32.mrf.mxu0
    %v1485 = vadd.f32 0.0, %v1484
    %1486 = vdwg.mxu0
    %1487 = vmatpush.msra.mxu0 %v508
    %1488 = vmatpush.msra.mxu0 %v504
    %1489 = vmatpush.msra.mxu0 %v500
    %1490 = vmatpush.msra.mxu0 %v496
    %1491 = vmatpush.msra.mxu0 %v492
    %1492 = vmatpush.msra.mxu0 %v488
    %1493 = vmatpush.msra.mxu0 %v484
    %1494 = vmatpush.msra.mxu0 %v480
    %1495 = vmatpush.msra.mxu0 %v476
    %1496 = vmatpush.msra.mxu0 %v472
    %1497 = vmatpush.msra.mxu0 %v468
    %1498 = vmatpush.msra.mxu0 %v464
    %1499 = vmatpush.msra.mxu0 %v460
    %1500 = vmatpush.msra.mxu0 %v456
    %1501 = vmatpush.msra.mxu0 %v452
    %1502 = vmatpush.msra.mxu0 %v448
    %1503 = vmatmul.f32.gmra.mxu0 %v1421
    %v1504 = vpop.f32.mrf.mxu0
    %v1505 = vadd.f32 0.0, %v1504
    %1506 = vdwg.mxu0
    %v1507 = vadd.f32 %v1423, %v1445
    %v1508 = vadd.f32 %v1424, %v1465
    %v1509 = vadd.f32 %v1425, %v1485
    %v1510 = vadd.f32 %v1426, %v1505
    %v1511 = vxor.u32 %v1507, 2147483648
    %v1512 = vmul.f32 %v1511, 1.442695
    %v1513 = vpow.pop %v1512
    %v1514 = vadd.f32 %v1513, 1.0
    %v1515 = vrcp.pop %v1514
    %v1516 = vmul.f32 %v1514, %v1515
    %v1517 = vsub.f32 1.0, %v1516
    %v1518 = vmul.f32 %v1515, %v1517
    %v1519 = vadd.f32 %v1515, %v1518
    %vm1520 = vweird.f32 %v1514
    %vm1521 = vweird.f32 %v1515
    %vm1522 = vmor %vm1520, %vm1521
    %v1523 = vsel %vm1522, %v1515, %v1519
    %v1524 = vand.u32 2147483647, %v1514
    %vm1525 = vcmp.eq.f32.partialorder %v1524, 8.507059e+37
    %v1526 = vand.u32 %v1514, 2147483648
    %v1527 = vor.u32 1.1754944e-38, %v1526
    %v1528 = vsel %vm1525, %v1527, %v1523
    %v1529 = vmul.f32 1.0, %v1528
    %v1530 = vxor.u32 %v1508, 2147483648
    %v1531 = vmul.f32 %v1530, 1.442695
    %v1532 = vpow.pop %v1531
    %v1533 = vadd.f32 %v1532, 1.0
    %v1534 = vrcp.pop %v1533
    %v1535 = vmul.f32 %v1533, %v1534
    %v1536 = vsub.f32 1.0, %v1535
    %v1537 = vmul.f32 %v1534, %v1536
    %v1538 = vadd.f32 %v1534, %v1537
    %vm1539 = vweird.f32 %v1533
    %vm1540 = vweird.f32 %v1534
    %vm1541 = vmor %vm1539, %vm1540
    %v1542 = vsel %vm1541, %v1534, %v1538
    %v1543 = vand.u32 2147483647, %v1533
    %vm1544 = vcmp.eq.f32.partialorder %v1543, 8.507059e+37
    %v1545 = vand.u32 %v1533, 2147483648
    %v1546 = vor.u32 1.1754944e-38, %v1545
    %v1547 = vsel %vm1544, %v1546, %v1542
    %v1548 = vmul.f32 1.0, %v1547
    %v1549 = vtanh.pop %v1509
    %v1550 = vxor.u32 %v1510, 2147483648
    %v1551 = vmul.f32 %v1550, 1.442695
    %v1552 = vpow.pop %v1551
    %v1553 = vadd.f32 %v1552, 1.0
    %v1554 = vrcp.pop %v1553
    %v1555 = vmul.f32 %v1553, %v1554
    %v1556 = vsub.f32 1.0, %v1555
    %v1557 = vmul.f32 %v1554, %v1556
    %v1558 = vadd.f32 %v1554, %v1557
    %vm1559 = vweird.f32 %v1553
    %vm1560 = vweird.f32 %v1554
    %vm1561 = vmor %vm1559, %vm1560
    %v1562 = vsel %vm1561, %v1554, %v1558
    %v1563 = vand.u32 2147483647, %v1553
    %vm1564 = vcmp.eq.f32.partialorder %v1563, 8.507059e+37
    %v1565 = vand.u32 %v1553, 2147483648
    %v1566 = vor.u32 1.1754944e-38, %v1565
    %v1567 = vsel %vm1564, %v1566, %v1562
    %v1568 = vmul.f32 1.0, %v1567
    %v1569 = vmul.f32 %v1548, %v1419
    %v1570 = vmul.f32 %v1529, %v1549
    %v1571 = vadd.f32 %v1569, %v1570
    %v1572 = vtanh.pop %v1571
    %v1573 = vmul.f32 %v1568, %v1572
    %s1574 = scalar_lea.vmem [#allocation2], 224
    %v1575 = vld [vmem:[%s1574] sm:$0xff]
    %v1576 = vld [vmem:[%s1574 + $0x8] sm:$0xff]
    %v1577 = vld [vmem:[%s1574 + $0x10] sm:$0xff]
    %v1578 = vld [vmem:[%s1574 + $0x18] sm:$0xff]
    %1579 = vmatpush.msra.mxu0 %v505
    %1580 = vmatpush.msra.mxu0 %v501
    %1581 = vmatpush.msra.mxu0 %v497
    %1582 = vmatpush.msra.mxu0 %v493
    %1583 = vmatpush.msra.mxu0 %v489
    %1584 = vmatpush.msra.mxu0 %v485
    %1585 = vmatpush.msra.mxu0 %v481
    %1586 = vmatpush.msra.mxu0 %v477
    %1587 = vmatpush.msra.mxu0 %v473
    %1588 = vmatpush.msra.mxu0 %v469
    %1589 = vmatpush.msra.mxu0 %v465
    %1590 = vmatpush.msra.mxu0 %v461
    %1591 = vmatpush.msra.mxu0 %v457
    %1592 = vmatpush.msra.mxu0 %v453
    %1593 = vmatpush.msra.mxu0 %v449
    %1594 = vmatpush.msra.mxu0 %v445
    %1595 = vmatmul.f32.gmra.mxu0 %v1573
    %v1596 = vpop.f32.mrf.mxu0
    %v1597 = vadd.f32 0.0, %v1596
    %1598 = vdwg.mxu0
    %1599 = vmatpush.msra.mxu0 %v506
    %1600 = vmatpush.msra.mxu0 %v502
    %1601 = vmatpush.msra.mxu0 %v498
    %1602 = vmatpush.msra.mxu0 %v494
    %1603 = vmatpush.msra.mxu0 %v490
    %1604 = vmatpush.msra.mxu0 %v486
    %1605 = vmatpush.msra.mxu0 %v482
    %1606 = vmatpush.msra.mxu0 %v478
    %1607 = vmatpush.msra.mxu0 %v474
    %1608 = vmatpush.msra.mxu0 %v470
    %1609 = vmatpush.msra.mxu0 %v466
    %1610 = vmatpush.msra.mxu0 %v462
    %1611 = vmatpush.msra.mxu0 %v458
    %1612 = vmatpush.msra.mxu0 %v454
    %1613 = vmatpush.msra.mxu0 %v450
    %1614 = vmatpush.msra.mxu0 %v446
    %1615 = vmatmul.f32.gmra.mxu0 %v1573
    %v1616 = vpop.f32.mrf.mxu0
    %v1617 = vadd.f32 0.0, %v1616
    %1618 = vdwg.mxu0
    %1619 = vmatpush.msra.mxu0 %v507
    %1620 = vmatpush.msra.mxu0 %v503
    %1621 = vmatpush.msra.mxu0 %v499
    %1622 = vmatpush.msra.mxu0 %v495
    %1623 = vmatpush.msra.mxu0 %v491
    %1624 = vmatpush.msra.mxu0 %v487
    %1625 = vmatpush.msra.mxu0 %v483
    %1626 = vmatpush.msra.mxu0 %v479
    %1627 = vmatpush.msra.mxu0 %v475
    %1628 = vmatpush.msra.mxu0 %v471
    %1629 = vmatpush.msra.mxu0 %v467
    %1630 = vmatpush.msra.mxu0 %v463
    %1631 = vmatpush.msra.mxu0 %v459
    %1632 = vmatpush.msra.mxu0 %v455
    %1633 = vmatpush.msra.mxu0 %v451
    %1634 = vmatpush.msra.mxu0 %v447
    %1635 = vmatmul.f32.gmra.mxu0 %v1573
    %v1636 = vpop.f32.mrf.mxu0
    %v1637 = vadd.f32 0.0, %v1636
    %1638 = vdwg.mxu0
    %1639 = vmatpush.msra.mxu0 %v508
    %1640 = vmatpush.msra.mxu0 %v504
    %1641 = vmatpush.msra.mxu0 %v500
    %1642 = vmatpush.msra.mxu0 %v496
    %1643 = vmatpush.msra.mxu0 %v492
    %1644 = vmatpush.msra.mxu0 %v488
    %1645 = vmatpush.msra.mxu0 %v484
    %1646 = vmatpush.msra.mxu0 %v480
    %1647 = vmatpush.msra.mxu0 %v476
    %1648 = vmatpush.msra.mxu0 %v472
    %1649 = vmatpush.msra.mxu0 %v468
    %1650 = vmatpush.msra.mxu0 %v464
    %1651 = vmatpush.msra.mxu0 %v460
    %1652 = vmatpush.msra.mxu0 %v456
    %1653 = vmatpush.msra.mxu0 %v452
    %1654 = vmatpush.msra.mxu0 %v448
    %1655 = vmatmul.f32.gmra.mxu0 %v1573
    %v1656 = vpop.f32.mrf.mxu0
    %v1657 = vadd.f32 0.0, %v1656
    %1658 = vdwg.mxu0
    %v1659 = vadd.f32 %v1575, %v1597
    %v1660 = vadd.f32 %v1576, %v1617
    %v1661 = vadd.f32 %v1577, %v1637
    %v1662 = vadd.f32 %v1578, %v1657
    %v1663 = vxor.u32 %v1659, 2147483648
    %v1664 = vmul.f32 %v1663, 1.442695
    %v1665 = vpow.pop %v1664
    %v1666 = vadd.f32 %v1665, 1.0
    %v1667 = vrcp.pop %v1666
    %v1668 = vmul.f32 %v1666, %v1667
    %v1669 = vsub.f32 1.0, %v1668
    %v1670 = vmul.f32 %v1667, %v1669
    %v1671 = vadd.f32 %v1667, %v1670
    %vm1672 = vweird.f32 %v1666
    %vm1673 = vweird.f32 %v1667
    %vm1674 = vmor %vm1672, %vm1673
    %v1675 = vsel %vm1674, %v1667, %v1671
    %v1676 = vand.u32 2147483647, %v1666
    %vm1677 = vcmp.eq.f32.partialorder %v1676, 8.507059e+37
    %v1678 = vand.u32 %v1666, 2147483648
    %v1679 = vor.u32 1.1754944e-38, %v1678
    %v1680 = vsel %vm1677, %v1679, %v1675
    %v1681 = vmul.f32 1.0, %v1680
    %v1682 = vxor.u32 %v1660, 2147483648
    %v1683 = vmul.f32 %v1682, 1.442695
    %v1684 = vpow.pop %v1683
    %v1685 = vadd.f32 %v1684, 1.0
    %v1686 = vrcp.pop %v1685
    %v1687 = vmul.f32 %v1685, %v1686
    %v1688 = vsub.f32 1.0, %v1687
    %v1689 = vmul.f32 %v1686, %v1688
    %v1690 = vadd.f32 %v1686, %v1689
    %vm1691 = vweird.f32 %v1685
    %vm1692 = vweird.f32 %v1686
    %vm1693 = vmor %vm1691, %vm1692
    %v1694 = vsel %vm1693, %v1686, %v1690
    %v1695 = vand.u32 2147483647, %v1685
    %vm1696 = vcmp.eq.f32.partialorder %v1695, 8.507059e+37
    %v1697 = vand.u32 %v1685, 2147483648
    %v1698 = vor.u32 1.1754944e-38, %v1697
    %v1699 = vsel %vm1696, %v1698, %v1694
    %v1700 = vmul.f32 1.0, %v1699
    %v1701 = vtanh.pop %v1661
    %v1702 = vxor.u32 %v1662, 2147483648
    %v1703 = vmul.f32 %v1702, 1.442695
    %v1704 = vpow.pop %v1703
    %v1705 = vadd.f32 %v1704, 1.0
    %v1706 = vrcp.pop %v1705
    %v1707 = vmul.f32 %v1705, %v1706
    %v1708 = vsub.f32 1.0, %v1707
    %v1709 = vmul.f32 %v1706, %v1708
    %v1710 = vadd.f32 %v1706, %v1709
    %vm1711 = vweird.f32 %v1705
    %vm1712 = vweird.f32 %v1706
    %vm1713 = vmor %vm1711, %vm1712
    %v1714 = vsel %vm1713, %v1706, %v1710
    %v1715 = vand.u32 2147483647, %v1705
    %vm1716 = vcmp.eq.f32.partialorder %v1715, 8.507059e+37
    %v1717 = vand.u32 %v1705, 2147483648
    %v1718 = vor.u32 1.1754944e-38, %v1717
    %v1719 = vsel %vm1716, %v1718, %v1714
    %v1720 = vmul.f32 1.0, %v1719
    %v1721 = vmul.f32 %v1700, %v1571
    %v1722 = vmul.f32 %v1681, %v1701
    %v1723 = vadd.f32 %v1721, %v1722
    %v1724 = vtanh.pop %v1723
    %v1725 = vmul.f32 %v1720, %v1724
    %1726 = vst [vmem:[#allocation3] sm:$0xff] %v1725
    %1727 = vst [vmem:[#allocation4] sm:$0xff] %v1723
    // Predicated region
    $region38: #{tpu_custom_call.1} parent=1 // pred_check
      %p1728 = pneg %p79
    $region39: #{tpu_custom_call.1} parent=1 // pred_check_branch
      %1730 = sbr.rel (%p1728) target = $region41
    $region40: #{tpu_custom_call.1} parent=1 // pred_region
      %1731 = vst [vmem:[#allocation13] sm:$0xff] %v1725
    $region41: #{tpu_custom_call.1} parent=1 // pred_fallthru
      _
    // Predicated region
    $region42: #{tpu_custom_call.1} parent=1 // pred_check
      _
    $region43: #{tpu_custom_call.1} parent=1 // pred_check_branch
      %1733 = sbr.rel (0) target = $region45
    $region44: #{tpu_custom_call.1} parent=1 // pred_region
      %1735 = vsyncadd [#allocation7], 0
      %s1737 = sshll.u32 [#allocation13], 4
      %s1738 = int_to_ptr.vmem [resolvable:$true] %s1737
      %s1739 = sshll.u32 %s4, 4
      %s1740 = int_to_ptr.hbm [resolvable:$true] %s1739
      %1742 = dma.vmem_to_hbm [thread:$0]  %s1738, 128, %s1740, [#allocation7]
    $region45: #{tpu_custom_call.1} parent=1 // pred_fallthru
      _
    // Predicated region
    $region46: #{tpu_custom_call.1} parent=1 // pred_check
      _
    $region47: #{tpu_custom_call.1} parent=1 // pred_check_branch
      %1744 = sbr.rel (0) target = $region49
    $region48: #{tpu_custom_call.1} parent=1 // pred_region
      %1746 = dma.done [#allocation7], 128
    $region49: #{tpu_custom_call.1} parent=1 // pred_fallthru
      _
    %1747 = vsyncpa [#allocation6], 1
    %1748 = vsyncpa [#allocation9], 1
    %1749 = vsyncpa [#allocation12], 1
    %1750 = vsyncpa [#allocation7], 1

</llo_original>
